<compile_context>
chip_gen: v7x
topology: tpu7x:2x2x1
jax: 0.10.0
libtpu: 0.0.40
codegen_flags: <defaults>
</compile_context>

<pallas_src>
import functools

import jax
import jax.numpy as jnp
from jax.experimental import pallas as pl
from jax.experimental.pallas import tpu as pltpu


def _round_up(a, b):
    return ((a + b - 1) // b) * b


def _vmem_budget(request_bytes):
    """Clamp a VMEM request to the physical per-core VMEM (64 MiB on v7x,
    128 MiB on v5e/v6e) minus headroom so the same code compiles on all gens."""
    try:
        cap = pltpu.get_tpu_info().vmem_capacity_bytes
    except Exception:  # pragma: no cover - conservative fallback (v7x size)
        cap = 64 << 20
    return int(min(max(request_bytes, 16 << 20), cap - (8 << 20)))


def _vmem():
    return pl.BlockSpec(memory_space=pltpu.MemorySpace.VMEM)


# --------------------------- TopK pooling scores ------------------------------

def score_kernel(x_ref, p_ref, out_ref):
    p = p_ref[...]                                            # (C, 1) f32
    inv_norm = jax.lax.rsqrt(jnp.maximum(jnp.sum(p * p), 1e-30))
    s = jnp.dot(x_ref[...], p, preferred_element_type=jnp.float32)   # (TM, 1)
    out_ref[...] = jnp.tanh(s * inv_norm)


def topk_scores(x_pad, p, *, tile_m=256):
    # Row-tiled so VMEM use is independent of N (x kept f32 here: the score
    # ordering feeds lax.top_k, where bf16 rounding could flip near-ties).
    n_pad, c = x_pad.shape
    return pl.pallas_call(
        score_kernel,
        out_shape=jax.ShapeDtypeStruct((n_pad, 1), jnp.float32),
        grid_spec=pltpu.PrefetchScalarGridSpec(
            num_scalar_prefetch=0,
            grid=(n_pad // tile_m,),
            in_specs=[pl.BlockSpec((tile_m, c), lambda i: (i, 0)),
                      pl.BlockSpec((c, 1), lambda i: (0, 0))],
            out_specs=pl.BlockSpec((tile_m, 1), lambda i: (i, 0))),
        compiler_params=pltpu.CompilerParams(
            dimension_semantics=("parallel",)),
    )(x_pad, p)


# ------------------------ GRU step (evolves GCN weight) -----------------------

def gru_kernel(xp_ref, sc_ref, h0_ref, wih_ref, whh_ref, bih_ref, bhh_ref,
               w_out_ref):
    c = h0_ref.shape[1]
    # TopK gating: x[perm] * score[perm]; matmul operands in bf16 (MXU-native),
    # f32 accumulation, gates / sigmoid / tanh in f32.
    x = (xp_ref[...] * sc_ref[...]).astype(jnp.bfloat16)
    h = h0_ref[...]
    gi = jnp.dot(x, wih_ref[...].astype(jnp.bfloat16),
                 preferred_element_type=jnp.float32) + bih_ref[...]
    gh = jnp.dot(h.astype(jnp.bfloat16), whh_ref[...].astype(jnp.bfloat16),
                 preferred_element_type=jnp.float32) + bhh_ref[...]
    r = jax.nn.sigmoid(gi[:, :c] + gh[:, :c])
    z = jax.nn.sigmoid(gi[:, c:2 * c] + gh[:, c:2 * c])
    n = jnp.tanh(gi[:, 2 * c:] + r * gh[:, 2 * c:])
    w_out_ref[...] = (1.0 - z) * n + z * h


def gru_step(x_perm, score_perm, w_init, gru_params):
    c = w_init.shape[1]
    return pl.pallas_call(
        gru_kernel,
        out_shape=jax.ShapeDtypeStruct((c, c), jnp.float32),
        in_specs=[_vmem()] * 7,
        out_specs=_vmem(),
    )(x_perm, score_perm, w_init,
      gru_params["w_ih_t"], gru_params["w_hh_t"],
      gru_params["b_ih"], gru_params["b_hh"])


# ------------------------ hoisted X @ W (computed once) -----------------------

def xw_kernel(x_ref, w_ref, xw_ref):
    xw_ref[...] = jnp.dot(x_ref[...], w_ref[...],
                          preferred_element_type=jnp.float32
                          ).astype(jnp.bfloat16)


def x_times_w(x_bf16, w_bf16, *, tile_m=256):
    n_pad, c = x_bf16.shape
    return pl.pallas_call(
        xw_kernel,
        out_shape=jax.ShapeDtypeStruct((n_pad, c), jnp.bfloat16),
        grid_spec=pltpu.PrefetchScalarGridSpec(
            num_scalar_prefetch=0,
            grid=(n_pad // tile_m,),
            in_specs=[pl.BlockSpec((tile_m, c), lambda i: (i, 0)),
                      pl.BlockSpec((c, c), lambda i: (0, 0))],
            out_specs=pl.BlockSpec((tile_m, c), lambda i: (i, 0))),
        compiler_params=pltpu.CompilerParams(
            dimension_semantics=("parallel",)),
    )(x_bf16, w_bf16)


# ------------------ GCN conv (Ahat @ XW) with fused ReLU ----------------------

def gcn_relu_kernel(adj_ref, xw_ref, out_ref, acc_ref):
    k = pl.program_id(1)

    @pl.when(k == 0)
    def _():
        acc_ref[...] = jnp.zeros_like(acc_ref)

    # single bf16 x bf16 MXU matmul per step, f32 accumulation
    acc_ref[...] += jnp.dot(adj_ref[...], xw_ref[...],
                            preferred_element_type=jnp.float32)

    @pl.when(k == pl.num_programs(1) - 1)
    def _():
        out_ref[...] = jnp.maximum(acc_ref[...], 0.0)   # fused relu


def gcn_relu(adj_bf16, xw_bf16, *, tile_m=256, tile_k=512):
    n_pad = adj_bf16.shape[0]
    c = xw_bf16.shape[1]
    tile_k = min(tile_k, n_pad)
    assert n_pad % tile_m == 0 and n_pad % tile_k == 0
    # per-step working set (double-buffered streamed tiles + accumulator)
    req = (2 * tile_m * tile_k * 2          # adj tiles (bf16)
           + 2 * tile_k * c * 2             # xw tiles  (bf16)
           + 2 * tile_m * c * 4             # out tiles (f32)
           + tile_m * c * 4                 # accumulator scratch
           + (4 << 20))                     # headroom
    return pl.pallas_call(
        gcn_relu_kernel,
        out_shape=jax.ShapeDtypeStruct((n_pad, c), jnp.float32),
        grid_spec=pltpu.PrefetchScalarGridSpec(
            num_scalar_prefetch=0,
            grid=(n_pad // tile_m, n_pad // tile_k),
            in_specs=[pl.BlockSpec((tile_m, tile_k), lambda i, k: (i, k)),
                      pl.BlockSpec((tile_k, c), lambda i, k: (k, 0))],
            out_specs=pl.BlockSpec((tile_m, c), lambda i, k: (i, 0)),
            scratch_shapes=[pltpu.VMEM((tile_m, c), jnp.float32)]),
        compiler_params=pltpu.CompilerParams(
            dimension_semantics=("parallel", "arbitrary"),
            vmem_limit_bytes=_vmem_budget(req)),
    )(adj_bf16, xw_bf16)


# ---------- link-prediction head with fused edge-label row gather -------------

def link_head_kernel(src_ref, dst_ref, h_hbm, wsum_ref, bsum_ref, out_ref,
                     hs_buf, hd_buf, sem):
    tl = hs_buf.shape[0]
    base = pl.program_id(0) * tl

    # DMA-gather the src/dst rows of h straight from HBM using the
    # scalar-prefetched edge indices (replaces two XLA gathers).
    def start_row(l, carry):
        s = src_ref[base + l]
        d = dst_ref[base + l]
        pltpu.make_async_copy(h_hbm.at[pl.ds(s, 1)], hs_buf.at[pl.ds(l, 1)],
                              sem.at[0]).start()
        pltpu.make_async_copy(h_hbm.at[pl.ds(d, 1)], hd_buf.at[pl.ds(l, 1)],
                              sem.at[1]).start()
        return carry

    jax.lax.fori_loop(0, tl, start_row, 0)

    def wait_row(l, carry):
        pltpu.make_async_copy(h_hbm.at[pl.ds(0, 1)], hs_buf.at[pl.ds(l, 1)],
                              sem.at[0]).wait()
        pltpu.make_async_copy(h_hbm.at[pl.ds(0, 1)], hd_buf.at[pl.ds(l, 1)],
                              sem.at[1]).wait()
        return carry

    jax.lax.fori_loop(0, tl, wait_row, 0)

    had = hs_buf[...] * hd_buf[...]                               # (TL, C)
    y = jnp.dot(had, wsum_ref[...], preferred_element_type=jnp.float32)
    out_ref[...] = y + bsum_ref[0, 0]


def link_head(h, edge_label_index, w_post_sum, b_post_sum, *, tile_l=128):
    n_pad, c = h.shape
    l = edge_label_index.shape[1]
    l_pad = _round_up(l, tile_l)
    src = jnp.zeros((l_pad,), jnp.int32).at[:l].set(edge_label_index[0])
    dst = jnp.zeros((l_pad,), jnp.int32).at[:l].set(edge_label_index[1])
    out = pl.pallas_call(
        link_head_kernel,
        out_shape=jax.ShapeDtypeStruct((l_pad, 1), jnp.float32),
        grid_spec=pltpu.PrefetchScalarGridSpec(
            num_scalar_prefetch=2,
            grid=(l_pad // tile_l,),
            in_specs=[pl.BlockSpec(memory_space=pl.ANY),       # h stays in HBM
                      pl.BlockSpec((c, 1), lambda i, s, d: (0, 0)),
                      pl.BlockSpec((1, 1), lambda i, s, d: (0, 0))],
            out_specs=pl.BlockSpec((tile_l, 1), lambda i, s, d: (i, 0)),
            scratch_shapes=[pltpu.VMEM((tile_l, c), jnp.float32),
                            pltpu.VMEM((tile_l, c), jnp.float32),
                            pltpu.SemaphoreType.DMA((2,))]),
        compiler_params=pltpu.CompilerParams(
            dimension_semantics=("arbitrary",)),
    )(src, dst, h, w_post_sum, b_post_sum)
    return out[:l, 0]


# ------------------------------- glue (JAX) -----------------------------------

def build_gcn_adj(edge_index, num_nodes, num_nodes_pad):
    """Dense Ahat = D^-1/2 (A + I) D^-1/2 (gcn_norm, add_self_loops=True)."""
    src = edge_index[0]
    dst = edge_index[1]
    loop = jnp.arange(num_nodes, dtype=src.dtype)
    src = jnp.concatenate([src, loop])
    dst = jnp.concatenate([dst, loop])
    w = jnp.ones(src.shape[0], jnp.float32)
    deg = jnp.zeros((num_nodes,), jnp.float32).at[dst].add(w)
    dinv = jnp.where(deg > 0, jax.lax.rsqrt(deg), 0.0)
    norm = dinv[src] * dinv[dst]
    adj = jnp.zeros((num_nodes_pad, num_nodes_pad), jnp.float32)
    adj = adj.at[dst, src].add(norm)          # adj[i, j] aggregates j -> i
    return adj


def icews_evolvegcn_forward(x, edge_index, edge_label_index, params, *,
                            tile_m=256, tile_k=512, tile_l=128):
    n, c = x.shape
    blk = max(tile_m, tile_k)
    assert blk % min(tile_m, tile_k) == 0
    n_pad = _round_up(n, blk)
    x_pad = jnp.pad(x, ((0, n_pad - n), (0, 0)))

    # ---- EvolveGCN-H (1): TopK pooling ----
    scores = topk_scores(x_pad, params["p_topk"], tile_m=tile_m)[:n, 0]
    k = c                                     # ceil((C / N) * N) == C (N >= C)
    top_s, perm = jax.lax.top_k(scores, k)    # no Pallas top-k primitive (glue)
    x_perm = x[perm]                          # tiny (C, C) gather (glue)

    # ---- EvolveGCN-H (2): GRU step evolving the GCN weight ----
    w_evo = gru_step(x_perm, top_s[:, None], params["w_init"], params["gru"])

    # ---- hoisted X @ W (once, bf16) ----
    x_bf16 = x_pad.astype(jnp.bfloat16)
    xw = x_times_w(x_bf16, w_evo.astype(jnp.bfloat16), tile_m=tile_m)

    # ---- EvolveGCN-H (3): Ahat @ (X W) with fused relu, (M, K)-tiled ----
    adj = build_gcn_adj(edge_index, n, n_pad).astype(jnp.bfloat16)
    h = gcn_relu(adj, xw, tile_m=tile_m, tile_k=tile_k)

    # ---- link-prediction head (gather fused into the kernel) ----
    return link_head(h, edge_label_index, params["w_post_sum"],
                     params["b_post_sum"], tile_l=tile_l)


def init_params(key, c):
    ks = jax.random.split(key, 8)
    s = 1.0 / float(jnp.sqrt(c))

    def u(k, shape):
        return jax.random.uniform(k, shape, jnp.float32, -s, s)

    post_w = u(ks[5], (2, c))                 # torch Linear(C, 2).weight
    post_b = u(ks[6], (2,))                   # torch Linear(C, 2).bias
    return {
        "p_topk": u(ks[0], (c, 1)),           # TopKPooling weight
        "w_init": u(ks[1], (c, c)),           # EvolveGCNH.initial_weight
        "gru": {
            "w_ih_t": u(ks[2], (c, 3 * c)),   # weight_ih_l0.T  (r|z|n)
            "w_hh_t": u(ks[3], (c, 3 * c)),   # weight_hh_l0.T
            "b_ih": u(ks[4], (1, 3 * c)),
            "b_hh": u(ks[7], (1, 3 * c)),
        },
        # Linear(C,2) + sum(dim=-1) folded into one matvec:
        "w_post_sum": jnp.sum(post_w, axis=0)[:, None],           # (C, 1)
        "b_post_sum": jnp.sum(post_b).reshape(1, 1),              # (1, 1)
    }


# ------------------------- pure-JAX f32 reference -----------------------------

def reference_forward(x, edge_index, edge_label_index, params, top_s, perm):
    hi = jax.lax.Precision.HIGHEST
    n, c = x.shape
    g = params["gru"]
    xt = x[perm] * top_s[:, None]
    gi = jnp.dot(xt, g["w_ih_t"], precision=hi) + g["b_ih"]
    gh = jnp.dot(params["w_init"], g["w_hh_t"], precision=hi) + g["b_hh"]
    r = jax.nn.sigmoid(gi[:, :c] + gh[:, :c])
    z = jax.nn.sigmoid(gi[:, c:2 * c] + gh[:, c:2 * c])
    ng = jnp.tanh(gi[:, 2 * c:] + r * gh[:, 2 * c:])
    w = (1.0 - z) * ng + z * params["w_init"]
    adj = build_gcn_adj(edge_index, n, n)
    h = jnp.maximum(jnp.dot(adj, jnp.dot(x, w, precision=hi), precision=hi), 0.0)
    had = h[edge_label_index[0]] * h[edge_label_index[1]]
    return (jnp.dot(had, params["w_post_sum"][:, 0], precision=hi)
            + params["b_post_sum"][0, 0])


if __name__ == "__main__":
    # Small ICEWS-like graph; C lane-dense (128), N a few tiles so the
    # (parallel, arbitrary) GCN grid and edge-tile gather are exercised.
    N, C = 512, 128          # num_nodes, in_channels   (N >= C required)
    E, L = 2048, 200         # graph edges, link-label edges

    root = jax.random.PRNGKey(0)
    k_x, k_src, k_dst, k_ls, k_ld, k_par = jax.random.split(root, 6)

    x = jax.random.normal(k_x, (N, C), jnp.float32)
    edge_index = jnp.stack([
        jax.random.randint(k_src, (E,), 0, N),
        jax.random.randint(k_dst, (E,), 0, N)]).astype(jnp.int32)
    edge_label_index = jnp.stack([
        jax.random.randint(k_ls, (L,), 0, N),
        jax.random.randint(k_ld, (L,), 0, N)]).astype(jnp.int32)

    params = init_params(k_par, C)

    fwd = jax.jit(functools.partial(icews_evolvegcn_forward,
                                    tile_m=256, tile_k=256, tile_l=128))
    pred = jax.block_until_ready(fwd(x, edge_index, edge_label_index, params))

    assert pred.shape == (L,) and pred.dtype == jnp.float32
    assert bool(jnp.all(jnp.isfinite(pred)))

    # --- parity smoke test ---
    # score-stage check (f32 reference, loose tol for matmul precision modes)
    n_pad = _round_up(N, 256)
    scores_k = topk_scores(jnp.pad(x, ((0, n_pad - N), (0, 0))),
                           params["p_topk"], tile_m=256)[:N, 0]
    p = params["p_topk"]
    scores_ref = jnp.tanh(
        jnp.dot(x, p, precision=jax.lax.Precision.HIGHEST)[:, 0]
        / jnp.sqrt(jnp.sum(p * p)))
    assert float(jnp.max(jnp.abs(scores_k - scores_ref))) < 3e-2

    # end-to-end check sharing the (deterministic) top-k permutation; loose
    # tolerance because adj / x / xw / GRU matmuls stream in bf16.
    top_s, perm = jax.lax.top_k(scores_k, C)
    ref = reference_forward(x, edge_index, edge_label_index, params, top_s, perm)
    tol = 5e-2 * (float(jnp.max(jnp.abs(ref))) + 1.0)
    assert float(jnp.max(jnp.abs(pred - ref))) < tol

    print("KERNEL_OK")
</pallas_src>

<mosaic_0001>
module attributes {stable_mosaic.version = 11 : i64} {
  func.func private @main(%arg0: i32) attributes {dimension_semantics = [#tpu.dimension_semantics<core_parallel>], iteration_bounds = array<i64: 2>, tpu.core_type = #tpu.core_type<sc_scalar_subcore>, window_params = []} {
    return
  }
}

module attributes {stable_mosaic.version = 11 : i64} {
  func.func private @main(%arg0: i32) attributes {dimension_semantics = [#tpu.dimension_semantics<core_parallel>], iteration_bounds = array<i64: 2>, tpu.core_type = #tpu.core_type<sc_scalar_subcore>, window_params = []} {
    return
  }
}

module attributes {stable_mosaic.version = 11 : i64} {
  func.func @score_kernel(%arg0: i32, %arg1: memref<256x128xf32, #tpu.memory_space<vmem>>, %arg2: memref<128x1xf32, #tpu.memory_space<vmem>>, %arg3: memref<256x1xf32, #tpu.memory_space<vmem>>) attributes {dimension_semantics = [#tpu.dimension_semantics<parallel>], iteration_bounds = array<i64: 2>, scalar_prefetch = 0 : i64, scratch_operands = 0 : i64, tpu.core_type = #tpu.core_type<tc>, window_params = [{transform_indices = @transform_0, window_bounds = array<i64: 256, 128>}, {pipeline_mode = #tpu.pipeline_mode<synchronous>, transform_indices = @transform_1, window_bounds = array<i64: 128, 1>}, {transform_indices = @transform_2, window_bounds = array<i64: 256, 1>}]} {
    %c0 = arith.constant 0 : index
    %c0_0 = arith.constant 0 : index
    %0 = vector.load %arg2[%c0, %c0_0] : memref<128x1xf32, #tpu.memory_space<vmem>>, vector<128x1xf32>
    %1 = arith.mulf %0, %0 : vector<128x1xf32>
    %2 = vector.shape_cast %1 : vector<128x1xf32> to vector<1x128x1xf32>
    %cst = arith.constant dense<0.000000e+00> : vector<1xf32>
    %3 = vector.multi_reduction <add>, %2, %cst [1, 2] : vector<1x128x1xf32> to vector<1xf32>
    %4 = vector.shape_cast %3 : vector<1xf32> to vector<1x1x1xf32>
    %5 = vector.extract %4[0, 0, 0] : f32 from vector<1x1x1xf32>
    %cst_1 = arith.constant 1.000000e-30 : f32
    %6 = arith.maximumf %5, %cst_1 : f32
    %7 = math.rsqrt %6 : f32
    %c0_2 = arith.constant 0 : index
    %c0_3 = arith.constant 0 : index
    %8 = vector.load %arg1[%c0_2, %c0_3] : memref<256x128xf32, #tpu.memory_space<vmem>>, vector<256x128xf32>
    %cst_4 = arith.constant dense<0.000000e+00> : vector<256x1xf32>
    %9 = tpu.matmul %8, %0, %cst_4 {dimension_numbers = #tpu.dot_dimension_numbers<[1], [0], [0], [1], [0, 0, 1, 1], [], []>} : vector<256x128xf32>, vector<128x1xf32>, vector<256x1xf32> -> vector<256x1xf32>
    %10 = vector.broadcast %7 : f32 to vector<256x1xf32>
    %11 = arith.mulf %9, %10 : vector<256x1xf32>
    %12 = math.tanh %11 : vector<256x1xf32>
    %c0_5 = arith.constant 0 : index
    %c0_6 = arith.constant 0 : index
    %13 = vector.load %arg3[%c0_5, %c0_6] : memref<256x1xf32, #tpu.memory_space<vmem>>, vector<256x1xf32>
    tpu.vector_store %arg3[%c0_5, %c0_6], %12 {strides = array<i32>} : memref<256x1xf32, #tpu.memory_space<vmem>>, vector<256x1xf32>,
    return
  }
  func.func @transform_0(%arg0: i32) -> (i32, i32) {
    %c0_i32 = arith.constant 0 : i32
    %c0_i32_0 = arith.constant 0 : i32
    return %arg0, %c0_i32 : i32, i32
  }
  func.func @transform_1(%arg0: i32) -> (i32, i32) {
    %c0_i32 = arith.constant 0 : i32
    %c0_i32_0 = arith.constant 0 : i32
    %c0_i32_1 = arith.constant 0 : i32
    return %c0_i32, %c0_i32_0 : i32, i32
  }
  func.func @transform_2(%arg0: i32) -> (i32, i32) {
    %c0_i32 = arith.constant 0 : i32
    %c0_i32_0 = arith.constant 0 : i32
    return %arg0, %c0_i32 : i32, i32
  }
}

module attributes {stable_mosaic.version = 11 : i64} {
  func.func @gru_kernel(%arg0: memref<128x128xf32, #tpu.memory_space<vmem>>, %arg1: memref<128x1xf32, #tpu.memory_space<vmem>>, %arg2: memref<128x128xf32, #tpu.memory_space<vmem>>, %arg3: memref<128x384xf32, #tpu.memory_space<vmem>>, %arg4: memref<128x384xf32, #tpu.memory_space<vmem>>, %arg5: memref<1x384xf32, #tpu.memory_space<vmem>>, %arg6: memref<1x384xf32, #tpu.memory_space<vmem>>, %arg7: memref<128x128xf32, #tpu.memory_space<vmem>>) attributes {dimension_semantics = [], scalar_prefetch = 0 : i64, scratch_operands = 0 : i64, tpu.core_type = #tpu.core_type<tc>} {
    %c0 = arith.constant 0 : index
    %c0_0 = arith.constant 0 : index
    %0 = vector.load %arg0[%c0, %c0_0] : memref<128x128xf32, #tpu.memory_space<vmem>>, vector<128x128xf32>
    %c0_1 = arith.constant 0 : index
    %c0_2 = arith.constant 0 : index
    %1 = vector.load %arg1[%c0_1, %c0_2] : memref<128x1xf32, #tpu.memory_space<vmem>>, vector<128x1xf32>
    %2 = vector.broadcast %1 : vector<128x1xf32> to vector<128x128xf32>
    %3 = arith.mulf %0, %2 : vector<128x128xf32>
    %4 = arith.truncf %3 : vector<128x128xf32> to vector<128x128xbf16>
    %c0_3 = arith.constant 0 : index
    %c0_4 = arith.constant 0 : index
    %5 = vector.load %arg2[%c0_3, %c0_4] : memref<128x128xf32, #tpu.memory_space<vmem>>, vector<128x128xf32>
    %c0_5 = arith.constant 0 : index
    %c0_6 = arith.constant 0 : index
    %6 = vector.load %arg3[%c0_5, %c0_6] : memref<128x384xf32, #tpu.memory_space<vmem>>, vector<128x384xf32>
    %7 = arith.truncf %6 : vector<128x384xf32> to vector<128x384xbf16>
    %cst = arith.constant dense<0.000000e+00> : vector<128x384xf32>
    %8 = tpu.matmul %4, %7, %cst {dimension_numbers = #tpu.dot_dimension_numbers<[1], [0], [0], [1], [0, 0, 1, 1], [], []>} : vector<128x128xbf16>, vector<128x384xbf16>, vector<128x384xf32> -> vector<128x384xf32>
    %c0_7 = arith.constant 0 : index
    %c0_8 = arith.constant 0 : index
    %9 = vector.load %arg5[%c0_7, %c0_8] : memref<1x384xf32, #tpu.memory_space<vmem>>, vector<1x384xf32>
    %10 = vector.broadcast %9 : vector<1x384xf32> to vector<128x384xf32>
    %11 = arith.addf %8, %10 : vector<128x384xf32>
    %12 = arith.truncf %5 : vector<128x128xf32> to vector<128x128xbf16>
    %c0_9 = arith.constant 0 : index
    %c0_10 = arith.constant 0 : index
    %13 = vector.load %arg4[%c0_9, %c0_10] : memref<128x384xf32, #tpu.memory_space<vmem>>, vector<128x384xf32>
    %14 = arith.truncf %13 : vector<128x384xf32> to vector<128x384xbf16>
    %cst_11 = arith.constant dense<0.000000e+00> : vector<128x384xf32>
    %15 = tpu.matmul %12, %14, %cst_11 {dimension_numbers = #tpu.dot_dimension_numbers<[1], [0], [0], [1], [0, 0, 1, 1], [], []>} : vector<128x128xbf16>, vector<128x384xbf16>, vector<128x384xf32> -> vector<128x384xf32>
    %c0_12 = arith.constant 0 : index
    %c0_13 = arith.constant 0 : index
    %16 = vector.load %arg6[%c0_12, %c0_13] : memref<1x384xf32, #tpu.memory_space<vmem>>, vector<1x384xf32>
    %17 = vector.broadcast %16 : vector<1x384xf32> to vector<128x384xf32>
    %18 = arith.addf %15, %17 : vector<128x384xf32>
    %19 = vector.extract_strided_slice %11 {offsets = [0, 0], sizes = [128, 128], strides = [1, 1]} : vector<128x384xf32> to vector<128x128xf32>
    %20 = vector.extract_strided_slice %18 {offsets = [0, 0], sizes = [128, 128], strides = [1, 1]} : vector<128x384xf32> to vector<128x128xf32>
    %21 = arith.addf %19, %20 : vector<128x128xf32>
    %22 = arith.negf %21 : vector<128x128xf32>
    %23 = math.exp %22 : vector<128x128xf32>
    %cst_14 = arith.constant 1.000000e+00 : f32
    %24 = vector.broadcast %cst_14 : f32 to vector<128x128xf32>
    %25 = arith.addf %24, %23 : vector<128x128xf32>
    %26 = arith.divf %24, %25 : vector<128x128xf32>
    %27 = vector.extract_strided_slice %11 {offsets = [0, 128], sizes = [128, 128], strides = [1, 1]} : vector<128x384xf32> to vector<128x128xf32>
    %28 = vector.extract_strided_slice %18 {offsets = [0, 128], sizes = [128, 128], strides = [1, 1]} : vector<128x384xf32> to vector<128x128xf32>
    %29 = arith.addf %27, %28 : vector<128x128xf32>
    %30 = arith.negf %29 : vector<128x128xf32>
    %31 = math.exp %30 : vector<128x128xf32>
    %cst_15 = arith.constant 1.000000e+00 : f32
    %32 = vector.broadcast %cst_15 : f32 to vector<128x128xf32>
    %33 = arith.addf %32, %31 : vector<128x128xf32>
    %34 = arith.divf %32, %33 : vector<128x128xf32>
    %35 = vector.extract_strided_slice %11 {offsets = [0, 256], sizes = [128, 128], strides = [1, 1]} : vector<128x384xf32> to vector<128x128xf32>
    %36 = vector.extract_strided_slice %18 {offsets = [0, 256], sizes = [128, 128], strides = [1, 1]} : vector<128x384xf32> to vector<128x128xf32>
    %37 = arith.mulf %26, %36 : vector<128x128xf32>
    %38 = arith.addf %35, %37 : vector<128x128xf32>
    %39 = math.tanh %38 : vector<128x128xf32>
    %cst_16 = arith.constant 1.000000e+00 : f32
    %40 = vector.broadcast %cst_16 : f32 to vector<128x128xf32>
    %41 = arith.subf %40, %34 : vector<128x128xf32>
    %42 = arith.mulf %41, %39 : vector<128x128xf32>
    %43 = arith.mulf %34, %5 : vector<128x128xf32>
    %44 = arith.addf %42, %43 : vector<128x128xf32>
    %c0_17 = arith.constant 0 : index
    %c0_18 = arith.constant 0 : index
    %45 = vector.load %arg7[%c0_17, %c0_18] : memref<128x128xf32, #tpu.memory_space<vmem>>, vector<128x128xf32>
    tpu.vector_store %arg7[%c0_17, %c0_18], %44 {strides = array<i32>} : memref<128x128xf32, #tpu.memory_space<vmem>>, vector<128x128xf32>,
    return
  }
}

module attributes {stable_mosaic.version = 11 : i64} {
  func.func @xw_kernel(%arg0: i32, %arg1: memref<256x128xbf16, #tpu.memory_space<vmem>>, %arg2: memref<128x128xbf16, #tpu.memory_space<vmem>>, %arg3: memref<256x128xbf16, #tpu.memory_space<vmem>>) attributes {dimension_semantics = [#tpu.dimension_semantics<parallel>], iteration_bounds = array<i64: 2>, scalar_prefetch = 0 : i64, scratch_operands = 0 : i64, tpu.core_type = #tpu.core_type<tc>, window_params = [{transform_indices = @transform_0, window_bounds = array<i64: 256, 128>}, {pipeline_mode = #tpu.pipeline_mode<synchronous>, transform_indices = @transform_1, window_bounds = array<i64: 128, 128>}, {transform_indices = @transform_2, window_bounds = array<i64: 256, 128>}]} {
    %c0 = arith.constant 0 : index
    %c0_0 = arith.constant 0 : index
    %0 = vector.load %arg1[%c0, %c0_0] : memref<256x128xbf16, #tpu.memory_space<vmem>>, vector<256x128xbf16>
    %c0_1 = arith.constant 0 : index
    %c0_2 = arith.constant 0 : index
    %1 = vector.load %arg2[%c0_1, %c0_2] : memref<128x128xbf16, #tpu.memory_space<vmem>>, vector<128x128xbf16>
    %cst = arith.constant dense<0.000000e+00> : vector<256x128xf32>
    %2 = tpu.matmul %0, %1, %cst {dimension_numbers = #tpu.dot_dimension_numbers<[1], [0], [0], [1], [0, 0, 1, 1], [], []>} : vector<256x128xbf16>, vector<128x128xbf16>, vector<256x128xf32> -> vector<256x128xf32>
    %3 = arith.truncf %2 : vector<256x128xf32> to vector<256x128xbf16>
    %c0_3 = arith.constant 0 : index
    %c0_4 = arith.constant 0 : index
    %4 = vector.load %arg3[%c0_3, %c0_4] : memref<256x128xbf16, #tpu.memory_space<vmem>>, vector<256x128xbf16>
    tpu.vector_store %arg3[%c0_3, %c0_4], %3 {strides = array<i32>} : memref<256x128xbf16, #tpu.memory_space<vmem>>, vector<256x128xbf16>,
    return
  }
  func.func @transform_0(%arg0: i32) -> (i32, i32) {
    %c0_i32 = arith.constant 0 : i32
    %c0_i32_0 = arith.constant 0 : i32
    return %arg0, %c0_i32 : i32, i32
  }
  func.func @transform_1(%arg0: i32) -> (i32, i32) {
    %c0_i32 = arith.constant 0 : i32
    %c0_i32_0 = arith.constant 0 : i32
    %c0_i32_1 = arith.constant 0 : i32
    return %c0_i32, %c0_i32_0 : i32, i32
  }
  func.func @transform_2(%arg0: i32) -> (i32, i32) {
    %c0_i32 = arith.constant 0 : i32
    %c0_i32_0 = arith.constant 0 : i32
    return %arg0, %c0_i32 : i32, i32
  }
}

module attributes {stable_mosaic.version = 11 : i64} {
  func.func @link_head_kernel(%arg0: i32, %arg1: memref<256xi32, #tpu.memory_space<smem>>, %arg2: memref<256xi32, #tpu.memory_space<smem>>, %arg3: memref<512x128xf32, #tpu.memory_space<any>>, %arg4: memref<128x1xf32, #tpu.memory_space<vmem>>, %arg5: memref<1x1xf32, #tpu.memory_space<vmem>>, %arg6: memref<128x1xf32, #tpu.memory_space<vmem>>, %arg7: memref<128x128xf32, #tpu.memory_space<vmem>>, %arg8: memref<128x128xf32, #tpu.memory_space<vmem>>, %arg9: memref<2x!tpu.dma_semaphore, #tpu.memory_space<semaphore_mem>>) attributes {dimension_semantics = [#tpu.dimension_semantics<arbitrary>], iteration_bounds = array<i64: 2>, scalar_prefetch = 2 : i64, scratch_operands = 3 : i64, tpu.core_type = #tpu.core_type<tc>, window_params = [{}, {pipeline_mode = #tpu.pipeline_mode<synchronous>, transform_indices = @transform_1, window_bounds = array<i64: 128, 1>}, {pipeline_mode = #tpu.pipeline_mode<synchronous>, transform_indices = @transform_2, window_bounds = array<i64: 1, 1>}, {transform_indices = @transform_3, window_bounds = array<i64: 128, 1>}]} {
    %c128_i32 = arith.constant 128 : i32
    %0 = arith.muli %arg0, %c128_i32 : i32
    %c0_i32 = arith.constant 0 : i32
    %c128_i32_0 = arith.constant 128 : i32
    %1 = arith.addi %c0_i32, %c128_i32_0 : i32
    %c1_i32 = arith.constant 1 : i32
    scf.for %arg10 = %c0_i32 to %1 step %c1_i32  : i32 {
      %13 = arith.addi %0, %arg10 : i32
      %14 = arith.index_cast %13 : i32 to index
      %15 = memref.load %arg1[%14] : memref<256xi32, #tpu.memory_space<smem>>
      %16 = arith.addi %0, %arg10 : i32
      %17 = arith.index_cast %16 : i32 to index
      %18 = memref.load %arg2[%17] : memref<256xi32, #tpu.memory_space<smem>>
      %c0_i32_15 = arith.constant 0 : i32
      %c0_i32_16 = arith.constant 0 : i32
      %19 = tpu.memref_slice %arg3[%15, %c0_i32_16] : memref<512x128xf32, #tpu.memory_space<any>> -> memref<1x128xf32, #tpu.memory_space<any>>
      %c0_i32_17 = arith.constant 0 : i32
      %20 = tpu.memref_slice %arg7[%arg10, %c0_i32_17] : memref<128x128xf32, #tpu.memory_space<vmem>> -> memref<1x128xf32, #tpu.memory_space<vmem>>
      %21 = tpu.memref_slice %arg9[%c0_i32_15] : memref<2x!tpu.dma_semaphore, #tpu.memory_space<semaphore_mem>> -> memref<1x!tpu.dma_semaphore, #tpu.memory_space<semaphore_mem>>
      %22 = tpu.memref_squeeze %21 : memref<1x!tpu.dma_semaphore, #tpu.memory_space<semaphore_mem>> -> memref<!tpu.dma_semaphore, #tpu.memory_space<semaphore_mem>>
      tpu.enqueue_dma source(%19 : memref<1x128xf32, #tpu.memory_space<any>>) target(%20 : memref<1x128xf32, #tpu.memory_space<vmem>>) target_semaphore(%22 : memref<!tpu.dma_semaphore, #tpu.memory_space<semaphore_mem>>)
      %c1_i32_18 = arith.constant 1 : i32
      %c0_i32_19 = arith.constant 0 : i32
      %23 = tpu.memref_slice %arg3[%18, %c0_i32_19] : memref<512x128xf32, #tpu.memory_space<any>> -> memref<1x128xf32, #tpu.memory_space<any>>
      %c0_i32_20 = arith.constant 0 : i32
      %24 = tpu.memref_slice %arg8[%arg10, %c0_i32_20] : memref<128x128xf32, #tpu.memory_space<vmem>> -> memref<1x128xf32, #tpu.memory_space<vmem>>
      %25 = tpu.memref_slice %arg9[%c1_i32_18] : memref<2x!tpu.dma_semaphore, #tpu.memory_space<semaphore_mem>> -> memref<1x!tpu.dma_semaphore, #tpu.memory_space<semaphore_mem>>
      %26 = tpu.memref_squeeze %25 : memref<1x!tpu.dma_semaphore, #tpu.memory_space<semaphore_mem>> -> memref<!tpu.dma_semaphore, #tpu.memory_space<semaphore_mem>>
      tpu.enqueue_dma source(%23 : memref<1x128xf32, #tpu.memory_space<any>>) target(%24 : memref<1x128xf32, #tpu.memory_space<vmem>>) target_semaphore(%26 : memref<!tpu.dma_semaphore, #tpu.memory_space<semaphore_mem>>)
    }
    %c128_i32_1 = arith.constant 128 : i32
    %c0_i32_2 = arith.constant 0 : i32
    %c128_i32_3 = arith.constant 128 : i32
    %2 = arith.addi %c0_i32_2, %c128_i32_3 : i32
    %c1_i32_4 = arith.constant 1 : i32
    scf.for %arg10 = %c0_i32_2 to %2 step %c1_i32_4  : i32 {
      %c0_i32_15 = arith.constant 0 : i32
      %c0_i32_16 = arith.constant 0 : i32
      %c0_i32_17 = arith.constant 0 : i32
      %13 = tpu.memref_slice %arg3[%c0_i32_16, %c0_i32_17] : memref<512x128xf32, #tpu.memory_space<any>> -> memref<1x128xf32, #tpu.memory_space<any>>
      %c0_i32_18 = arith.constant 0 : i32
      %14 = tpu.memref_slice %arg7[%arg10, %c0_i32_18] : memref<128x128xf32, #tpu.memory_space<vmem>> -> memref<1x128xf32, #tpu.memory_space<vmem>>
      %15 = tpu.memref_slice %arg9[%c0_i32_15] : memref<2x!tpu.dma_semaphore, #tpu.memory_space<semaphore_mem>> -> memref<1x!tpu.dma_semaphore, #tpu.memory_space<semaphore_mem>>
      %16 = tpu.memref_squeeze %15 : memref<1x!tpu.dma_semaphore, #tpu.memory_space<semaphore_mem>> -> memref<!tpu.dma_semaphore, #tpu.memory_space<semaphore_mem>>
      tpu.wait_dma2 semaphore(%16 : memref<!tpu.dma_semaphore, #tpu.memory_space<semaphore_mem>>) src(%13 : memref<1x128xf32, #tpu.memory_space<any>>) dst(%14 : memref<1x128xf32, #tpu.memory_space<vmem>>)
      %c1_i32_19 = arith.constant 1 : i32
      %c0_i32_20 = arith.constant 0 : i32
      %c0_i32_21 = arith.constant 0 : i32
      %17 = tpu.memref_slice %arg3[%c0_i32_20, %c0_i32_21] : memref<512x128xf32, #tpu.memory_space<any>> -> memref<1x128xf32, #tpu.memory_space<any>>
      %c0_i32_22 = arith.constant 0 : i32
      %18 = tpu.memref_slice %arg8[%arg10, %c0_i32_22] : memref<128x128xf32, #tpu.memory_space<vmem>> -> memref<1x128xf32, #tpu.memory_space<vmem>>
      %19 = tpu.memref_slice %arg9[%c1_i32_19] : memref<2x!tpu.dma_semaphore, #tpu.memory_space<semaphore_mem>> -> memref<1x!tpu.dma_semaphore, #tpu.memory_space<semaphore_mem>>
      %20 = tpu.memref_squeeze %19 : memref<1x!tpu.dma_semaphore, #tpu.memory_space<semaphore_mem>> -> memref<!tpu.dma_semaphore, #tpu.memory_space<semaphore_mem>>
      tpu.wait_dma2 semaphore(%20 : memref<!tpu.dma_semaphore, #tpu.memory_space<semaphore_mem>>) src(%17 : memref<1x128xf32, #tpu.memory_space<any>>) dst(%18 : memref<1x128xf32, #tpu.memory_space<vmem>>)
    }
    %c128_i32_5 = arith.constant 128 : i32
    %c0 = arith.constant 0 : index
    %c0_6 = arith.constant 0 : index
    %3 = vector.load %arg7[%c0, %c0_6] : memref<128x128xf32, #tpu.memory_space<vmem>>, vector<128x128xf32>
    %c0_7 = arith.constant 0 : index
    %c0_8 = arith.constant 0 : index
    %4 = vector.load %arg8[%c0_7, %c0_8] : memref<128x128xf32, #tpu.memory_space<vmem>>, vector<128x128xf32>
    %5 = arith.mulf %3, %4 : vector<128x128xf32>
    %c0_9 = arith.constant 0 : index
    %c0_10 = arith.constant 0 : index
    %6 = vector.load %arg4[%c0_9, %c0_10] : memref<128x1xf32, #tpu.memory_space<vmem>>, vector<128x1xf32>
    %cst = arith.constant dense<0.000000e+00> : vector<128x1xf32>
    %7 = tpu.matmul %5, %6, %cst {dimension_numbers = #tpu.dot_dimension_numbers<[1], [0], [0], [1], [0, 0, 1, 1], [], []>} : vector<128x128xf32>, vector<128x1xf32>, vector<128x1xf32> -> vector<128x1xf32>
    %c0_11 = arith.constant 0 : index
    %c0_12 = arith.constant 0 : index
    %8 = vector.load %arg5[%c0_11, %c0_12] : memref<1x1xf32, #tpu.memory_space<vmem>>, vector<1x1xf32>
    %9 = vector.extract %8[0, 0] : f32 from vector<1x1xf32>
    %10 = vector.broadcast %9 : f32 to vector<128x1xf32>
    %11 = arith.addf %7, %10 : vector<128x1xf32>
    %c0_13 = arith.constant 0 : index
    %c0_14 = arith.constant 0 : index
    %12 = vector.load %arg6[%c0_13, %c0_14] : memref<128x1xf32, #tpu.memory_space<vmem>>, vector<128x1xf32>
    tpu.vector_store %arg6[%c0_13, %c0_14], %11 {strides = array<i32>} : memref<128x1xf32, #tpu.memory_space<vmem>>, vector<128x1xf32>,
    return
  }
  func.func @transform_1(%arg0: i32, %arg1: memref<256xi32, #tpu.memory_space<smem>>, %arg2: memref<256xi32, #tpu.memory_space<smem>>) -> (i32, i32) {
    %c0_i32 = arith.constant 0 : i32
    %c0_i32_0 = arith.constant 0 : i32
    %c0_i32_1 = arith.constant 0 : i32
    return %c0_i32, %c0_i32_0 : i32, i32
  }
  func.func @transform_2(%arg0: i32, %arg1: memref<256xi32, #tpu.memory_space<smem>>, %arg2: memref<256xi32, #tpu.memory_space<smem>>) -> (i32, i32) {
    %c0_i32 = arith.constant 0 : i32
    %c0_i32_0 = arith.constant 0 : i32
    %c0_i32_1 = arith.constant 0 : i32
    return %c0_i32, %c0_i32_0 : i32, i32
  }
  func.func @transform_3(%arg0: i32, %arg1: memref<256xi32, #tpu.memory_space<smem>>, %arg2: memref<256xi32, #tpu.memory_space<smem>>) -> (i32, i32) {
    %c0_i32 = arith.constant 0 : i32
    %c0_i32_0 = arith.constant 0 : i32
    return %arg0, %c0_i32 : i32, i32
  }
}

module attributes {stable_mosaic.version = 11 : i64} {
  func.func @gcn_relu_kernel(%arg0: i32, %arg1: i32, %arg2: memref<256x256xbf16, #tpu.memory_space<vmem>>, %arg3: memref<256x128xbf16, #tpu.memory_space<vmem>>, %arg4: memref<256x128xf32, #tpu.memory_space<vmem>>, %arg5: memref<256x128xf32, #tpu.memory_space<vmem>>) attributes {dimension_semantics = [#tpu.dimension_semantics<parallel>, #tpu.dimension_semantics<arbitrary>], iteration_bounds = array<i64: 2, 2>, scalar_prefetch = 0 : i64, scratch_operands = 1 : i64, tpu.core_type = #tpu.core_type<tc>, window_params = [{transform_indices = @transform_0, window_bounds = array<i64: 256, 256>}, {transform_indices = @transform_1, window_bounds = array<i64: 256, 128>}, {transform_indices = @transform_2, window_bounds = array<i64: 256, 128>}]} {
    %c0_i32 = arith.constant 0 : i32
    %0 = arith.cmpi eq, %arg1, %c0_i32 : i32
    %1 = arith.extui %0 : i1 to i32
    %c0_i32_0 = arith.constant 0 : i32
    %2 = arith.cmpi ne, %1, %c0_i32_0 : i32
    scf.if %2 {
      %cst_9 = arith.constant 0.000000e+00 : f32
      %12 = vector.broadcast %cst_9 : f32 to vector<256x128xf32>
      %c0_10 = arith.constant 0 : index
      %c0_11 = arith.constant 0 : index
      %13 = vector.load %arg5[%c0_10, %c0_11] : memref<256x128xf32, #tpu.memory_space<vmem>>, vector<256x128xf32>
      tpu.vector_store %arg5[%c0_10, %c0_11], %12 {strides = array<i32>} : memref<256x128xf32, #tpu.memory_space<vmem>>, vector<256x128xf32>,
    } else {
    }
    %c0 = arith.constant 0 : index
    %c0_1 = arith.constant 0 : index
    %3 = vector.load %arg5[%c0, %c0_1] : memref<256x128xf32, #tpu.memory_space<vmem>>, vector<256x128xf32>
    %c0_2 = arith.constant 0 : index
    %c0_3 = arith.constant 0 : index
    %4 = vector.load %arg2[%c0_2, %c0_3] : memref<256x256xbf16, #tpu.memory_space<vmem>>, vector<256x256xbf16>
    %c0_4 = arith.constant 0 : index
    %c0_5 = arith.constant 0 : index
    %5 = vector.load %arg3[%c0_4, %c0_5] : memref<256x128xbf16, #tpu.memory_space<vmem>>, vector<256x128xbf16>
    %cst = arith.constant dense<0.000000e+00> : vector<256x128xf32>
    %6 = tpu.matmul %4, %5, %cst {dimension_numbers = #tpu.dot_dimension_numbers<[1], [0], [0], [1], [0, 0, 1, 1], [], []>} : vector<256x256xbf16>, vector<256x128xbf16>, vector<256x128xf32> -> vector<256x128xf32>
    %7 = arith.addf %3, %6 : vector<256x128xf32>
    %c0_6 = arith.constant 0 : index
    %c0_7 = arith.constant 0 : index
    %8 = vector.load %arg5[%c0_6, %c0_7] : memref<256x128xf32, #tpu.memory_space<vmem>>, vector<256x128xf32>
    tpu.vector_store %arg5[%c0_6, %c0_7], %7 {strides = array<i32>} : memref<256x128xf32, #tpu.memory_space<vmem>>, vector<256x128xf32>,
    %c1_i32 = arith.constant 1 : i32
    %9 = arith.cmpi eq, %arg1, %c1_i32 : i32
    %10 = arith.extui %9 : i1 to i32
    %c0_i32_8 = arith.constant 0 : i32
    %11 = arith.cmpi ne, %10, %c0_i32_8 : i32
    scf.if %11 {
      %c0_9 = arith.constant 0 : index
      %c0_10 = arith.constant 0 : index
      %12 = vector.load %arg5[%c0_9, %c0_10] : memref<256x128xf32, #tpu.memory_space<vmem>>, vector<256x128xf32>
      %cst_11 = arith.constant 0.000000e+00 : f32
      %13 = vector.broadcast %cst_11 : f32 to vector<256x128xf32>
      %14 = arith.maximumf %12, %13 : vector<256x128xf32>
      %c0_12 = arith.constant 0 : index
      %c0_13 = arith.constant 0 : index
      %15 = vector.load %arg4[%c0_12, %c0_13] : memref<256x128xf32, #tpu.memory_space<vmem>>, vector<256x128xf32>
      tpu.vector_store %arg4[%c0_12, %c0_13], %14 {strides = array<i32>} : memref<256x128xf32, #tpu.memory_space<vmem>>, vector<256x128xf32>,
    } else {
    }
    return
  }
  func.func @transform_0(%arg0: i32, %arg1: i32) -> (i32, i32) {
    %c0_i32 = arith.constant 0 : i32
    return %arg0, %arg1 : i32, i32
  }
  func.func @transform_1(%arg0: i32, %arg1: i32) -> (i32, i32) {
    %c0_i32 = arith.constant 0 : i32
    %c0_i32_0 = arith.constant 0 : i32
    return %arg1, %c0_i32 : i32, i32
  }
  func.func @transform_2(%arg0: i32, %arg1: i32) -> (i32, i32) {
    %c0_i32 = arith.constant 0 : i32
    %c0_i32_0 = arith.constant 0 : i32
    return %arg0, %c0_i32 : i32, i32
  }
}

</mosaic_0001>

<llo_original>
// kernel: icews_evolvegcn_forward.5
$region0: #{icews_evolvegcn_forward.5}
  #allocation0 [shape = 'u32[]', space=smem, size = 0x4, offset = 0x4, fixed_abs, tag = 'smem constant byte address 0x4 - core index']
  #allocation1 [shape = 'u32[144,128]{1,0:T(1,128)}', space=vmem, size = 0x12000, scoped, tag = 'internal scratch']
  %s0 = inlined_call_operand.vmem [shape: f32[512,128], index: 0, kind: input, shape index: {}]
  %s1 = inlined_call_operand.vmem [shape: f32[128,1], index: 1, kind: input, shape index: {}]
  %s2 = inlined_call_operand.vmem [shape: f32[512,1], index: 2, kind: output, shape index: {}]
  %s3 = sld [smem:[#allocation0]]
  $region41: #{icews_evolvegcn_forward.5} parent=0
    _
  %s5 = ssub.s32 1, %s3
  %s6 = scalar_select 0, %s5, %s3
  loop: start=0, step=1, limit=4
  $region2: #{icews_evolvegcn_forward.5} parent=0 // loop_pre_header
    _
  $region3: #{icews_evolvegcn_forward.5} parent=0 // loop_header
    %s8 = sphi 0, %s12
    %p9 = scmp.ge.s32.totalorder %s8, 4
    %s18 = sphi 0, %s20
    %s21 = sphi 0, %s18
    %s22 = sphi 0, %s21
    %s38 = sphi 0, %s22
    %s42 = sphi 0, %s42
    %s44 = sphi 0, %s42
    %s45 = sphi 0, %s44
    %s59 = sphi 0, %s45
    %s65 = sphi 0, %s67
    %s68 = sphi 0, %s65
    %s69 = sphi 0, %s68
    %s85 = sphi 0, %s69
  $region4: #{icews_evolvegcn_forward.5} parent=0 // loop_header_branch
    %11 = sbr.rel (%p9) target = $region8
  $region5: #{icews_evolvegcn_forward.5} parent=0 // loop_body
    %s13 = ssub.s32 %s8, 1
    %s14 = ssub.s32 %s8, 2
    %s15 = sadd.s32 %s8, 1
    %s16 = ssub.s32 %s8, %s15
    %p17 = scmp.eq.s32.totalorder %s16, 0
    %s19 = sadd.s32 %s18, 1
    %s20 = scalar_select %p17, %s18, %s19
    %p23 = pneg %p17
    %p24 = scmp.eq.s32.totalorder %s8, 1
    %p25 = por %p23, %p24
    %p26 = scmp.ne.s32.totalorder %s18, %s21
    %p27 = scmp.eq.s32.totalorder %s8, 0
    %p28 = por %p26, %p27
    %p29 = scmp.ne.s32.totalorder %s18, %s21
    %p30 = scmp.eq.s32.totalorder %s13, 1
    %p31 = por %p29, %p30
    %p32 = scmp.ne.s32.totalorder %s21, %s22
    %p33 = scmp.eq.s32.totalorder %s13, 0
    %p34 = por %p32, %p33
    %p35 = scmp.ne.s32.totalorder %s21, %s22
    %p36 = scmp.eq.s32.totalorder %s14, 1
    %p37 = por %p35, %p36
    %p39 = scmp.ne.s32.totalorder %s22, %s38
    %p40 = scmp.eq.s32.totalorder %s14, 0
    %p41 = por %p39, %p40
    %s43 = sadd.s32 %s42, 1
    %p46 = scmp.eq.s32.totalorder %s8, 1
    %p47 = scmp.ne.s32.totalorder %s42, %s44
    %p48 = scmp.eq.s32.totalorder %s8, 0
    %p49 = por %p47, %p48
    %p50 = scmp.ne.s32.totalorder %s42, %s44
    %p51 = scmp.eq.s32.totalorder %s13, 1
    %p52 = por %p50, %p51
    %p53 = scmp.ne.s32.totalorder %s44, %s45
    %p54 = scmp.eq.s32.totalorder %s13, 0
    %p55 = por %p53, %p54
    %p56 = scmp.ne.s32.totalorder %s44, %s45
    %p57 = scmp.eq.s32.totalorder %s14, 1
    %p58 = por %p56, %p57
    %p60 = scmp.ne.s32.totalorder %s45, %s59
    %p61 = scmp.eq.s32.totalorder %s14, 0
    %p62 = por %p60, %p61
    %s63 = ssub.s32 %s8, %s15
    %p64 = scmp.eq.s32.totalorder %s63, 0
    %s66 = sadd.s32 %s65, 1
    %s67 = scalar_select %p64, %s65, %s66
    %p70 = pneg %p64
    %p71 = scmp.eq.s32.totalorder %s8, 1
    %p72 = por %p70, %p71
    %p73 = scmp.ne.s32.totalorder %s65, %s68
    %p74 = scmp.eq.s32.totalorder %s8, 0
    %p75 = por %p73, %p74
    %p76 = scmp.ne.s32.totalorder %s65, %s68
    %p77 = scmp.eq.s32.totalorder %s13, 1
    %p78 = por %p76, %p77
    %p79 = scmp.ne.s32.totalorder %s68, %s69
    %p80 = scmp.eq.s32.totalorder %s13, 0
    %p81 = por %p79, %p80
    %p82 = scmp.ne.s32.totalorder %s68, %s69
    %p83 = scmp.eq.s32.totalorder %s14, 1
    %p84 = por %p82, %p83
    %p86 = scmp.ne.s32.totalorder %s69, %s85
    %p87 = scmp.eq.s32.totalorder %s14, 0
    %p88 = por %p86, %p87
    %p89 = scmp.le.s32.totalorder 1, %s8
    %p90 = scmp.lt.s32.totalorder %s8, 3
    %p91 = pnand %p89, %p90
    %p92 = pneg %p91
    // Predicated region
    $region9: #{icews_evolvegcn_forward.5} parent=5 // pred_check
      _
    $region10: #{icews_evolvegcn_forward.5} parent=5 // pred_check_branch
      %94 = sbr.rel (%p91) target = $region12
    $region11: #{icews_evolvegcn_forward.5} parent=5 // pred_region
      %s95 = ssub.s32 %s8, 1
      // Predicated region
      $region13: #{icews_evolvegcn_forward.5} parent=11 // pred_check
        %p96 = pneg %p55
      $region14: #{icews_evolvegcn_forward.5} parent=11 // pred_check_branch
        %98 = sbr.rel (%p96) target = $region16
      $region15: #{icews_evolvegcn_forward.5} parent=11 // pred_region
        _
      $region16: #{icews_evolvegcn_forward.5} parent=11 // pred_fallthru
        _
    $region12: #{icews_evolvegcn_forward.5} parent=5 // pred_fallthru
      _
    %p99 = scmp.lt.s32.totalorder %s8, 2
    // Predicated region
    $region17: #{icews_evolvegcn_forward.5} parent=5 // pred_check
      %p100 = pneg %p99
    $region18: #{icews_evolvegcn_forward.5} parent=5 // pred_check_branch
      %102 = sbr.rel (%p100) target = $region20
    $region19: #{icews_evolvegcn_forward.5} parent=5 // pred_region
      // Predicated region
      $region21: #{icews_evolvegcn_forward.5} parent=19 // pred_check
        %p103 = pneg %p28
      $region22: #{icews_evolvegcn_forward.5} parent=19 // pred_check_branch
        %105 = sbr.rel (%p103) target = $region24
      $region23: #{icews_evolvegcn_forward.5} parent=19 // pred_region
        %s106 = smul.u32 32, %s8
        %p107 = scmp.lt.s32.totalorder %s106, 63
        %s108 = scalar_select %p107, %s106, 63
        %s109 = smul.addr %s108, 8
        %s110 = scalar_lea.vmem %s0, %s109
        %s111 = smul.u32 32, %s8
      $region24: #{icews_evolvegcn_forward.5} parent=19 // pred_fallthru
        _
    $region20: #{icews_evolvegcn_forward.5} parent=5 // pred_fallthru
      _
    %p112 = scmp.le.s32.totalorder 1, %s8
    %p113 = scmp.lt.s32.totalorder %s8, 3
    %p114 = pnand %p112, %p113
    %p115 = pneg %p114
    // Predicated region
    $region25: #{icews_evolvegcn_forward.5} parent=5 // pred_check
      _
    $region26: #{icews_evolvegcn_forward.5} parent=5 // pred_check_branch
      %117 = sbr.rel (%p114) target = $region28
    $region27: #{icews_evolvegcn_forward.5} parent=5 // pred_region
      %s118 = ssub.s32 %s8, 1
      %s119 = smul.u32 32, %s13
      %p120 = scmp.lt.s32.totalorder %s119, 63
      %s121 = scalar_select %p120, %s119, 63
      %s122 = smul.addr %s121, 8
      %s123 = scalar_lea.vmem %s0, %s122
      %p124 = pneg %p34
      %p125 = pneg %p31
      %p126 = pneg %p55
      %p127 = pneg %p52
      %p128 = pneg %p81
      %p129 = pneg %p78
      %s130 = smul.u32 32, %s13
      %p131 = scmp.lt.s32.totalorder %s130, 63
      %s132 = scalar_select %p131, %s130, 63
      %s133 = smul.addr %s132, 8
      %s134 = scalar_lea.vmem %s2, %s133
      %s135 = smul.u32 32, %s13
      %p136 = scmp.lt.s32.totalorder %s135, 63
      %s137 = scalar_select %p136, %s135, 63
      %s138 = smul.addr %s137, 8
      %s139 = scalar_lea.vmem %s0, %s138
      %s140 = smul.u32 32, %s13
      %s141 = smul.u32 32, %s13
      %p142 = scmp.lt.s32.totalorder %s141, 63
      %s143 = scalar_select %p142, %s141, 63
      %s144 = smul.addr %s143, 8
      %s145 = scalar_lea.vmem %s2, %s144
      %s146 = smul.u32 32, %s13
      %v147 = vld [vmem:[%s1] sm:$0xff]
      %v148 = vld [vmem:[%s1 + $0x8] sm:$0xff]
      %v149 = vld [vmem:[%s1 + $0x10] sm:$0xff]
      %v150 = vld [vmem:[%s1 + $0x18] sm:$0xff]
      %v151 = vld [vmem:[%s1 + $0x20] sm:$0xff]
      %v152 = vld [vmem:[%s1 + $0x28] sm:$0xff]
      %v153 = vld [vmem:[%s1 + $0x30] sm:$0xff]
      %v154 = vld [vmem:[%s1 + $0x38] sm:$0xff]
      %v155 = vld [vmem:[%s1 + $0x40] sm:$0xff]
      %v156 = vld [vmem:[%s1 + $0x48] sm:$0xff]
      %v157 = vld [vmem:[%s1 + $0x50] sm:$0xff]
      %v158 = vld [vmem:[%s1 + $0x58] sm:$0xff]
      %v159 = vld [vmem:[%s1 + $0x60] sm:$0xff]
      %v160 = vld [vmem:[%s1 + $0x68] sm:$0xff]
      %v161 = vld [vmem:[%s1 + $0x70] sm:$0xff]
      %v162 = vld [vmem:[%s1 + $0x78] sm:$0xff]
      %v163 = vmul.f32 %v147, %v147
      %v164 = vmul.f32 %v148, %v148
      %v165 = vmul.f32 %v149, %v149
      %v166 = vmul.f32 %v150, %v150
      %v167 = vmul.f32 %v151, %v151
      %v168 = vmul.f32 %v152, %v152
      %v169 = vmul.f32 %v153, %v153
      %v170 = vmul.f32 %v154, %v154
      %v171 = vmul.f32 %v155, %v155
      %v172 = vmul.f32 %v156, %v156
      %v173 = vmul.f32 %v157, %v157
      %v174 = vmul.f32 %v158, %v158
      %v175 = vmul.f32 %v159, %v159
      %v176 = vmul.f32 %v160, %v160
      %v177 = vmul.f32 %v161, %v161
      %v178 = vmul.f32 %v162, %v162
      %vm179 = vcmask 7168
      %v180 = vsel %vm179, %v163, 0.0
      %v181 = vsel %vm179, %v164, 0.0
      %v182 = vadd.f32 %v180, %v181
      %v183 = vsel %vm179, %v165, 0.0
      %v184 = vadd.f32 %v182, %v183
      %v185 = vsel %vm179, %v166, 0.0
      %v186 = vadd.f32 %v184, %v185
      %v187 = vsel %vm179, %v167, 0.0
      %v188 = vadd.f32 %v186, %v187
      %v189 = vsel %vm179, %v168, 0.0
      %v190 = vadd.f32 %v188, %v189
      %v191 = vsel %vm179, %v169, 0.0
      %v192 = vadd.f32 %v190, %v191
      %v193 = vsel %vm179, %v170, 0.0
      %v194 = vadd.f32 %v192, %v193
      %v195 = vsel %vm179, %v171, 0.0
      %v196 = vadd.f32 %v194, %v195
      %v197 = vsel %vm179, %v172, 0.0
      %v198 = vadd.f32 %v196, %v197
      %v199 = vsel %vm179, %v173, 0.0
      %v200 = vadd.f32 %v198, %v199
      %v201 = vsel %vm179, %v174, 0.0
      %v202 = vadd.f32 %v200, %v201
      %v203 = vsel %vm179, %v175, 0.0
      %v204 = vadd.f32 %v202, %v203
      %v205 = vsel %vm179, %v176, 0.0
      %v206 = vadd.f32 %v204, %v205
      %v207 = vsel %vm179, %v177, 0.0
      %v208 = vadd.f32 %v206, %v207
      %v209 = vsel %vm179, %v178, 0.0
      %v210 = vadd.f32 %v208, %v209
      %211 = vadd.xlane.f32.xlu0 %v210
      %v212 = vpop.xlane.xlu0 %211
      %v213 = vrot.slane %v212, 4
      %v214 = vadd.f32 %v212, %v213
      %v215 = vrot.slane %v214, 2
      %v216 = vadd.f32 %v214, %v215
      %v217 = vrot.slane %v216, 1
      %v218 = vadd.f32 %v216, %v217
      %s219 = vtos %v218
      %s220 = smax.f32 %s219, 1e-30
      %v221 = vstv %s220
      %v222 = vrsqrt.pop %v221
      %s223 = vtos %v222
      %v224 = vld [vmem:[%s139] sm:$0xff]
      %v225 = vld [vmem:[%s139 + $0x8] sm:$0xff]
      %v226 = vld [vmem:[%s139 + $0x10] sm:$0xff]
      %v227 = vld [vmem:[%s139 + $0x18] sm:$0xff]
      %v228 = vld [vmem:[%s139 + $0x20] sm:$0xff]
      %v229 = vld [vmem:[%s139 + $0x28] sm:$0xff]
      %v230 = vld [vmem:[%s139 + $0x30] sm:$0xff]
      %v231 = vld [vmem:[%s139 + $0x38] sm:$0xff]
      %v232 = vld [vmem:[%s139 + $0x40] sm:$0xff]
      %v233 = vld [vmem:[%s139 + $0x48] sm:$0xff]
      %v234 = vld [vmem:[%s139 + $0x50] sm:$0xff]
      %v235 = vld [vmem:[%s139 + $0x58] sm:$0xff]
      %v236 = vld [vmem:[%s139 + $0x60] sm:$0xff]
      %v237 = vld [vmem:[%s139 + $0x68] sm:$0xff]
      %v238 = vld [vmem:[%s139 + $0x70] sm:$0xff]
      %v239 = vld [vmem:[%s139 + $0x78] sm:$0xff]
      %v240 = vld [vmem:[%s139 + $0x80] sm:$0xff]
      %v241 = vld [vmem:[%s139 + $0x88] sm:$0xff]
      %v242 = vld [vmem:[%s139 + $0x90] sm:$0xff]
      %v243 = vld [vmem:[%s139 + $0x98] sm:$0xff]
      %v244 = vld [vmem:[%s139 + $0xa0] sm:$0xff]
      %v245 = vld [vmem:[%s139 + $0xa8] sm:$0xff]
      %v246 = vld [vmem:[%s139 + $0xb0] sm:$0xff]
      %v247 = vld [vmem:[%s139 + $0xb8] sm:$0xff]
      %v248 = vld [vmem:[%s139 + $0xc0] sm:$0xff]
      %v249 = vld [vmem:[%s139 + $0xc8] sm:$0xff]
      %v250 = vld [vmem:[%s139 + $0xd0] sm:$0xff]
      %v251 = vld [vmem:[%s139 + $0xd8] sm:$0xff]
      %v252 = vld [vmem:[%s139 + $0xe0] sm:$0xff]
      %v253 = vld [vmem:[%s139 + $0xe8] sm:$0xff]
      %v254 = vld [vmem:[%s139 + $0xf0] sm:$0xff]
      %v255 = vld [vmem:[%s139 + $0xf8] sm:$0xff]
      %256 = vmatprep.subr.mxu0 0.0
      %257 = vmatpush1.msra.mxu0 %v147
      %258 = vmatprep.subr.mxu0 0.0
      %259 = vmatpush1.msra.mxu0 %v148
      %260 = vmatprep.subr.mxu0 0.0
      %261 = vmatpush1.msra.mxu0 %v149
      %262 = vmatprep.subr.mxu0 0.0
      %263 = vmatpush1.msra.mxu0 %v150
      %264 = vmatprep.subr.mxu0 0.0
      %265 = vmatpush1.msra.mxu0 %v151
      %266 = vmatprep.subr.mxu0 0.0
      %267 = vmatpush1.msra.mxu0 %v152
      %268 = vmatprep.subr.mxu0 0.0
      %269 = vmatpush1.msra.mxu0 %v153
      %270 = vmatprep.subr.mxu0 0.0
      %271 = vmatpush1.msra.mxu0 %v154
      %272 = vmatprep.subr.mxu0 0.0
      %273 = vmatpush1.msra.mxu0 %v155
      %274 = vmatprep.subr.mxu0 0.0
      %275 = vmatpush1.msra.mxu0 %v156
      %276 = vmatprep.subr.mxu0 0.0
      %277 = vmatpush1.msra.mxu0 %v157
      %278 = vmatprep.subr.mxu0 0.0
      %279 = vmatpush1.msra.mxu0 %v158
      %280 = vmatprep.subr.mxu0 0.0
      %281 = vmatpush1.msra.mxu0 %v159
      %282 = vmatprep.subr.mxu0 0.0
      %283 = vmatpush1.msra.mxu0 %v160
      %284 = vmatprep.subr.mxu0 0.0
      %285 = vmatpush1.msra.mxu0 %v161
      %286 = vmatprep.subr.mxu0 0.0
      %287 = vmatpush1.msra.mxu0 %v162
      %288 = vmatprep.subr.mxu0 0.0
      %289 = vmatpush1.msra.mxu0 0.0
      %290 = vmatprep.subr.mxu0 0.0
      %291 = vmatpush1.msra.mxu0 0.0
      %292 = vmatprep.subr.mxu0 0.0
      %293 = vmatpush1.msra.mxu0 0.0
      %294 = vmatprep.subr.mxu0 0.0
      %295 = vmatpush1.msra.mxu0 0.0
      %296 = vmatprep.subr.mxu0 0.0
      %297 = vmatpush1.msra.mxu0 0.0
      %298 = vmatprep.subr.mxu0 0.0
      %299 = vmatpush1.msra.mxu0 0.0
      %300 = vmatprep.subr.mxu0 0.0
      %301 = vmatpush1.msra.mxu0 0.0
      %302 = vmatprep.subr.mxu0 0.0
      %303 = vmatpush1.msra.mxu0 0.0
      %304 = vmatprep.subr.mxu0 0.0
      %305 = vmatpush1.msra.mxu0 0.0
      %306 = vmatprep.subr.mxu0 0.0
      %307 = vmatpush1.msra.mxu0 0.0
      %308 = vmatprep.subr.mxu0 0.0
      %309 = vmatpush1.msra.mxu0 0.0
      %310 = vmatprep.subr.mxu0 0.0
      %311 = vmatpush1.msra.mxu0 0.0
      %312 = vmatprep.subr.mxu0 0.0
      %313 = vmatpush1.msra.mxu0 0.0
      %314 = vmatprep.subr.mxu0 0.0
      %315 = vmatpush1.msra.mxu0 0.0
      %316 = vmatprep.subr.mxu0 0.0
      %317 = vmatpush1.msra.mxu0 0.0
      %318 = vmatprep.subr.mxu0 0.0
      %319 = vmatpush1.msra.mxu0 0.0
      %320 = vmatprep.mubr.f32.mxu0 0.0
      %321 = vmatmul.mubr.f32.gmra.mrb[0].mxu0 %v224
      %v322 = vpop.f32.mrb[0].mxu0
      %v323 = vadd.f32 0.0, %v322
      %v324 = vpop.f32.mrb[0].mxu0
      %325 = vmatprep.mubr.f32.mxu0 0.0
      %326 = vmatmul.mubr.f32.gmra.mrb[0].mxu0 %v225
      %v327 = vpop.f32.mrb[0].mxu0
      %v328 = vadd.f32 0.0, %v327
      %v329 = vpop.f32.mrb[0].mxu0
      %330 = vmatprep.mubr.f32.mxu0 0.0
      %331 = vmatmul.mubr.f32.gmra.mrb[0].mxu0 %v226
      %v332 = vpop.f32.mrb[0].mxu0
      %v333 = vadd.f32 0.0, %v332
      %v334 = vpop.f32.mrb[0].mxu0
      %335 = vmatprep.mubr.f32.mxu0 0.0
      %336 = vmatmul.mubr.f32.gmra.mrb[0].mxu0 %v227
      %v337 = vpop.f32.mrb[0].mxu0
      %v338 = vadd.f32 0.0, %v337
      %v339 = vpop.f32.mrb[0].mxu0
      %340 = vmatprep.mubr.f32.mxu0 0.0
      %341 = vmatmul.mubr.f32.gmra.mrb[0].mxu0 %v228
      %v342 = vpop.f32.mrb[0].mxu0
      %v343 = vadd.f32 0.0, %v342
      %v344 = vpop.f32.mrb[0].mxu0
      %345 = vmatprep.mubr.f32.mxu0 0.0
      %346 = vmatmul.mubr.f32.gmra.mrb[0].mxu0 %v229
      %v347 = vpop.f32.mrb[0].mxu0
      %v348 = vadd.f32 0.0, %v347
      %v349 = vpop.f32.mrb[0].mxu0
      %350 = vmatprep.mubr.f32.mxu0 0.0
      %351 = vmatmul.mubr.f32.gmra.mrb[0].mxu0 %v230
      %v352 = vpop.f32.mrb[0].mxu0
      %v353 = vadd.f32 0.0, %v352
      %v354 = vpop.f32.mrb[0].mxu0
      %355 = vmatprep.mubr.f32.mxu0 0.0
      %356 = vmatmul.mubr.f32.gmra.mrb[0].mxu0 %v231
      %v357 = vpop.f32.mrb[0].mxu0
      %v358 = vadd.f32 0.0, %v357
      %v359 = vpop.f32.mrb[0].mxu0
      %360 = vmatprep.mubr.f32.mxu0 0.0
      %361 = vmatmul.mubr.f32.gmra.mrb[0].mxu0 %v232
      %v362 = vpop.f32.mrb[0].mxu0
      %v363 = vadd.f32 0.0, %v362
      %v364 = vpop.f32.mrb[0].mxu0
      %365 = vmatprep.mubr.f32.mxu0 0.0
      %366 = vmatmul.mubr.f32.gmra.mrb[0].mxu0 %v233
      %v367 = vpop.f32.mrb[0].mxu0
      %v368 = vadd.f32 0.0, %v367
      %v369 = vpop.f32.mrb[0].mxu0
      %370 = vmatprep.mubr.f32.mxu0 0.0
      %371 = vmatmul.mubr.f32.gmra.mrb[0].mxu0 %v234
      %v372 = vpop.f32.mrb[0].mxu0
      %v373 = vadd.f32 0.0, %v372
      %v374 = vpop.f32.mrb[0].mxu0
      %375 = vmatprep.mubr.f32.mxu0 0.0
      %376 = vmatmul.mubr.f32.gmra.mrb[0].mxu0 %v235
      %v377 = vpop.f32.mrb[0].mxu0
      %v378 = vadd.f32 0.0, %v377
      %v379 = vpop.f32.mrb[0].mxu0
      %380 = vmatprep.mubr.f32.mxu0 0.0
      %381 = vmatmul.mubr.f32.gmra.mrb[0].mxu0 %v236
      %v382 = vpop.f32.mrb[0].mxu0
      %v383 = vadd.f32 0.0, %v382
      %v384 = vpop.f32.mrb[0].mxu0
      %385 = vmatprep.mubr.f32.mxu0 0.0
      %386 = vmatmul.mubr.f32.gmra.mrb[0].mxu0 %v237
      %v387 = vpop.f32.mrb[0].mxu0
      %v388 = vadd.f32 0.0, %v387
      %v389 = vpop.f32.mrb[0].mxu0
      %390 = vmatprep.mubr.f32.mxu0 0.0
      %391 = vmatmul.mubr.f32.gmra.mrb[0].mxu0 %v238
      %v392 = vpop.f32.mrb[0].mxu0
      %v393 = vadd.f32 0.0, %v392
      %v394 = vpop.f32.mrb[0].mxu0
      %395 = vmatprep.mubr.f32.mxu0 0.0
      %396 = vmatmul.mubr.f32.gmra.mrb[0].mxu0 %v239
      %v397 = vpop.f32.mrb[0].mxu0
      %v398 = vadd.f32 0.0, %v397
      %v399 = vpop.f32.mrb[0].mxu0
      %400 = vmatprep.mubr.f32.mxu0 0.0
      %401 = vmatmul.mubr.f32.gmra.mrb[0].mxu0 %v240
      %v402 = vpop.f32.mrb[0].mxu0
      %v403 = vadd.f32 0.0, %v402
      %v404 = vpop.f32.mrb[0].mxu0
      %405 = vmatprep.mubr.f32.mxu0 0.0
      %406 = vmatmul.mubr.f32.gmra.mrb[0].mxu0 %v241
      %v407 = vpop.f32.mrb[0].mxu0
      %v408 = vadd.f32 0.0, %v407
      %v409 = vpop.f32.mrb[0].mxu0
      %410 = vmatprep.mubr.f32.mxu0 0.0
      %411 = vmatmul.mubr.f32.gmra.mrb[0].mxu0 %v242
      %v412 = vpop.f32.mrb[0].mxu0
      %v413 = vadd.f32 0.0, %v412
      %v414 = vpop.f32.mrb[0].mxu0
      %415 = vmatprep.mubr.f32.mxu0 0.0
      %416 = vmatmul.mubr.f32.gmra.mrb[0].mxu0 %v243
      %v417 = vpop.f32.mrb[0].mxu0
      %v418 = vadd.f32 0.0, %v417
      %v419 = vpop.f32.mrb[0].mxu0
      %420 = vmatprep.mubr.f32.mxu0 0.0
      %421 = vmatmul.mubr.f32.gmra.mrb[0].mxu0 %v244
      %v422 = vpop.f32.mrb[0].mxu0
      %v423 = vadd.f32 0.0, %v422
      %v424 = vpop.f32.mrb[0].mxu0
      %425 = vmatprep.mubr.f32.mxu0 0.0
      %426 = vmatmul.mubr.f32.gmra.mrb[0].mxu0 %v245
      %v427 = vpop.f32.mrb[0].mxu0
      %v428 = vadd.f32 0.0, %v427
      %v429 = vpop.f32.mrb[0].mxu0
      %430 = vmatprep.mubr.f32.mxu0 0.0
      %431 = vmatmul.mubr.f32.gmra.mrb[0].mxu0 %v246
      %v432 = vpop.f32.mrb[0].mxu0
      %v433 = vadd.f32 0.0, %v432
      %v434 = vpop.f32.mrb[0].mxu0
      %435 = vmatprep.mubr.f32.mxu0 0.0
      %436 = vmatmul.mubr.f32.gmra.mrb[0].mxu0 %v247
      %v437 = vpop.f32.mrb[0].mxu0
      %v438 = vadd.f32 0.0, %v437
      %v439 = vpop.f32.mrb[0].mxu0
      %440 = vmatprep.mubr.f32.mxu0 0.0
      %441 = vmatmul.mubr.f32.gmra.mrb[0].mxu0 %v248
      %v442 = vpop.f32.mrb[0].mxu0
      %v443 = vadd.f32 0.0, %v442
      %v444 = vpop.f32.mrb[0].mxu0
      %445 = vmatprep.mubr.f32.mxu0 0.0
      %446 = vmatmul.mubr.f32.gmra.mrb[0].mxu0 %v249
      %v447 = vpop.f32.mrb[0].mxu0
      %v448 = vadd.f32 0.0, %v447
      %v449 = vpop.f32.mrb[0].mxu0
      %450 = vmatprep.mubr.f32.mxu0 0.0
      %451 = vmatmul.mubr.f32.gmra.mrb[0].mxu0 %v250
      %v452 = vpop.f32.mrb[0].mxu0
      %v453 = vadd.f32 0.0, %v452
      %v454 = vpop.f32.mrb[0].mxu0
      %455 = vmatprep.mubr.f32.mxu0 0.0
      %456 = vmatmul.mubr.f32.gmra.mrb[0].mxu0 %v251
      %v457 = vpop.f32.mrb[0].mxu0
      %v458 = vadd.f32 0.0, %v457
      %v459 = vpop.f32.mrb[0].mxu0
      %460 = vmatprep.mubr.f32.mxu0 0.0
      %461 = vmatmul.mubr.f32.gmra.mrb[0].mxu0 %v252
      %v462 = vpop.f32.mrb[0].mxu0
      %v463 = vadd.f32 0.0, %v462
      %v464 = vpop.f32.mrb[0].mxu0
      %465 = vmatprep.mubr.f32.mxu0 0.0
      %466 = vmatmul.mubr.f32.gmra.mrb[0].mxu0 %v253
      %v467 = vpop.f32.mrb[0].mxu0
      %v468 = vadd.f32 0.0, %v467
      %v469 = vpop.f32.mrb[0].mxu0
      %470 = vmatprep.mubr.f32.mxu0 0.0
      %471 = vmatmul.mubr.f32.gmra.mrb[0].mxu0 %v254
      %v472 = vpop.f32.mrb[0].mxu0
      %v473 = vadd.f32 0.0, %v472
      %v474 = vpop.f32.mrb[0].mxu0
      %475 = vmatprep.mubr.f32.mxu0 0.0
      %476 = vmatmul.mubr.f32.gmra.mrb[0].mxu0 %v255
      %v477 = vpop.f32.mrb[0].mxu0
      %v478 = vadd.f32 0.0, %v477
      %v479 = vpop.f32.mrb[0].mxu0
      %480 = vdwg.mxu0
      %v481 = vstv %s223
      %v482 = vmul.f32 %v323, %v481
      %v483 = vmul.f32 %v328, %v481
      %v484 = vmul.f32 %v333, %v481
      %v485 = vmul.f32 %v338, %v481
      %v486 = vmul.f32 %v343, %v481
      %v487 = vmul.f32 %v348, %v481
      %v488 = vmul.f32 %v353, %v481
      %v489 = vmul.f32 %v358, %v481
      %v490 = vmul.f32 %v363, %v481
      %v491 = vmul.f32 %v368, %v481
      %v492 = vmul.f32 %v373, %v481
      %v493 = vmul.f32 %v378, %v481
      %v494 = vmul.f32 %v383, %v481
      %v495 = vmul.f32 %v388, %v481
      %v496 = vmul.f32 %v393, %v481
      %v497 = vmul.f32 %v398, %v481
      %v498 = vmul.f32 %v403, %v481
      %v499 = vmul.f32 %v408, %v481
      %v500 = vmul.f32 %v413, %v481
      %v501 = vmul.f32 %v418, %v481
      %v502 = vmul.f32 %v423, %v481
      %v503 = vmul.f32 %v428, %v481
      %v504 = vmul.f32 %v433, %v481
      %v505 = vmul.f32 %v438, %v481
      %v506 = vmul.f32 %v443, %v481
      %v507 = vmul.f32 %v448, %v481
      %v508 = vmul.f32 %v453, %v481
      %v509 = vmul.f32 %v458, %v481
      %v510 = vmul.f32 %v463, %v481
      %v511 = vmul.f32 %v468, %v481
      %v512 = vmul.f32 %v473, %v481
      %v513 = vmul.f32 %v478, %v481
      %v514 = vtanh.pop %v482
      %v515 = vtanh.pop %v483
      %v516 = vtanh.pop %v484
      %v517 = vtanh.pop %v485
      %v518 = vtanh.pop %v486
      %v519 = vtanh.pop %v487
      %v520 = vtanh.pop %v488
      %v521 = vtanh.pop %v489
      %v522 = vtanh.pop %v490
      %v523 = vtanh.pop %v491
      %v524 = vtanh.pop %v492
      %v525 = vtanh.pop %v493
      %v526 = vtanh.pop %v494
      %v527 = vtanh.pop %v495
      %v528 = vtanh.pop %v496
      %v529 = vtanh.pop %v497
      %v530 = vtanh.pop %v498
      %v531 = vtanh.pop %v499
      %v532 = vtanh.pop %v500
      %v533 = vtanh.pop %v501
      %v534 = vtanh.pop %v502
      %v535 = vtanh.pop %v503
      %v536 = vtanh.pop %v504
      %v537 = vtanh.pop %v505
      %v538 = vtanh.pop %v506
      %v539 = vtanh.pop %v507
      %v540 = vtanh.pop %v508
      %v541 = vtanh.pop %v509
      %v542 = vtanh.pop %v510
      %v543 = vtanh.pop %v511
      %v544 = vtanh.pop %v512
      %v545 = vtanh.pop %v513
      %546 = vst.msk [vmem:[%s145] sm:$0xff] %vm179, %v514
      %547 = vst.msk [vmem:[%s145 + $0x8] sm:$0xff] %vm179, %v515
      %548 = vst.msk [vmem:[%s145 + $0x10] sm:$0xff] %vm179, %v516
      %549 = vst.msk [vmem:[%s145 + $0x18] sm:$0xff] %vm179, %v517
      %550 = vst.msk [vmem:[%s145 + $0x20] sm:$0xff] %vm179, %v518
      %551 = vst.msk [vmem:[%s145 + $0x28] sm:$0xff] %vm179, %v519
      %552 = vst.msk [vmem:[%s145 + $0x30] sm:$0xff] %vm179, %v520
      %553 = vst.msk [vmem:[%s145 + $0x38] sm:$0xff] %vm179, %v521
      %554 = vst.msk [vmem:[%s145 + $0x40] sm:$0xff] %vm179, %v522
      %555 = vst.msk [vmem:[%s145 + $0x48] sm:$0xff] %vm179, %v523
      %556 = vst.msk [vmem:[%s145 + $0x50] sm:$0xff] %vm179, %v524
      %557 = vst.msk [vmem:[%s145 + $0x58] sm:$0xff] %vm179, %v525
      %558 = vst.msk [vmem:[%s145 + $0x60] sm:$0xff] %vm179, %v526
      %559 = vst.msk [vmem:[%s145 + $0x68] sm:$0xff] %vm179, %v527
      %560 = vst.msk [vmem:[%s145 + $0x70] sm:$0xff] %vm179, %v528
      %561 = vst.msk [vmem:[%s145 + $0x78] sm:$0xff] %vm179, %v529
      %562 = vst.msk [vmem:[%s145 + $0x80] sm:$0xff] %vm179, %v530
      %563 = vst.msk [vmem:[%s145 + $0x88] sm:$0xff] %vm179, %v531
      %564 = vst.msk [vmem:[%s145 + $0x90] sm:$0xff] %vm179, %v532
      %565 = vst.msk [vmem:[%s145 + $0x98] sm:$0xff] %vm179, %v533
      %566 = vst.msk [vmem:[%s145 + $0xa0] sm:$0xff] %vm179, %v534
      %567 = vst.msk [vmem:[%s145 + $0xa8] sm:$0xff] %vm179, %v535
      %568 = vst.msk [vmem:[%s145 + $0xb0] sm:$0xff] %vm179, %v536
      %569 = vst.msk [vmem:[%s145 + $0xb8] sm:$0xff] %vm179, %v537
      %570 = vst.msk [vmem:[%s145 + $0xc0] sm:$0xff] %vm179, %v538
      %571 = vst.msk [vmem:[%s145 + $0xc8] sm:$0xff] %vm179, %v539
      %572 = vst.msk [vmem:[%s145 + $0xd0] sm:$0xff] %vm179, %v540
      %573 = vst.msk [vmem:[%s145 + $0xd8] sm:$0xff] %vm179, %v541
      %574 = vst.msk [vmem:[%s145 + $0xe0] sm:$0xff] %vm179, %v542
      %575 = vst.msk [vmem:[%s145 + $0xe8] sm:$0xff] %vm179, %v543
      %576 = vst.msk [vmem:[%s145 + $0xf0] sm:$0xff] %vm179, %v544
      %577 = vst.msk [vmem:[%s145 + $0xf8] sm:$0xff] %vm179, %v545
      %s578 = smul.u32 32, %s13
      %p579 = scmp.lt.s32.totalorder %s578, 63
      %s580 = scalar_select %p579, %s578, 63
      %s581 = smul.addr %s580, 8
      %s582 = scalar_lea.vmem %s2, %s581
      // Predicated region
      $region29: #{icews_evolvegcn_forward.5} parent=27 // pred_check
        %p583 = pneg %p78
      $region30: #{icews_evolvegcn_forward.5} parent=27 // pred_check_branch
        %585 = sbr.rel (%p583) target = $region32
      $region31: #{icews_evolvegcn_forward.5} parent=27 // pred_region
        %s586 = smul.u32 32, %s13
      $region32: #{icews_evolvegcn_forward.5} parent=27 // pred_fallthru
        _
    $region28: #{icews_evolvegcn_forward.5} parent=5 // pred_fallthru
      _
    %p587 = scmp.le.s32.totalorder 2, %s8
    // Predicated region
    $region33: #{icews_evolvegcn_forward.5} parent=5 // pred_check
      %p588 = pneg %p587
    $region34: #{icews_evolvegcn_forward.5} parent=5 // pred_check_branch
      %590 = sbr.rel (%p588) target = $region36
    $region35: #{icews_evolvegcn_forward.5} parent=5 // pred_region
      %s591 = ssub.s32 %s8, 2
      // Predicated region
      $region37: #{icews_evolvegcn_forward.5} parent=35 // pred_check
        %p592 = pneg %p84
      $region38: #{icews_evolvegcn_forward.5} parent=35 // pred_check_branch
        %594 = sbr.rel (%p592) target = $region40
      $region39: #{icews_evolvegcn_forward.5} parent=35 // pred_region
        %s595 = smul.u32 32, %s14
        %p596 = scmp.lt.s32.totalorder %s595, 63
        %s597 = scalar_select %p596, %s595, 63
        %s598 = smul.addr %s597, 8
        %s599 = scalar_lea.vmem %s2, %s598
      $region40: #{icews_evolvegcn_forward.5} parent=35 // pred_fallthru
        _
    $region36: #{icews_evolvegcn_forward.5} parent=5 // pred_fallthru
      _
  $region6: #{icews_evolvegcn_forward.5} parent=0 // loop_footer
    %s12 = sadd.s32 1, %s8
  $region7: #{icews_evolvegcn_forward.5} parent=0 // loop_footer_branch
    %7 = sbr.rel target = $region3
  $region8: #{icews_evolvegcn_forward.5} parent=0 // loop_exit
    _

// kernel: icews_evolvegcn_forward.6
$region0: #{icews_evolvegcn_forward.6}
  #allocation0 [shape = 'u32[]', space=smem, size = 0x4, offset = 0x4, fixed_abs, tag = 'smem constant byte address 0x4 - core index']
  #allocation1 [shape = 'u32[144,128]{1,0:T(1,128)}', space=vmem, size = 0x12000, scoped, tag = 'internal scratch']
  %s0 = inlined_call_operand.vmem [shape: f32[128,128], index: 0, kind: input, shape index: {}]
  %s1 = inlined_call_operand.vmem [shape: f32[128,1], index: 1, kind: input, shape index: {}]
  %s2 = inlined_call_operand.vmem [shape: f32[128,128], index: 2, kind: input, shape index: {}]
  %s3 = inlined_call_operand.vmem [shape: f32[128,384], index: 3, kind: input, shape index: {}]
  %s4 = inlined_call_operand.vmem [shape: f32[128,384], index: 4, kind: input, shape index: {}]
  %s5 = inlined_call_operand.vmem [shape: f32[1,384], index: 5, kind: input, shape index: {}]
  %s6 = inlined_call_operand.vmem [shape: f32[1,384], index: 6, kind: input, shape index: {}]
  %s7 = inlined_call_operand.vmem [shape: f32[128,128], index: 7, kind: output, shape index: {}]
  %s8 = sld [smem:[#allocation0]]
  $region38: #{icews_evolvegcn_forward.6} parent=0
    _
  %s10 = ssub.s32 1, %s8
  %s11 = scalar_select 0, %s10, %s8
  // Predicated region
  $region2: #{icews_evolvegcn_forward.6} parent=0 // pred_check
    _
  $region3: #{icews_evolvegcn_forward.6} parent=0 // pred_check_branch
    %13 = sbr.rel (0) target = $region5
  $region4: #{icews_evolvegcn_forward.6} parent=0 // pred_region
    _
  $region5: #{icews_evolvegcn_forward.6} parent=0 // pred_fallthru
    _
  // Predicated region
  $region6: #{icews_evolvegcn_forward.6} parent=0 // pred_check
    _
  $region7: #{icews_evolvegcn_forward.6} parent=0 // pred_check_branch
    %15 = sbr.rel (0) target = $region9
  $region8: #{icews_evolvegcn_forward.6} parent=0 // pred_region
    _
  $region9: #{icews_evolvegcn_forward.6} parent=0 // pred_fallthru
    _
  // Predicated region
  $region10: #{icews_evolvegcn_forward.6} parent=0 // pred_check
    _
  $region11: #{icews_evolvegcn_forward.6} parent=0 // pred_check_branch
    %17 = sbr.rel (0) target = $region13
  $region12: #{icews_evolvegcn_forward.6} parent=0 // pred_region
    _
  $region13: #{icews_evolvegcn_forward.6} parent=0 // pred_fallthru
    _
  // Predicated region
  $region14: #{icews_evolvegcn_forward.6} parent=0 // pred_check
    _
  $region15: #{icews_evolvegcn_forward.6} parent=0 // pred_check_branch
    %19 = sbr.rel (0) target = $region17
  $region16: #{icews_evolvegcn_forward.6} parent=0 // pred_region
    _
  $region17: #{icews_evolvegcn_forward.6} parent=0 // pred_fallthru
    _
  // Predicated region
  $region18: #{icews_evolvegcn_forward.6} parent=0 // pred_check
    _
  $region19: #{icews_evolvegcn_forward.6} parent=0 // pred_check_branch
    %21 = sbr.rel (0) target = $region21
  $region20: #{icews_evolvegcn_forward.6} parent=0 // pred_region
    _
  $region21: #{icews_evolvegcn_forward.6} parent=0 // pred_fallthru
    _
  // Predicated region
  $region22: #{icews_evolvegcn_forward.6} parent=0 // pred_check
    _
  $region23: #{icews_evolvegcn_forward.6} parent=0 // pred_check_branch
    %23 = sbr.rel (0) target = $region25
  $region24: #{icews_evolvegcn_forward.6} parent=0 // pred_region
    _
  $region25: #{icews_evolvegcn_forward.6} parent=0 // pred_fallthru
    _
  // Predicated region
  $region26: #{icews_evolvegcn_forward.6} parent=0 // pred_check
    _
  $region27: #{icews_evolvegcn_forward.6} parent=0 // pred_check_branch
    %25 = sbr.rel (0) target = $region29
  $region28: #{icews_evolvegcn_forward.6} parent=0 // pred_region
    _
  $region29: #{icews_evolvegcn_forward.6} parent=0 // pred_fallthru
    _
  %v27 = vld [vmem:[%s0] sm:$0xff]
  %v28 = vld [vmem:[%s0 + $0x8] sm:$0xff]
  %v29 = vld [vmem:[%s0 + $0x10] sm:$0xff]
  %v30 = vld [vmem:[%s0 + $0x18] sm:$0xff]
  %v31 = vld [vmem:[%s0 + $0x20] sm:$0xff]
  %v32 = vld [vmem:[%s0 + $0x28] sm:$0xff]
  %v33 = vld [vmem:[%s0 + $0x30] sm:$0xff]
  %v34 = vld [vmem:[%s0 + $0x38] sm:$0xff]
  %v35 = vld [vmem:[%s0 + $0x40] sm:$0xff]
  %v36 = vld [vmem:[%s0 + $0x48] sm:$0xff]
  %v37 = vld [vmem:[%s0 + $0x50] sm:$0xff]
  %v38 = vld [vmem:[%s0 + $0x58] sm:$0xff]
  %v39 = vld [vmem:[%s0 + $0x60] sm:$0xff]
  %v40 = vld [vmem:[%s0 + $0x68] sm:$0xff]
  %v41 = vld [vmem:[%s0 + $0x70] sm:$0xff]
  %v42 = vld [vmem:[%s0 + $0x78] sm:$0xff]
  %v43 = vld [vmem:[%s1] sm:$0xff]
  %v44 = vld [vmem:[%s1 + $0x8] sm:$0xff]
  %v45 = vld [vmem:[%s1 + $0x10] sm:$0xff]
  %v46 = vld [vmem:[%s1 + $0x18] sm:$0xff]
  %v47 = vld [vmem:[%s1 + $0x20] sm:$0xff]
  %v48 = vld [vmem:[%s1 + $0x28] sm:$0xff]
  %v49 = vld [vmem:[%s1 + $0x30] sm:$0xff]
  %v50 = vld [vmem:[%s1 + $0x38] sm:$0xff]
  %v51 = vld [vmem:[%s1 + $0x40] sm:$0xff]
  %v52 = vld [vmem:[%s1 + $0x48] sm:$0xff]
  %v53 = vld [vmem:[%s1 + $0x50] sm:$0xff]
  %v54 = vld [vmem:[%s1 + $0x58] sm:$0xff]
  %v55 = vld [vmem:[%s1 + $0x60] sm:$0xff]
  %v56 = vld [vmem:[%s1 + $0x68] sm:$0xff]
  %v57 = vld [vmem:[%s1 + $0x70] sm:$0xff]
  %v58 = vld [vmem:[%s1 + $0x78] sm:$0xff]
  %60 = vset.pattern.permute.xlu0 0
  %61 = vperm.xlu0 %60, %v43
  %v62 = vpop.permute.xlu0 %61
  %65 = vset.pattern.permute.xlu0 0
  %66 = vperm.xlu0 %65, %v44
  %v67 = vpop.permute.xlu0 %66
  %70 = vset.pattern.permute.xlu0 0
  %71 = vperm.xlu0 %70, %v45
  %v72 = vpop.permute.xlu0 %71
  %75 = vset.pattern.permute.xlu0 0
  %76 = vperm.xlu0 %75, %v46
  %v77 = vpop.permute.xlu0 %76
  %80 = vset.pattern.permute.xlu0 0
  %81 = vperm.xlu0 %80, %v47
  %v82 = vpop.permute.xlu0 %81
  %85 = vset.pattern.permute.xlu0 0
  %86 = vperm.xlu0 %85, %v48
  %v87 = vpop.permute.xlu0 %86
  %90 = vset.pattern.permute.xlu0 0
  %91 = vperm.xlu0 %90, %v49
  %v92 = vpop.permute.xlu0 %91
  %95 = vset.pattern.permute.xlu0 0
  %96 = vperm.xlu0 %95, %v50
  %v97 = vpop.permute.xlu0 %96
  %100 = vset.pattern.permute.xlu0 0
  %101 = vperm.xlu0 %100, %v51
  %v102 = vpop.permute.xlu0 %101
  %105 = vset.pattern.permute.xlu0 0
  %106 = vperm.xlu0 %105, %v52
  %v107 = vpop.permute.xlu0 %106
  %110 = vset.pattern.permute.xlu0 0
  %111 = vperm.xlu0 %110, %v53
  %v112 = vpop.permute.xlu0 %111
  %115 = vset.pattern.permute.xlu0 0
  %116 = vperm.xlu0 %115, %v54
  %v117 = vpop.permute.xlu0 %116
  %120 = vset.pattern.permute.xlu0 0
  %121 = vperm.xlu0 %120, %v55
  %v122 = vpop.permute.xlu0 %121
  %125 = vset.pattern.permute.xlu0 0
  %126 = vperm.xlu0 %125, %v56
  %v127 = vpop.permute.xlu0 %126
  %130 = vset.pattern.permute.xlu0 0
  %131 = vperm.xlu0 %130, %v57
  %v132 = vpop.permute.xlu0 %131
  %135 = vset.pattern.permute.xlu0 0
  %136 = vperm.xlu0 %135, %v58
  %v137 = vpop.permute.xlu0 %136
  %v139 = vmul.f32 %v27, %v62
  %v140 = vmul.f32 %v28, %v67
  %v141 = vmul.f32 %v29, %v72
  %v142 = vmul.f32 %v30, %v77
  %v143 = vmul.f32 %v31, %v82
  %v144 = vmul.f32 %v32, %v87
  %v145 = vmul.f32 %v33, %v92
  %v146 = vmul.f32 %v34, %v97
  %v147 = vmul.f32 %v35, %v102
  %v148 = vmul.f32 %v36, %v107
  %v149 = vmul.f32 %v37, %v112
  %v150 = vmul.f32 %v38, %v117
  %v151 = vmul.f32 %v39, %v122
  %v152 = vmul.f32 %v40, %v127
  %v153 = vmul.f32 %v41, %v132
  %v154 = vmul.f32 %v42, %v137
  %v155 = vpack.c.bf16 %v140, %v139
  %v156 = vpack.c.bf16 %v142, %v141
  %v157 = vpack.c.bf16 %v144, %v143
  %v158 = vpack.c.bf16 %v146, %v145
  %v159 = vpack.c.bf16 %v148, %v147
  %v160 = vpack.c.bf16 %v150, %v149
  %v161 = vpack.c.bf16 %v152, %v151
  %v162 = vpack.c.bf16 %v154, %v153
  %v163 = vld [vmem:[%s2] sm:$0xff]
  %v164 = vld [vmem:[%s2 + $0x8] sm:$0xff]
  %v165 = vld [vmem:[%s2 + $0x10] sm:$0xff]
  %v166 = vld [vmem:[%s2 + $0x18] sm:$0xff]
  %v167 = vld [vmem:[%s2 + $0x20] sm:$0xff]
  %v168 = vld [vmem:[%s2 + $0x28] sm:$0xff]
  %v169 = vld [vmem:[%s2 + $0x30] sm:$0xff]
  %v170 = vld [vmem:[%s2 + $0x38] sm:$0xff]
  %v171 = vld [vmem:[%s2 + $0x40] sm:$0xff]
  %v172 = vld [vmem:[%s2 + $0x48] sm:$0xff]
  %v173 = vld [vmem:[%s2 + $0x50] sm:$0xff]
  %v174 = vld [vmem:[%s2 + $0x58] sm:$0xff]
  %v175 = vld [vmem:[%s2 + $0x60] sm:$0xff]
  %v176 = vld [vmem:[%s2 + $0x68] sm:$0xff]
  %v177 = vld [vmem:[%s2 + $0x70] sm:$0xff]
  %v178 = vld [vmem:[%s2 + $0x78] sm:$0xff]
  %v179 = vld [vmem:[%s3] sm:$0xff]
  %v180 = vld [vmem:[%s3 + $0x8] sm:$0xff]
  %v181 = vld [vmem:[%s3 + $0x10] sm:$0xff]
  %v182 = vld [vmem:[%s3 + $0x18] sm:$0xff]
  %v183 = vld [vmem:[%s3 + $0x20] sm:$0xff]
  %v184 = vld [vmem:[%s3 + $0x28] sm:$0xff]
  %v185 = vld [vmem:[%s3 + $0x30] sm:$0xff]
  %v186 = vld [vmem:[%s3 + $0x38] sm:$0xff]
  %v187 = vld [vmem:[%s3 + $0x40] sm:$0xff]
  %v188 = vld [vmem:[%s3 + $0x48] sm:$0xff]
  %v189 = vld [vmem:[%s3 + $0x50] sm:$0xff]
  %v190 = vld [vmem:[%s3 + $0x58] sm:$0xff]
  %v191 = vld [vmem:[%s3 + $0x60] sm:$0xff]
  %v192 = vld [vmem:[%s3 + $0x68] sm:$0xff]
  %v193 = vld [vmem:[%s3 + $0x70] sm:$0xff]
  %v194 = vld [vmem:[%s3 + $0x78] sm:$0xff]
  %v195 = vld [vmem:[%s3 + $0x80] sm:$0xff]
  %v196 = vld [vmem:[%s3 + $0x88] sm:$0xff]
  %v197 = vld [vmem:[%s3 + $0x90] sm:$0xff]
  %v198 = vld [vmem:[%s3 + $0x98] sm:$0xff]
  %v199 = vld [vmem:[%s3 + $0xa0] sm:$0xff]
  %v200 = vld [vmem:[%s3 + $0xa8] sm:$0xff]
  %v201 = vld [vmem:[%s3 + $0xb0] sm:$0xff]
  %v202 = vld [vmem:[%s3 + $0xb8] sm:$0xff]
  %v203 = vld [vmem:[%s3 + $0xc0] sm:$0xff]
  %v204 = vld [vmem:[%s3 + $0xc8] sm:$0xff]
  %v205 = vld [vmem:[%s3 + $0xd0] sm:$0xff]
  %v206 = vld [vmem:[%s3 + $0xd8] sm:$0xff]
  %v207 = vld [vmem:[%s3 + $0xe0] sm:$0xff]
  %v208 = vld [vmem:[%s3 + $0xe8] sm:$0xff]
  %v209 = vld [vmem:[%s3 + $0xf0] sm:$0xff]
  %v210 = vld [vmem:[%s3 + $0xf8] sm:$0xff]
  %v211 = vld [vmem:[%s3 + $0x100] sm:$0xff]
  %v212 = vld [vmem:[%s3 + $0x108] sm:$0xff]
  %v213 = vld [vmem:[%s3 + $0x110] sm:$0xff]
  %v214 = vld [vmem:[%s3 + $0x118] sm:$0xff]
  %v215 = vld [vmem:[%s3 + $0x120] sm:$0xff]
  %v216 = vld [vmem:[%s3 + $0x128] sm:$0xff]
  %v217 = vld [vmem:[%s3 + $0x130] sm:$0xff]
  %v218 = vld [vmem:[%s3 + $0x138] sm:$0xff]
  %v219 = vld [vmem:[%s3 + $0x140] sm:$0xff]
  %v220 = vld [vmem:[%s3 + $0x148] sm:$0xff]
  %v221 = vld [vmem:[%s3 + $0x150] sm:$0xff]
  %v222 = vld [vmem:[%s3 + $0x158] sm:$0xff]
  %v223 = vld [vmem:[%s3 + $0x160] sm:$0xff]
  %v224 = vld [vmem:[%s3 + $0x168] sm:$0xff]
  %v225 = vld [vmem:[%s3 + $0x170] sm:$0xff]
  %v226 = vld [vmem:[%s3 + $0x178] sm:$0xff]
  %v227 = vpack.c.bf16 %v182, %v179
  %v228 = vpack.c.bf16 %v183, %v180
  %v229 = vpack.c.bf16 %v184, %v181
  %v230 = vpack.c.bf16 %v188, %v185
  %v231 = vpack.c.bf16 %v189, %v186
  %v232 = vpack.c.bf16 %v190, %v187
  %v233 = vpack.c.bf16 %v194, %v191
  %v234 = vpack.c.bf16 %v195, %v192
  %v235 = vpack.c.bf16 %v196, %v193
  %v236 = vpack.c.bf16 %v200, %v197
  %v237 = vpack.c.bf16 %v201, %v198
  %v238 = vpack.c.bf16 %v202, %v199
  %v239 = vpack.c.bf16 %v206, %v203
  %v240 = vpack.c.bf16 %v207, %v204
  %v241 = vpack.c.bf16 %v208, %v205
  %v242 = vpack.c.bf16 %v212, %v209
  %v243 = vpack.c.bf16 %v213, %v210
  %v244 = vpack.c.bf16 %v214, %v211
  %v245 = vpack.c.bf16 %v218, %v215
  %v246 = vpack.c.bf16 %v219, %v216
  %v247 = vpack.c.bf16 %v220, %v217
  %v248 = vpack.c.bf16 %v224, %v221
  %v249 = vpack.c.bf16 %v225, %v222
  %v250 = vpack.c.bf16 %v226, %v223
  %v251 = vld [vmem:[%s5] sm:$0x7]
  %v253 = vlaneseq
  %v254 = vshrl.u32 %v253, 7
  %v255 = vsub.s32 0, %v254
  %v256 = vrot.slane %v251, %v255
  %v257 = vlaneseq
  %v258 = vshrl.u32 %v257, 7
  %v259 = vsub.s32 1, %v258
  %v260 = vrot.slane %v251, %v259
  %v261 = vlaneseq
  %v262 = vshrl.u32 %v261, 7
  %v263 = vsub.s32 2, %v262
  %v264 = vrot.slane %v251, %v263
  %268 = vmatprep.subr.bf16.mxu0 %v228
  %269 = vmatpush1.bf16.msra.mxu0 %v227
  %270 = vmatprep.subr.bf16.mxu0 %v231
  %271 = vmatpush1.bf16.msra.mxu0 %v230
  %272 = vmatprep.subr.bf16.mxu0 %v234
  %273 = vmatpush1.bf16.msra.mxu0 %v233
  %274 = vmatprep.subr.bf16.mxu0 %v237
  %275 = vmatpush1.bf16.msra.mxu0 %v236
  %276 = vmatprep.subr.bf16.mxu0 %v240
  %277 = vmatpush1.bf16.msra.mxu0 %v239
  %278 = vmatprep.subr.bf16.mxu0 %v243
  %279 = vmatpush1.bf16.msra.mxu0 %v242
  %280 = vmatprep.subr.bf16.mxu0 %v246
  %281 = vmatpush1.bf16.msra.mxu0 %v245
  %282 = vmatprep.subr.bf16.mxu0 %v249
  %283 = vmatpush1.bf16.msra.mxu0 %v248
  %284 = vmatprep.subr.bf16.mxu0 0
  %285 = vmatpush1.bf16.msra.mxu0 0
  %286 = vmatprep.subr.bf16.mxu0 0
  %287 = vmatpush1.bf16.msra.mxu0 0
  %288 = vmatprep.subr.bf16.mxu0 0
  %289 = vmatpush1.bf16.msra.mxu0 0
  %290 = vmatprep.subr.bf16.mxu0 0
  %291 = vmatpush1.bf16.msra.mxu0 0
  %292 = vmatprep.subr.bf16.mxu0 0
  %293 = vmatpush1.bf16.msra.mxu0 0
  %294 = vmatprep.subr.bf16.mxu0 0
  %295 = vmatpush1.bf16.msra.mxu0 0
  %296 = vmatprep.subr.bf16.mxu0 0
  %297 = vmatpush1.bf16.msra.mxu0 0
  %298 = vmatprep.subr.bf16.mxu0 0
  %299 = vmatpush1.bf16.msra.mxu0 0
  %300 = vmatprep.mubr.bf16.mxu0 0
  %301 = vmatmul.mubr.bf16.gmra.mrb[0].mxu0 %v155
  %v302 = vpop.f32.mrb[0].mxu0
  %v303 = vadd.f32 %v256, %v302
  %v304 = vpop.f32.mrb[0].mxu0
  %v305 = vadd.f32 %v260, %v304
  %v306 = vpop.f32.mrb[0].mxu0
  %v307 = vadd.f32 %v256, %v306
  %v308 = vpop.f32.mrb[0].mxu0
  %v309 = vadd.f32 %v260, %v308
  %310 = vmatprep.mubr.bf16.mxu0 0
  %311 = vmatmul.mubr.bf16.gmra.mrb[0].mxu0 %v156
  %v312 = vpop.f32.mrb[0].mxu0
  %v313 = vadd.f32 %v256, %v312
  %v314 = vpop.f32.mrb[0].mxu0
  %v315 = vadd.f32 %v260, %v314
  %v316 = vpop.f32.mrb[0].mxu0
  %v317 = vadd.f32 %v256, %v316
  %v318 = vpop.f32.mrb[0].mxu0
  %v319 = vadd.f32 %v260, %v318
  %320 = vmatprep.mubr.bf16.mxu0 0
  %321 = vmatmul.mubr.bf16.gmra.mrb[0].mxu0 %v157
  %v322 = vpop.f32.mrb[0].mxu0
  %v323 = vadd.f32 %v256, %v322
  %v324 = vpop.f32.mrb[0].mxu0
  %v325 = vadd.f32 %v260, %v324
  %v326 = vpop.f32.mrb[0].mxu0
  %v327 = vadd.f32 %v256, %v326
  %v328 = vpop.f32.mrb[0].mxu0
  %v329 = vadd.f32 %v260, %v328
  %330 = vmatprep.mubr.bf16.mxu0 0
  %331 = vmatmul.mubr.bf16.gmra.mrb[0].mxu0 %v158
  %v332 = vpop.f32.mrb[0].mxu0
  %v333 = vadd.f32 %v256, %v332
  %v334 = vpop.f32.mrb[0].mxu0
  %v335 = vadd.f32 %v260, %v334
  %v336 = vpop.f32.mrb[0].mxu0
  %v337 = vadd.f32 %v256, %v336
  %v338 = vpop.f32.mrb[0].mxu0
  %v339 = vadd.f32 %v260, %v338
  %340 = vmatprep.mubr.bf16.mxu0 0
  %341 = vmatmul.mubr.bf16.gmra.mrb[0].mxu0 %v159
  %v342 = vpop.f32.mrb[0].mxu0
  %v343 = vadd.f32 %v256, %v342
  %v344 = vpop.f32.mrb[0].mxu0
  %v345 = vadd.f32 %v260, %v344
  %v346 = vpop.f32.mrb[0].mxu0
  %v347 = vadd.f32 %v256, %v346
  %v348 = vpop.f32.mrb[0].mxu0
  %v349 = vadd.f32 %v260, %v348
  %350 = vmatprep.mubr.bf16.mxu0 0
  %351 = vmatmul.mubr.bf16.gmra.mrb[0].mxu0 %v160
  %v352 = vpop.f32.mrb[0].mxu0
  %v353 = vadd.f32 %v256, %v352
  %v354 = vpop.f32.mrb[0].mxu0
  %v355 = vadd.f32 %v260, %v354
  %v356 = vpop.f32.mrb[0].mxu0
  %v357 = vadd.f32 %v256, %v356
  %v358 = vpop.f32.mrb[0].mxu0
  %v359 = vadd.f32 %v260, %v358
  %360 = vmatprep.mubr.bf16.mxu0 0
  %361 = vmatmul.mubr.bf16.gmra.mrb[0].mxu0 %v161
  %v362 = vpop.f32.mrb[0].mxu0
  %v363 = vadd.f32 %v256, %v362
  %v364 = vpop.f32.mrb[0].mxu0
  %v365 = vadd.f32 %v260, %v364
  %v366 = vpop.f32.mrb[0].mxu0
  %v367 = vadd.f32 %v256, %v366
  %v368 = vpop.f32.mrb[0].mxu0
  %v369 = vadd.f32 %v260, %v368
  %370 = vmatprep.mubr.bf16.mxu0 0
  %371 = vmatmul.mubr.bf16.gmra.mrb[0].mxu0 %v162
  %v372 = vpop.f32.mrb[0].mxu0
  %v373 = vadd.f32 %v256, %v372
  %v374 = vpop.f32.mrb[0].mxu0
  %v375 = vadd.f32 %v260, %v374
  %v376 = vpop.f32.mrb[0].mxu0
  %v377 = vadd.f32 %v256, %v376
  %v378 = vpop.f32.mrb[0].mxu0
  %v379 = vadd.f32 %v260, %v378
  %380 = vdwg.mxu0
  %381 = vmatprep.subr.bf16.mxu0 0
  %382 = vmatpush1.bf16.msra.mxu0 %v229
  %383 = vmatprep.subr.bf16.mxu0 0
  %384 = vmatpush1.bf16.msra.mxu0 %v232
  %385 = vmatprep.subr.bf16.mxu0 0
  %386 = vmatpush1.bf16.msra.mxu0 %v235
  %387 = vmatprep.subr.bf16.mxu0 0
  %388 = vmatpush1.bf16.msra.mxu0 %v238
  %389 = vmatprep.subr.bf16.mxu0 0
  %390 = vmatpush1.bf16.msra.mxu0 %v241
  %391 = vmatprep.subr.bf16.mxu0 0
  %392 = vmatpush1.bf16.msra.mxu0 %v244
  %393 = vmatprep.subr.bf16.mxu0 0
  %394 = vmatpush1.bf16.msra.mxu0 %v247
  %395 = vmatprep.subr.bf16.mxu0 0
  %396 = vmatpush1.bf16.msra.mxu0 %v250
  %397 = vmatprep.subr.bf16.mxu0 0
  %398 = vmatpush1.bf16.msra.mxu0 0
  %399 = vmatprep.subr.bf16.mxu0 0
  %400 = vmatpush1.bf16.msra.mxu0 0
  %401 = vmatprep.subr.bf16.mxu0 0
  %402 = vmatpush1.bf16.msra.mxu0 0
  %403 = vmatprep.subr.bf16.mxu0 0
  %404 = vmatpush1.bf16.msra.mxu0 0
  %405 = vmatprep.subr.bf16.mxu0 0
  %406 = vmatpush1.bf16.msra.mxu0 0
  %407 = vmatprep.subr.bf16.mxu0 0
  %408 = vmatpush1.bf16.msra.mxu0 0
  %409 = vmatprep.subr.bf16.mxu0 0
  %410 = vmatpush1.bf16.msra.mxu0 0
  %411 = vmatprep.subr.bf16.mxu0 0
  %412 = vmatpush1.bf16.msra.mxu0 0
  %413 = vmatprep.mubr.bf16.mxu0 0
  %414 = vmatmul.mubr.bf16.gmra.mrb[0].mxu0 %v155
  %v415 = vpop.f32.mrb[0].mxu0
  %v416 = vadd.f32 %v264, %v415
  %v417 = vpop.f32.mrb[0].mxu0
  %v418 = vpop.f32.mrb[0].mxu0
  %v419 = vadd.f32 %v264, %v418
  %v420 = vpop.f32.mrb[0].mxu0
  %421 = vmatprep.mubr.bf16.mxu0 0
  %422 = vmatmul.mubr.bf16.gmra.mrb[0].mxu0 %v156
  %v423 = vpop.f32.mrb[0].mxu0
  %v424 = vadd.f32 %v264, %v423
  %v425 = vpop.f32.mrb[0].mxu0
  %v426 = vpop.f32.mrb[0].mxu0
  %v427 = vadd.f32 %v264, %v426
  %v428 = vpop.f32.mrb[0].mxu0
  %429 = vmatprep.mubr.bf16.mxu0 0
  %430 = vmatmul.mubr.bf16.gmra.mrb[0].mxu0 %v157
  %v431 = vpop.f32.mrb[0].mxu0
  %v432 = vadd.f32 %v264, %v431
  %v433 = vpop.f32.mrb[0].mxu0
  %v434 = vpop.f32.mrb[0].mxu0
  %v435 = vadd.f32 %v264, %v434
  %v436 = vpop.f32.mrb[0].mxu0
  %437 = vmatprep.mubr.bf16.mxu0 0
  %438 = vmatmul.mubr.bf16.gmra.mrb[0].mxu0 %v158
  %v439 = vpop.f32.mrb[0].mxu0
  %v440 = vadd.f32 %v264, %v439
  %v441 = vpop.f32.mrb[0].mxu0
  %v442 = vpop.f32.mrb[0].mxu0
  %v443 = vadd.f32 %v264, %v442
  %v444 = vpop.f32.mrb[0].mxu0
  %445 = vmatprep.mubr.bf16.mxu0 0
  %446 = vmatmul.mubr.bf16.gmra.mrb[0].mxu0 %v159
  %v447 = vpop.f32.mrb[0].mxu0
  %v448 = vadd.f32 %v264, %v447
  %v449 = vpop.f32.mrb[0].mxu0
  %v450 = vpop.f32.mrb[0].mxu0
  %v451 = vadd.f32 %v264, %v450
  %v452 = vpop.f32.mrb[0].mxu0
  %453 = vmatprep.mubr.bf16.mxu0 0
  %454 = vmatmul.mubr.bf16.gmra.mrb[0].mxu0 %v160
  %v455 = vpop.f32.mrb[0].mxu0
  %v456 = vadd.f32 %v264, %v455
  %v457 = vpop.f32.mrb[0].mxu0
  %v458 = vpop.f32.mrb[0].mxu0
  %v459 = vadd.f32 %v264, %v458
  %v460 = vpop.f32.mrb[0].mxu0
  %461 = vmatprep.mubr.bf16.mxu0 0
  %462 = vmatmul.mubr.bf16.gmra.mrb[0].mxu0 %v161
  %v463 = vpop.f32.mrb[0].mxu0
  %v464 = vadd.f32 %v264, %v463
  %v465 = vpop.f32.mrb[0].mxu0
  %v466 = vpop.f32.mrb[0].mxu0
  %v467 = vadd.f32 %v264, %v466
  %v468 = vpop.f32.mrb[0].mxu0
  %469 = vmatprep.mubr.bf16.mxu0 0
  %470 = vmatmul.mubr.bf16.gmra.mrb[0].mxu0 %v162
  %v471 = vpop.f32.mrb[0].mxu0
  %v472 = vadd.f32 %v264, %v471
  %v473 = vpop.f32.mrb[0].mxu0
  %v474 = vpop.f32.mrb[0].mxu0
  %v475 = vadd.f32 %v264, %v474
  %v476 = vpop.f32.mrb[0].mxu0
  %477 = vdwg.mxu0
  %v478 = vpack.c.bf16 %v164, %v163
  %v479 = vpack.c.bf16 %v166, %v165
  %v480 = vpack.c.bf16 %v168, %v167
  %v481 = vpack.c.bf16 %v170, %v169
  %v482 = vpack.c.bf16 %v172, %v171
  %v483 = vpack.c.bf16 %v174, %v173
  %v484 = vpack.c.bf16 %v176, %v175
  %v485 = vpack.c.bf16 %v178, %v177
  %v486 = vld [vmem:[%s4] sm:$0xff]
  %v487 = vld [vmem:[%s4 + $0x8] sm:$0xff]
  %v488 = vld [vmem:[%s4 + $0x10] sm:$0xff]
  %v489 = vld [vmem:[%s4 + $0x18] sm:$0xff]
  %v490 = vld [vmem:[%s4 + $0x20] sm:$0xff]
  %v491 = vld [vmem:[%s4 + $0x28] sm:$0xff]
  %v492 = vld [vmem:[%s4 + $0x30] sm:$0xff]
  %v493 = vld [vmem:[%s4 + $0x38] sm:$0xff]
  %v494 = vld [vmem:[%s4 + $0x40] sm:$0xff]
  %v495 = vld [vmem:[%s4 + $0x48] sm:$0xff]
  %v496 = vld [vmem:[%s4 + $0x50] sm:$0xff]
  %v497 = vld [vmem:[%s4 + $0x58] sm:$0xff]
  %v498 = vld [vmem:[%s4 + $0x60] sm:$0xff]
  %v499 = vld [vmem:[%s4 + $0x68] sm:$0xff]
  %v500 = vld [vmem:[%s4 + $0x70] sm:$0xff]
  %v501 = vld [vmem:[%s4 + $0x78] sm:$0xff]
  %v502 = vld [vmem:[%s4 + $0x80] sm:$0xff]
  %v503 = vld [vmem:[%s4 + $0x88] sm:$0xff]
  %v504 = vld [vmem:[%s4 + $0x90] sm:$0xff]
  %v505 = vld [vmem:[%s4 + $0x98] sm:$0xff]
  %v506 = vld [vmem:[%s4 + $0xa0] sm:$0xff]
  %v507 = vld [vmem:[%s4 + $0xa8] sm:$0xff]
  %v508 = vld [vmem:[%s4 + $0xb0] sm:$0xff]
  %v509 = vld [vmem:[%s4 + $0xb8] sm:$0xff]
  %v510 = vld [vmem:[%s4 + $0xc0] sm:$0xff]
  %v511 = vld [vmem:[%s4 + $0xc8] sm:$0xff]
  %v512 = vld [vmem:[%s4 + $0xd0] sm:$0xff]
  %v513 = vld [vmem:[%s4 + $0xd8] sm:$0xff]
  %v514 = vld [vmem:[%s4 + $0xe0] sm:$0xff]
  %v515 = vld [vmem:[%s4 + $0xe8] sm:$0xff]
  %v516 = vld [vmem:[%s4 + $0xf0] sm:$0xff]
  %v517 = vld [vmem:[%s4 + $0xf8] sm:$0xff]
  %v518 = vld [vmem:[%s4 + $0x100] sm:$0xff]
  %v519 = vld [vmem:[%s4 + $0x108] sm:$0xff]
  %v520 = vld [vmem:[%s4 + $0x110] sm:$0xff]
  %v521 = vld [vmem:[%s4 + $0x118] sm:$0xff]
  %v522 = vld [vmem:[%s4 + $0x120] sm:$0xff]
  %v523 = vld [vmem:[%s4 + $0x128] sm:$0xff]
  %v524 = vld [vmem:[%s4 + $0x130] sm:$0xff]
  %v525 = vld [vmem:[%s4 + $0x138] sm:$0xff]
  %v526 = vld [vmem:[%s4 + $0x140] sm:$0xff]
  %v527 = vld [vmem:[%s4 + $0x148] sm:$0xff]
  %v528 = vld [vmem:[%s4 + $0x150] sm:$0xff]
  %v529 = vld [vmem:[%s4 + $0x158] sm:$0xff]
  %v530 = vld [vmem:[%s4 + $0x160] sm:$0xff]
  %v531 = vld [vmem:[%s4 + $0x168] sm:$0xff]
  %v532 = vld [vmem:[%s4 + $0x170] sm:$0xff]
  %v533 = vld [vmem:[%s4 + $0x178] sm:$0xff]
  %v534 = vpack.c.bf16 %v489, %v486
  %v535 = vpack.c.bf16 %v490, %v487
  %v536 = vpack.c.bf16 %v491, %v488
  %v537 = vpack.c.bf16 %v495, %v492
  %v538 = vpack.c.bf16 %v496, %v493
  %v539 = vpack.c.bf16 %v497, %v494
  %v540 = vpack.c.bf16 %v501, %v498
  %v541 = vpack.c.bf16 %v502, %v499
  %v542 = vpack.c.bf16 %v503, %v500
  %v543 = vpack.c.bf16 %v507, %v504
  %v544 = vpack.c.bf16 %v508, %v505
  %v545 = vpack.c.bf16 %v509, %v506
  %v546 = vpack.c.bf16 %v513, %v510
  %v547 = vpack.c.bf16 %v514, %v511
  %v548 = vpack.c.bf16 %v515, %v512
  %v549 = vpack.c.bf16 %v519, %v516
  %v550 = vpack.c.bf16 %v520, %v517
  %v551 = vpack.c.bf16 %v521, %v518
  %v552 = vpack.c.bf16 %v525, %v522
  %v553 = vpack.c.bf16 %v526, %v523
  %v554 = vpack.c.bf16 %v527, %v524
  %v555 = vpack.c.bf16 %v531, %v528
  %v556 = vpack.c.bf16 %v532, %v529
  %v557 = vpack.c.bf16 %v533, %v530
  %v558 = vld [vmem:[%s6] sm:$0x7]
  %v560 = vlaneseq
  %v561 = vshrl.u32 %v560, 7
  %v562 = vsub.s32 0, %v561
  %v563 = vrot.slane %v558, %v562
  %v564 = vlaneseq
  %v565 = vshrl.u32 %v564, 7
  %v566 = vsub.s32 1, %v565
  %v567 = vrot.slane %v558, %v566
  %v568 = vlaneseq
  %v569 = vshrl.u32 %v568, 7
  %v570 = vsub.s32 2, %v569
  %v571 = vrot.slane %v558, %v570
  %575 = vmatprep.subr.bf16.mxu0 %v535
  %576 = vmatpush1.bf16.msra.mxu0 %v534
  %577 = vmatprep.subr.bf16.mxu0 %v538
  %578 = vmatpush1.bf16.msra.mxu0 %v537
  %579 = vmatprep.subr.bf16.mxu0 %v541
  %580 = vmatpush1.bf16.msra.mxu0 %v540
  %581 = vmatprep.subr.bf16.mxu0 %v544
  %582 = vmatpush1.bf16.msra.mxu0 %v543
  %583 = vmatprep.subr.bf16.mxu0 %v547
  %584 = vmatpush1.bf16.msra.mxu0 %v546
  %585 = vmatprep.subr.bf16.mxu0 %v550
  %586 = vmatpush1.bf16.msra.mxu0 %v549
  %587 = vmatprep.subr.bf16.mxu0 %v553
  %588 = vmatpush1.bf16.msra.mxu0 %v552
  %589 = vmatprep.subr.bf16.mxu0 %v556
  %590 = vmatpush1.bf16.msra.mxu0 %v555
  %591 = vmatprep.subr.bf16.mxu0 0
  %592 = vmatpush1.bf16.msra.mxu0 0
  %593 = vmatprep.subr.bf16.mxu0 0
  %594 = vmatpush1.bf16.msra.mxu0 0
  %595 = vmatprep.subr.bf16.mxu0 0
  %596 = vmatpush1.bf16.msra.mxu0 0
  %597 = vmatprep.subr.bf16.mxu0 0
  %598 = vmatpush1.bf16.msra.mxu0 0
  %599 = vmatprep.subr.bf16.mxu0 0
  %600 = vmatpush1.bf16.msra.mxu0 0
  %601 = vmatprep.subr.bf16.mxu0 0
  %602 = vmatpush1.bf16.msra.mxu0 0
  %603 = vmatprep.subr.bf16.mxu0 0
  %604 = vmatpush1.bf16.msra.mxu0 0
  %605 = vmatprep.subr.bf16.mxu0 0
  %606 = vmatpush1.bf16.msra.mxu0 0
  %607 = vmatprep.mubr.bf16.mxu0 0
  %608 = vmatmul.mubr.bf16.gmra.mrb[0].mxu0 %v478
  %v609 = vpop.f32.mrb[0].mxu0
  %v610 = vadd.f32 %v563, %v609
  %v611 = vpop.f32.mrb[0].mxu0
  %v612 = vadd.f32 %v567, %v611
  %v613 = vpop.f32.mrb[0].mxu0
  %v614 = vadd.f32 %v563, %v613
  %v615 = vpop.f32.mrb[0].mxu0
  %v616 = vadd.f32 %v567, %v615
  %617 = vmatprep.mubr.bf16.mxu0 0
  %618 = vmatmul.mubr.bf16.gmra.mrb[0].mxu0 %v479
  %v619 = vpop.f32.mrb[0].mxu0
  %v620 = vadd.f32 %v563, %v619
  %v621 = vpop.f32.mrb[0].mxu0
  %v622 = vadd.f32 %v567, %v621
  %v623 = vpop.f32.mrb[0].mxu0
  %v624 = vadd.f32 %v563, %v623
  %v625 = vpop.f32.mrb[0].mxu0
  %v626 = vadd.f32 %v567, %v625
  %627 = vmatprep.mubr.bf16.mxu0 0
  %628 = vmatmul.mubr.bf16.gmra.mrb[0].mxu0 %v480
  %v629 = vpop.f32.mrb[0].mxu0
  %v630 = vadd.f32 %v563, %v629
  %v631 = vpop.f32.mrb[0].mxu0
  %v632 = vadd.f32 %v567, %v631
  %v633 = vpop.f32.mrb[0].mxu0
  %v634 = vadd.f32 %v563, %v633
  %v635 = vpop.f32.mrb[0].mxu0
  %v636 = vadd.f32 %v567, %v635
  %637 = vmatprep.mubr.bf16.mxu0 0
  %638 = vmatmul.mubr.bf16.gmra.mrb[0].mxu0 %v481
  %v639 = vpop.f32.mrb[0].mxu0
  %v640 = vadd.f32 %v563, %v639
  %v641 = vpop.f32.mrb[0].mxu0
  %v642 = vadd.f32 %v567, %v641
  %v643 = vpop.f32.mrb[0].mxu0
  %v644 = vadd.f32 %v563, %v643
  %v645 = vpop.f32.mrb[0].mxu0
  %v646 = vadd.f32 %v567, %v645
  %647 = vmatprep.mubr.bf16.mxu0 0
  %648 = vmatmul.mubr.bf16.gmra.mrb[0].mxu0 %v482
  %v649 = vpop.f32.mrb[0].mxu0
  %v650 = vadd.f32 %v563, %v649
  %v651 = vpop.f32.mrb[0].mxu0
  %v652 = vadd.f32 %v567, %v651
  %v653 = vpop.f32.mrb[0].mxu0
  %v654 = vadd.f32 %v563, %v653
  %v655 = vpop.f32.mrb[0].mxu0
  %v656 = vadd.f32 %v567, %v655
  %657 = vmatprep.mubr.bf16.mxu0 0
  %658 = vmatmul.mubr.bf16.gmra.mrb[0].mxu0 %v483
  %v659 = vpop.f32.mrb[0].mxu0
  %v660 = vadd.f32 %v563, %v659
  %v661 = vpop.f32.mrb[0].mxu0
  %v662 = vadd.f32 %v567, %v661
  %v663 = vpop.f32.mrb[0].mxu0
  %v664 = vadd.f32 %v563, %v663
  %v665 = vpop.f32.mrb[0].mxu0
  %v666 = vadd.f32 %v567, %v665
  %667 = vmatprep.mubr.bf16.mxu0 0
  %668 = vmatmul.mubr.bf16.gmra.mrb[0].mxu0 %v484
  %v669 = vpop.f32.mrb[0].mxu0
  %v670 = vadd.f32 %v563, %v669
  %v671 = vpop.f32.mrb[0].mxu0
  %v672 = vadd.f32 %v567, %v671
  %v673 = vpop.f32.mrb[0].mxu0
  %v674 = vadd.f32 %v563, %v673
  %v675 = vpop.f32.mrb[0].mxu0
  %v676 = vadd.f32 %v567, %v675
  %677 = vmatprep.mubr.bf16.mxu0 0
  %678 = vmatmul.mubr.bf16.gmra.mrb[0].mxu0 %v485
  %v679 = vpop.f32.mrb[0].mxu0
  %v680 = vadd.f32 %v563, %v679
  %v681 = vpop.f32.mrb[0].mxu0
  %v682 = vadd.f32 %v567, %v681
  %v683 = vpop.f32.mrb[0].mxu0
  %v684 = vadd.f32 %v563, %v683
  %v685 = vpop.f32.mrb[0].mxu0
  %v686 = vadd.f32 %v567, %v685
  %687 = vdwg.mxu0
  %688 = vmatprep.subr.bf16.mxu0 0
  %689 = vmatpush1.bf16.msra.mxu0 %v536
  %690 = vmatprep.subr.bf16.mxu0 0
  %691 = vmatpush1.bf16.msra.mxu0 %v539
  %692 = vmatprep.subr.bf16.mxu0 0
  %693 = vmatpush1.bf16.msra.mxu0 %v542
  %694 = vmatprep.subr.bf16.mxu0 0
  %695 = vmatpush1.bf16.msra.mxu0 %v545
  %696 = vmatprep.subr.bf16.mxu0 0
  %697 = vmatpush1.bf16.msra.mxu0 %v548
  %698 = vmatprep.subr.bf16.mxu0 0
  %699 = vmatpush1.bf16.msra.mxu0 %v551
  %700 = vmatprep.subr.bf16.mxu0 0
  %701 = vmatpush1.bf16.msra.mxu0 %v554
  %702 = vmatprep.subr.bf16.mxu0 0
  %703 = vmatpush1.bf16.msra.mxu0 %v557
  %704 = vmatprep.subr.bf16.mxu0 0
  %705 = vmatpush1.bf16.msra.mxu0 0
  %706 = vmatprep.subr.bf16.mxu0 0
  %707 = vmatpush1.bf16.msra.mxu0 0
  %708 = vmatprep.subr.bf16.mxu0 0
  %709 = vmatpush1.bf16.msra.mxu0 0
  %710 = vmatprep.subr.bf16.mxu0 0
  %711 = vmatpush1.bf16.msra.mxu0 0
  %712 = vmatprep.subr.bf16.mxu0 0
  %713 = vmatpush1.bf16.msra.mxu0 0
  %714 = vmatprep.subr.bf16.mxu0 0
  %715 = vmatpush1.bf16.msra.mxu0 0
  %716 = vmatprep.subr.bf16.mxu0 0
  %717 = vmatpush1.bf16.msra.mxu0 0
  %718 = vmatprep.subr.bf16.mxu0 0
  %719 = vmatpush1.bf16.msra.mxu0 0
  %720 = vmatprep.mubr.bf16.mxu0 0
  %721 = vmatmul.mubr.bf16.gmra.mrb[0].mxu0 %v478
  %v722 = vpop.f32.mrb[0].mxu0
  %v723 = vadd.f32 %v571, %v722
  %v724 = vpop.f32.mrb[0].mxu0
  %v725 = vpop.f32.mrb[0].mxu0
  %v726 = vadd.f32 %v571, %v725
  %v727 = vpop.f32.mrb[0].mxu0
  %728 = vmatprep.mubr.bf16.mxu0 0
  %729 = vmatmul.mubr.bf16.gmra.mrb[0].mxu0 %v479
  %v730 = vpop.f32.mrb[0].mxu0
  %v731 = vadd.f32 %v571, %v730
  %v732 = vpop.f32.mrb[0].mxu0
  %v733 = vpop.f32.mrb[0].mxu0
  %v734 = vadd.f32 %v571, %v733
  %v735 = vpop.f32.mrb[0].mxu0
  %736 = vmatprep.mubr.bf16.mxu0 0
  %737 = vmatmul.mubr.bf16.gmra.mrb[0].mxu0 %v480
  %v738 = vpop.f32.mrb[0].mxu0
  %v739 = vadd.f32 %v571, %v738
  %v740 = vpop.f32.mrb[0].mxu0
  %v741 = vpop.f32.mrb[0].mxu0
  %v742 = vadd.f32 %v571, %v741
  %v743 = vpop.f32.mrb[0].mxu0
  %744 = vmatprep.mubr.bf16.mxu0 0
  %745 = vmatmul.mubr.bf16.gmra.mrb[0].mxu0 %v481
  %v746 = vpop.f32.mrb[0].mxu0
  %v747 = vadd.f32 %v571, %v746
  %v748 = vpop.f32.mrb[0].mxu0
  %v749 = vpop.f32.mrb[0].mxu0
  %v750 = vadd.f32 %v571, %v749
  %v751 = vpop.f32.mrb[0].mxu0
  %752 = vmatprep.mubr.bf16.mxu0 0
  %753 = vmatmul.mubr.bf16.gmra.mrb[0].mxu0 %v482
  %v754 = vpop.f32.mrb[0].mxu0
  %v755 = vadd.f32 %v571, %v754
  %v756 = vpop.f32.mrb[0].mxu0
  %v757 = vpop.f32.mrb[0].mxu0
  %v758 = vadd.f32 %v571, %v757
  %v759 = vpop.f32.mrb[0].mxu0
  %760 = vmatprep.mubr.bf16.mxu0 0
  %761 = vmatmul.mubr.bf16.gmra.mrb[0].mxu0 %v483
  %v762 = vpop.f32.mrb[0].mxu0
  %v763 = vadd.f32 %v571, %v762
  %v764 = vpop.f32.mrb[0].mxu0
  %v765 = vpop.f32.mrb[0].mxu0
  %v766 = vadd.f32 %v571, %v765
  %v767 = vpop.f32.mrb[0].mxu0
  %768 = vmatprep.mubr.bf16.mxu0 0
  %769 = vmatmul.mubr.bf16.gmra.mrb[0].mxu0 %v484
  %v770 = vpop.f32.mrb[0].mxu0
  %v771 = vadd.f32 %v571, %v770
  %v772 = vpop.f32.mrb[0].mxu0
  %v773 = vpop.f32.mrb[0].mxu0
  %v774 = vadd.f32 %v571, %v773
  %v775 = vpop.f32.mrb[0].mxu0
  %776 = vmatprep.mubr.bf16.mxu0 0
  %777 = vmatmul.mubr.bf16.gmra.mrb[0].mxu0 %v485
  %v778 = vpop.f32.mrb[0].mxu0
  %v779 = vadd.f32 %v571, %v778
  %v780 = vpop.f32.mrb[0].mxu0
  %v781 = vpop.f32.mrb[0].mxu0
  %v782 = vadd.f32 %v571, %v781
  %v783 = vpop.f32.mrb[0].mxu0
  %784 = vdwg.mxu0
  %v785 = vadd.f32 %v303, %v610
  %v786 = vadd.f32 %v307, %v614
  %v787 = vadd.f32 %v313, %v620
  %v788 = vadd.f32 %v317, %v624
  %v789 = vadd.f32 %v323, %v630
  %v790 = vadd.f32 %v327, %v634
  %v791 = vadd.f32 %v333, %v640
  %v792 = vadd.f32 %v337, %v644
  %v793 = vadd.f32 %v343, %v650
  %v794 = vadd.f32 %v347, %v654
  %v795 = vadd.f32 %v353, %v660
  %v796 = vadd.f32 %v357, %v664
  %v797 = vadd.f32 %v363, %v670
  %v798 = vadd.f32 %v367, %v674
  %v799 = vadd.f32 %v373, %v680
  %v800 = vadd.f32 %v377, %v684
  %v801 = vxor.u32 %v785, 2147483648
  %v802 = vxor.u32 %v786, 2147483648
  %v803 = vxor.u32 %v787, 2147483648
  %v804 = vxor.u32 %v788, 2147483648
  %v805 = vxor.u32 %v789, 2147483648
  %v806 = vxor.u32 %v790, 2147483648
  %v807 = vxor.u32 %v791, 2147483648
  %v808 = vxor.u32 %v792, 2147483648
  %v809 = vxor.u32 %v793, 2147483648
  %v810 = vxor.u32 %v794, 2147483648
  %v811 = vxor.u32 %v795, 2147483648
  %v812 = vxor.u32 %v796, 2147483648
  %v813 = vxor.u32 %v797, 2147483648
  %v814 = vxor.u32 %v798, 2147483648
  %v815 = vxor.u32 %v799, 2147483648
  %v816 = vxor.u32 %v800, 2147483648
  %v817 = vmul.f32 %v801, 1.442695
  %v818 = vpow.pop %v817
  %v819 = vmul.f32 %v802, 1.442695
  %v820 = vpow.pop %v819
  %v821 = vmul.f32 %v803, 1.442695
  %v822 = vpow.pop %v821
  %v823 = vmul.f32 %v804, 1.442695
  %v824 = vpow.pop %v823
  %v825 = vmul.f32 %v805, 1.442695
  %v826 = vpow.pop %v825
  %v827 = vmul.f32 %v806, 1.442695
  %v828 = vpow.pop %v827
  %v829 = vmul.f32 %v807, 1.442695
  %v830 = vpow.pop %v829
  %v831 = vmul.f32 %v808, 1.442695
  %v832 = vpow.pop %v831
  %v833 = vmul.f32 %v809, 1.442695
  %v834 = vpow.pop %v833
  %v835 = vmul.f32 %v810, 1.442695
  %v836 = vpow.pop %v835
  %v837 = vmul.f32 %v811, 1.442695
  %v838 = vpow.pop %v837
  %v839 = vmul.f32 %v812, 1.442695
  %v840 = vpow.pop %v839
  %v841 = vmul.f32 %v813, 1.442695
  %v842 = vpow.pop %v841
  %v843 = vmul.f32 %v814, 1.442695
  %v844 = vpow.pop %v843
  %v845 = vmul.f32 %v815, 1.442695
  %v846 = vpow.pop %v845
  %v847 = vmul.f32 %v816, 1.442695
  %v848 = vpow.pop %v847
  %v849 = vadd.f32 %v818, 1.0
  %v850 = vadd.f32 %v820, 1.0
  %v851 = vadd.f32 %v822, 1.0
  %v852 = vadd.f32 %v824, 1.0
  %v853 = vadd.f32 %v826, 1.0
  %v854 = vadd.f32 %v828, 1.0
  %v855 = vadd.f32 %v830, 1.0
  %v856 = vadd.f32 %v832, 1.0
  %v857 = vadd.f32 %v834, 1.0
  %v858 = vadd.f32 %v836, 1.0
  %v859 = vadd.f32 %v838, 1.0
  %v860 = vadd.f32 %v840, 1.0
  %v861 = vadd.f32 %v842, 1.0
  %v862 = vadd.f32 %v844, 1.0
  %v863 = vadd.f32 %v846, 1.0
  %v864 = vadd.f32 %v848, 1.0
  %v865 = vrcp.pop %v849
  %v866 = vmul.f32 1.0, %v865
  %v867 = vrcp.pop %v850
  %v868 = vmul.f32 1.0, %v867
  %v869 = vrcp.pop %v851
  %v870 = vmul.f32 1.0, %v869
  %v871 = vrcp.pop %v852
  %v872 = vmul.f32 1.0, %v871
  %v873 = vrcp.pop %v853
  %v874 = vmul.f32 1.0, %v873
  %v875 = vrcp.pop %v854
  %v876 = vmul.f32 1.0, %v875
  %v877 = vrcp.pop %v855
  %v878 = vmul.f32 1.0, %v877
  %v879 = vrcp.pop %v856
  %v880 = vmul.f32 1.0, %v879
  %v881 = vrcp.pop %v857
  %v882 = vmul.f32 1.0, %v881
  %v883 = vrcp.pop %v858
  %v884 = vmul.f32 1.0, %v883
  %v885 = vrcp.pop %v859
  %v886 = vmul.f32 1.0, %v885
  %v887 = vrcp.pop %v860
  %v888 = vmul.f32 1.0, %v887
  %v889 = vrcp.pop %v861
  %v890 = vmul.f32 1.0, %v889
  %v891 = vrcp.pop %v862
  %v892 = vmul.f32 1.0, %v891
  %v893 = vrcp.pop %v863
  %v894 = vmul.f32 1.0, %v893
  %v895 = vrcp.pop %v864
  %v896 = vmul.f32 1.0, %v895
  %v897 = vadd.f32 %v305, %v612
  %v898 = vadd.f32 %v309, %v616
  %v899 = vadd.f32 %v315, %v622
  %v900 = vadd.f32 %v319, %v626
  %v901 = vadd.f32 %v325, %v632
  %v902 = vadd.f32 %v329, %v636
  %v903 = vadd.f32 %v335, %v642
  %v904 = vadd.f32 %v339, %v646
  %v905 = vadd.f32 %v345, %v652
  %v906 = vadd.f32 %v349, %v656
  %v907 = vadd.f32 %v355, %v662
  %v908 = vadd.f32 %v359, %v666
  %v909 = vadd.f32 %v365, %v672
  %v910 = vadd.f32 %v369, %v676
  %v911 = vadd.f32 %v375, %v682
  %v912 = vadd.f32 %v379, %v686
  %v913 = vxor.u32 %v897, 2147483648
  %v914 = vxor.u32 %v898, 2147483648
  %v915 = vxor.u32 %v899, 2147483648
  %v916 = vxor.u32 %v900, 2147483648
  %v917 = vxor.u32 %v901, 2147483648
  %v918 = vxor.u32 %v902, 2147483648
  %v919 = vxor.u32 %v903, 2147483648
  %v920 = vxor.u32 %v904, 2147483648
  %v921 = vxor.u32 %v905, 2147483648
  %v922 = vxor.u32 %v906, 2147483648
  %v923 = vxor.u32 %v907, 2147483648
  %v924 = vxor.u32 %v908, 2147483648
  %v925 = vxor.u32 %v909, 2147483648
  %v926 = vxor.u32 %v910, 2147483648
  %v927 = vxor.u32 %v911, 2147483648
  %v928 = vxor.u32 %v912, 2147483648
  %v929 = vmul.f32 %v913, 1.442695
  %v930 = vpow.pop %v929
  %v931 = vmul.f32 %v914, 1.442695
  %v932 = vpow.pop %v931
  %v933 = vmul.f32 %v915, 1.442695
  %v934 = vpow.pop %v933
  %v935 = vmul.f32 %v916, 1.442695
  %v936 = vpow.pop %v935
  %v937 = vmul.f32 %v917, 1.442695
  %v938 = vpow.pop %v937
  %v939 = vmul.f32 %v918, 1.442695
  %v940 = vpow.pop %v939
  %v941 = vmul.f32 %v919, 1.442695
  %v942 = vpow.pop %v941
  %v943 = vmul.f32 %v920, 1.442695
  %v944 = vpow.pop %v943
  %v945 = vmul.f32 %v921, 1.442695
  %v946 = vpow.pop %v945
  %v947 = vmul.f32 %v922, 1.442695
  %v948 = vpow.pop %v947
  %v949 = vmul.f32 %v923, 1.442695
  %v950 = vpow.pop %v949
  %v951 = vmul.f32 %v924, 1.442695
  %v952 = vpow.pop %v951
  %v953 = vmul.f32 %v925, 1.442695
  %v954 = vpow.pop %v953
  %v955 = vmul.f32 %v926, 1.442695
  %v956 = vpow.pop %v955
  %v957 = vmul.f32 %v927, 1.442695
  %v958 = vpow.pop %v957
  %v959 = vmul.f32 %v928, 1.442695
  %v960 = vpow.pop %v959
  %v961 = vadd.f32 %v930, 1.0
  %v962 = vadd.f32 %v932, 1.0
  %v963 = vadd.f32 %v934, 1.0
  %v964 = vadd.f32 %v936, 1.0
  %v965 = vadd.f32 %v938, 1.0
  %v966 = vadd.f32 %v940, 1.0
  %v967 = vadd.f32 %v942, 1.0
  %v968 = vadd.f32 %v944, 1.0
  %v969 = vadd.f32 %v946, 1.0
  %v970 = vadd.f32 %v948, 1.0
  %v971 = vadd.f32 %v950, 1.0
  %v972 = vadd.f32 %v952, 1.0
  %v973 = vadd.f32 %v954, 1.0
  %v974 = vadd.f32 %v956, 1.0
  %v975 = vadd.f32 %v958, 1.0
  %v976 = vadd.f32 %v960, 1.0
  %v977 = vrcp.pop %v961
  %v978 = vmul.f32 1.0, %v977
  %v979 = vrcp.pop %v962
  %v980 = vmul.f32 1.0, %v979
  %v981 = vrcp.pop %v963
  %v982 = vmul.f32 1.0, %v981
  %v983 = vrcp.pop %v964
  %v984 = vmul.f32 1.0, %v983
  %v985 = vrcp.pop %v965
  %v986 = vmul.f32 1.0, %v985
  %v987 = vrcp.pop %v966
  %v988 = vmul.f32 1.0, %v987
  %v989 = vrcp.pop %v967
  %v990 = vmul.f32 1.0, %v989
  %v991 = vrcp.pop %v968
  %v992 = vmul.f32 1.0, %v991
  %v993 = vrcp.pop %v969
  %v994 = vmul.f32 1.0, %v993
  %v995 = vrcp.pop %v970
  %v996 = vmul.f32 1.0, %v995
  %v997 = vrcp.pop %v971
  %v998 = vmul.f32 1.0, %v997
  %v999 = vrcp.pop %v972
  %v1000 = vmul.f32 1.0, %v999
  %v1001 = vrcp.pop %v973
  %v1002 = vmul.f32 1.0, %v1001
  %v1003 = vrcp.pop %v974
  %v1004 = vmul.f32 1.0, %v1003
  %v1005 = vrcp.pop %v975
  %v1006 = vmul.f32 1.0, %v1005
  %v1007 = vrcp.pop %v976
  %v1008 = vmul.f32 1.0, %v1007
  %v1009 = vmul.f32 %v866, %v723
  %v1010 = vmul.f32 %v868, %v726
  %v1011 = vmul.f32 %v870, %v731
  %v1012 = vmul.f32 %v872, %v734
  %v1013 = vmul.f32 %v874, %v739
  %v1014 = vmul.f32 %v876, %v742
  %v1015 = vmul.f32 %v878, %v747
  %v1016 = vmul.f32 %v880, %v750
  %v1017 = vmul.f32 %v882, %v755
  %v1018 = vmul.f32 %v884, %v758
  %v1019 = vmul.f32 %v886, %v763
  %v1020 = vmul.f32 %v888, %v766
  %v1021 = vmul.f32 %v890, %v771
  %v1022 = vmul.f32 %v892, %v774
  %v1023 = vmul.f32 %v894, %v779
  %v1024 = vmul.f32 %v896, %v782
  %v1025 = vadd.f32 %v416, %v1009
  %v1026 = vadd.f32 %v419, %v1010
  %v1027 = vadd.f32 %v424, %v1011
  %v1028 = vadd.f32 %v427, %v1012
  %v1029 = vadd.f32 %v432, %v1013
  %v1030 = vadd.f32 %v435, %v1014
  %v1031 = vadd.f32 %v440, %v1015
  %v1032 = vadd.f32 %v443, %v1016
  %v1033 = vadd.f32 %v448, %v1017
  %v1034 = vadd.f32 %v451, %v1018
  %v1035 = vadd.f32 %v456, %v1019
  %v1036 = vadd.f32 %v459, %v1020
  %v1037 = vadd.f32 %v464, %v1021
  %v1038 = vadd.f32 %v467, %v1022
  %v1039 = vadd.f32 %v472, %v1023
  %v1040 = vadd.f32 %v475, %v1024
  %v1041 = vtanh.pop %v1025
  %v1042 = vtanh.pop %v1026
  %v1043 = vtanh.pop %v1027
  %v1044 = vtanh.pop %v1028
  %v1045 = vtanh.pop %v1029
  %v1046 = vtanh.pop %v1030
  %v1047 = vtanh.pop %v1031
  %v1048 = vtanh.pop %v1032
  %v1049 = vtanh.pop %v1033
  %v1050 = vtanh.pop %v1034
  %v1051 = vtanh.pop %v1035
  %v1052 = vtanh.pop %v1036
  %v1053 = vtanh.pop %v1037
  %v1054 = vtanh.pop %v1038
  %v1055 = vtanh.pop %v1039
  %v1056 = vtanh.pop %v1040
  %v1057 = vsub.f32 1.0, %v978
  %v1058 = vsub.f32 1.0, %v980
  %v1059 = vsub.f32 1.0, %v982
  %v1060 = vsub.f32 1.0, %v984
  %v1061 = vsub.f32 1.0, %v986
  %v1062 = vsub.f32 1.0, %v988
  %v1063 = vsub.f32 1.0, %v990
  %v1064 = vsub.f32 1.0, %v992
  %v1065 = vsub.f32 1.0, %v994
  %v1066 = vsub.f32 1.0, %v996
  %v1067 = vsub.f32 1.0, %v998
  %v1068 = vsub.f32 1.0, %v1000
  %v1069 = vsub.f32 1.0, %v1002
  %v1070 = vsub.f32 1.0, %v1004
  %v1071 = vsub.f32 1.0, %v1006
  %v1072 = vsub.f32 1.0, %v1008
  %v1073 = vmul.f32 %v1057, %v1041
  %v1074 = vmul.f32 %v1058, %v1042
  %v1075 = vmul.f32 %v1059, %v1043
  %v1076 = vmul.f32 %v1060, %v1044
  %v1077 = vmul.f32 %v1061, %v1045
  %v1078 = vmul.f32 %v1062, %v1046
  %v1079 = vmul.f32 %v1063, %v1047
  %v1080 = vmul.f32 %v1064, %v1048
  %v1081 = vmul.f32 %v1065, %v1049
  %v1082 = vmul.f32 %v1066, %v1050
  %v1083 = vmul.f32 %v1067, %v1051
  %v1084 = vmul.f32 %v1068, %v1052
  %v1085 = vmul.f32 %v1069, %v1053
  %v1086 = vmul.f32 %v1070, %v1054
  %v1087 = vmul.f32 %v1071, %v1055
  %v1088 = vmul.f32 %v1072, %v1056
  %v1089 = vmul.f32 %v978, %v163
  %v1090 = vmul.f32 %v980, %v164
  %v1091 = vmul.f32 %v982, %v165
  %v1092 = vmul.f32 %v984, %v166
  %v1093 = vmul.f32 %v986, %v167
  %v1094 = vmul.f32 %v988, %v168
  %v1095 = vmul.f32 %v990, %v169
  %v1096 = vmul.f32 %v992, %v170
  %v1097 = vmul.f32 %v994, %v171
  %v1098 = vmul.f32 %v996, %v172
  %v1099 = vmul.f32 %v998, %v173
  %v1100 = vmul.f32 %v1000, %v174
  %v1101 = vmul.f32 %v1002, %v175
  %v1102 = vmul.f32 %v1004, %v176
  %v1103 = vmul.f32 %v1006, %v177
  %v1104 = vmul.f32 %v1008, %v178
  %v1105 = vadd.f32 %v1073, %v1089
  %v1106 = vadd.f32 %v1074, %v1090
  %v1107 = vadd.f32 %v1075, %v1091
  %v1108 = vadd.f32 %v1076, %v1092
  %v1109 = vadd.f32 %v1077, %v1093
  %v1110 = vadd.f32 %v1078, %v1094
  %v1111 = vadd.f32 %v1079, %v1095
  %v1112 = vadd.f32 %v1080, %v1096
  %v1113 = vadd.f32 %v1081, %v1097
  %v1114 = vadd.f32 %v1082, %v1098
  %v1115 = vadd.f32 %v1083, %v1099
  %v1116 = vadd.f32 %v1084, %v1100
  %v1117 = vadd.f32 %v1085, %v1101
  %v1118 = vadd.f32 %v1086, %v1102
  %v1119 = vadd.f32 %v1087, %v1103
  %v1120 = vadd.f32 %v1088, %v1104
  %1121 = vst [vmem:[%s7] sm:$0xff] %v1105
  %1122 = vst [vmem:[%s7 + $0x8] sm:$0xff] %v1106
  %1123 = vst [vmem:[%s7 + $0x10] sm:$0xff] %v1107
  %1124 = vst [vmem:[%s7 + $0x18] sm:$0xff] %v1108
  %1125 = vst [vmem:[%s7 + $0x20] sm:$0xff] %v1109
  %1126 = vst [vmem:[%s7 + $0x28] sm:$0xff] %v1110
  %1127 = vst [vmem:[%s7 + $0x30] sm:$0xff] %v1111
  %1128 = vst [vmem:[%s7 + $0x38] sm:$0xff] %v1112
  %1129 = vst [vmem:[%s7 + $0x40] sm:$0xff] %v1113
  %1130 = vst [vmem:[%s7 + $0x48] sm:$0xff] %v1114
  %1131 = vst [vmem:[%s7 + $0x50] sm:$0xff] %v1115
  %1132 = vst [vmem:[%s7 + $0x58] sm:$0xff] %v1116
  %1133 = vst [vmem:[%s7 + $0x60] sm:$0xff] %v1117
  %1134 = vst [vmem:[%s7 + $0x68] sm:$0xff] %v1118
  %1135 = vst [vmem:[%s7 + $0x70] sm:$0xff] %v1119
  %1136 = vst [vmem:[%s7 + $0x78] sm:$0xff] %v1120
  // Predicated region
  $region30: #{icews_evolvegcn_forward.6} parent=0 // pred_check
    _
  $region31: #{icews_evolvegcn_forward.6} parent=0 // pred_check_branch
    %1138 = sbr.rel (0) target = $region33
  $region32: #{icews_evolvegcn_forward.6} parent=0 // pred_region
    _
  $region33: #{icews_evolvegcn_forward.6} parent=0 // pred_fallthru
    _
  // Predicated region
  $region34: #{icews_evolvegcn_forward.6} parent=0 // pred_check
    _
  $region35: #{icews_evolvegcn_forward.6} parent=0 // pred_check_branch
    %1140 = sbr.rel (0) target = $region37
  $region36: #{icews_evolvegcn_forward.6} parent=0 // pred_region
    _
  $region37: #{icews_evolvegcn_forward.6} parent=0 // pred_fallthru
    _

// kernel: mul.1
$region0: #{mul.1}
  #allocation0 [shape = 's32[1]{0}', space=sflag, size = 0x4, scoped, tag = 'scoped memory for mul.1']
  %s0 = inlined_call_operand.vmem [shape: f32[2560], index: 0, kind: input, shape index: {}]
  %s1 = inlined_call_operand.vmem [shape: f32[2560], index: 1, kind: input, shape index: {}]
  %s2 = inlined_call_operand.vmem [shape: f32[2560], index: 2, kind: output, shape index: {}]
  %v3 = vld [vmem:[%s0] sm:$0xff]
  %v4 = vld [vmem:[%s1] sm:$0xff]
  %5 = xla_tuple %v3, %v4
  %6 = xla_tuple %5
  %v7 = vmul.f32 %v3, %v4
  %8 = xla_tuple %v7
  %9 = vst [vmem:[%s2] sm:$0xff] %v7
  %s10 = scalar_lea.vmem %s0, 8
  %v11 = vld [vmem:[%s10] sm:$0xff]
  %s12 = scalar_lea.vmem %s1, 8
  %v13 = vld [vmem:[%s12] sm:$0xff]
  %14 = xla_tuple %v11, %v13
  %15 = xla_tuple %14
  %v16 = vmul.f32 %v11, %v13
  %17 = xla_tuple %v16
  %s18 = scalar_lea.vmem %s2, 8
  %19 = vst [vmem:[%s18] sm:$0xff] %v16
  %s20 = scalar_lea.vmem %s0, 16
  %v21 = vld [vmem:[%s20] sm:$0xff]
  %s22 = scalar_lea.vmem %s1, 16
  %v23 = vld [vmem:[%s22] sm:$0xff]
  %24 = xla_tuple %v21, %v23
  %25 = xla_tuple %24
  %v26 = vmul.f32 %v21, %v23
  %27 = xla_tuple %v26
  %s28 = scalar_lea.vmem %s2, 16
  %29 = vst [vmem:[%s28] sm:$0xff] %v26

// kernel: icews_evolvegcn_forward.7
$region0: #{icews_evolvegcn_forward.7}
  #allocation0 [shape = 'u32[]', space=smem, size = 0x4, offset = 0x4, fixed_abs, tag = 'smem constant byte address 0x4 - core index']
  #allocation1 [shape = 'u32[144,128]{1,0:T(1,128)}', space=vmem, size = 0x12000, scoped, tag = 'internal scratch']
  %s0 = inlined_call_operand.vmem [shape: bf16[512,128], index: 0, kind: input, shape index: {}]
  %s1 = inlined_call_operand.vmem [shape: bf16[128,128], index: 1, kind: input, shape index: {}]
  %s2 = inlined_call_operand.vmem [shape: bf16[512,128], index: 2, kind: output, shape index: {}]
  %s3 = sld [smem:[#allocation0]]
  $region41: #{icews_evolvegcn_forward.7} parent=0
    _
  %s5 = ssub.s32 1, %s3
  %s6 = scalar_select 0, %s5, %s3
  loop: start=0, step=1, limit=4
  $region2: #{icews_evolvegcn_forward.7} parent=0 // loop_pre_header
    _
  $region3: #{icews_evolvegcn_forward.7} parent=0 // loop_header
    %s8 = sphi 0, %s12
    %p9 = scmp.ge.s32.totalorder %s8, 4
    %s18 = sphi 0, %s20
    %s21 = sphi 0, %s18
    %s22 = sphi 0, %s21
    %s38 = sphi 0, %s22
    %s42 = sphi 0, %s42
    %s44 = sphi 0, %s42
    %s45 = sphi 0, %s44
    %s59 = sphi 0, %s45
    %s65 = sphi 0, %s67
    %s68 = sphi 0, %s65
    %s69 = sphi 0, %s68
    %s85 = sphi 0, %s69
  $region4: #{icews_evolvegcn_forward.7} parent=0 // loop_header_branch
    %11 = sbr.rel (%p9) target = $region8
  $region5: #{icews_evolvegcn_forward.7} parent=0 // loop_body
    %s13 = ssub.s32 %s8, 1
    %s14 = ssub.s32 %s8, 2
    %s15 = sadd.s32 %s8, 1
    %s16 = ssub.s32 %s8, %s15
    %p17 = scmp.eq.s32.totalorder %s16, 0
    %s19 = sadd.s32 %s18, 1
    %s20 = scalar_select %p17, %s18, %s19
    %p23 = pneg %p17
    %p24 = scmp.eq.s32.totalorder %s8, 1
    %p25 = por %p23, %p24
    %p26 = scmp.ne.s32.totalorder %s18, %s21
    %p27 = scmp.eq.s32.totalorder %s8, 0
    %p28 = por %p26, %p27
    %p29 = scmp.ne.s32.totalorder %s18, %s21
    %p30 = scmp.eq.s32.totalorder %s13, 1
    %p31 = por %p29, %p30
    %p32 = scmp.ne.s32.totalorder %s21, %s22
    %p33 = scmp.eq.s32.totalorder %s13, 0
    %p34 = por %p32, %p33
    %p35 = scmp.ne.s32.totalorder %s21, %s22
    %p36 = scmp.eq.s32.totalorder %s14, 1
    %p37 = por %p35, %p36
    %p39 = scmp.ne.s32.totalorder %s22, %s38
    %p40 = scmp.eq.s32.totalorder %s14, 0
    %p41 = por %p39, %p40
    %s43 = sadd.s32 %s42, 1
    %p46 = scmp.eq.s32.totalorder %s8, 1
    %p47 = scmp.ne.s32.totalorder %s42, %s44
    %p48 = scmp.eq.s32.totalorder %s8, 0
    %p49 = por %p47, %p48
    %p50 = scmp.ne.s32.totalorder %s42, %s44
    %p51 = scmp.eq.s32.totalorder %s13, 1
    %p52 = por %p50, %p51
    %p53 = scmp.ne.s32.totalorder %s44, %s45
    %p54 = scmp.eq.s32.totalorder %s13, 0
    %p55 = por %p53, %p54
    %p56 = scmp.ne.s32.totalorder %s44, %s45
    %p57 = scmp.eq.s32.totalorder %s14, 1
    %p58 = por %p56, %p57
    %p60 = scmp.ne.s32.totalorder %s45, %s59
    %p61 = scmp.eq.s32.totalorder %s14, 0
    %p62 = por %p60, %p61
    %s63 = ssub.s32 %s8, %s15
    %p64 = scmp.eq.s32.totalorder %s63, 0
    %s66 = sadd.s32 %s65, 1
    %s67 = scalar_select %p64, %s65, %s66
    %p70 = pneg %p64
    %p71 = scmp.eq.s32.totalorder %s8, 1
    %p72 = por %p70, %p71
    %p73 = scmp.ne.s32.totalorder %s65, %s68
    %p74 = scmp.eq.s32.totalorder %s8, 0
    %p75 = por %p73, %p74
    %p76 = scmp.ne.s32.totalorder %s65, %s68
    %p77 = scmp.eq.s32.totalorder %s13, 1
    %p78 = por %p76, %p77
    %p79 = scmp.ne.s32.totalorder %s68, %s69
    %p80 = scmp.eq.s32.totalorder %s13, 0
    %p81 = por %p79, %p80
    %p82 = scmp.ne.s32.totalorder %s68, %s69
    %p83 = scmp.eq.s32.totalorder %s14, 1
    %p84 = por %p82, %p83
    %p86 = scmp.ne.s32.totalorder %s69, %s85
    %p87 = scmp.eq.s32.totalorder %s14, 0
    %p88 = por %p86, %p87
    %p89 = scmp.le.s32.totalorder 1, %s8
    %p90 = scmp.lt.s32.totalorder %s8, 3
    %p91 = pnand %p89, %p90
    %p92 = pneg %p91
    // Predicated region
    $region9: #{icews_evolvegcn_forward.7} parent=5 // pred_check
      _
    $region10: #{icews_evolvegcn_forward.7} parent=5 // pred_check_branch
      %94 = sbr.rel (%p91) target = $region12
    $region11: #{icews_evolvegcn_forward.7} parent=5 // pred_region
      %s95 = ssub.s32 %s8, 1
      // Predicated region
      $region13: #{icews_evolvegcn_forward.7} parent=11 // pred_check
        %p96 = pneg %p55
      $region14: #{icews_evolvegcn_forward.7} parent=11 // pred_check_branch
        %98 = sbr.rel (%p96) target = $region16
      $region15: #{icews_evolvegcn_forward.7} parent=11 // pred_region
        _
      $region16: #{icews_evolvegcn_forward.7} parent=11 // pred_fallthru
        _
    $region12: #{icews_evolvegcn_forward.7} parent=5 // pred_fallthru
      _
    %p99 = scmp.lt.s32.totalorder %s8, 2
    // Predicated region
    $region17: #{icews_evolvegcn_forward.7} parent=5 // pred_check
      %p100 = pneg %p99
    $region18: #{icews_evolvegcn_forward.7} parent=5 // pred_check_branch
      %102 = sbr.rel (%p100) target = $region20
    $region19: #{icews_evolvegcn_forward.7} parent=5 // pred_region
      // Predicated region
      $region21: #{icews_evolvegcn_forward.7} parent=19 // pred_check
        %p103 = pneg %p28
      $region22: #{icews_evolvegcn_forward.7} parent=19 // pred_check_branch
        %105 = sbr.rel (%p103) target = $region24
      $region23: #{icews_evolvegcn_forward.7} parent=19 // pred_region
        %s106 = smul.u32 32, %s8
        %p107 = scmp.lt.s32.totalorder %s106, 63
        %s108 = scalar_select %p107, %s106, 63
        %s109 = smul.addr %s108, 4
        %s110 = scalar_lea.vmem %s0, %s109
        %s111 = smul.u32 32, %s8
      $region24: #{icews_evolvegcn_forward.7} parent=19 // pred_fallthru
        _
    $region20: #{icews_evolvegcn_forward.7} parent=5 // pred_fallthru
      _
    %p112 = scmp.le.s32.totalorder 1, %s8
    %p113 = scmp.lt.s32.totalorder %s8, 3
    %p114 = pnand %p112, %p113
    %p115 = pneg %p114
    // Predicated region
    $region25: #{icews_evolvegcn_forward.7} parent=5 // pred_check
      _
    $region26: #{icews_evolvegcn_forward.7} parent=5 // pred_check_branch
      %117 = sbr.rel (%p114) target = $region28
    $region27: #{icews_evolvegcn_forward.7} parent=5 // pred_region
      %s118 = ssub.s32 %s8, 1
      %s119 = smul.u32 32, %s13
      %p120 = scmp.lt.s32.totalorder %s119, 63
      %s121 = scalar_select %p120, %s119, 63
      %s122 = smul.addr %s121, 4
      %s123 = scalar_lea.vmem %s0, %s122
      %p124 = pneg %p34
      %p125 = pneg %p31
      %p126 = pneg %p55
      %p127 = pneg %p52
      %p128 = pneg %p81
      %p129 = pneg %p78
      %s130 = smul.u32 32, %s13
      %p131 = scmp.lt.s32.totalorder %s130, 63
      %s132 = scalar_select %p131, %s130, 63
      %s133 = smul.addr %s132, 4
      %s134 = scalar_lea.vmem %s2, %s133
      %s135 = smul.u32 32, %s13
      %p136 = scmp.lt.s32.totalorder %s135, 63
      %s137 = scalar_select %p136, %s135, 63
      %s138 = smul.addr %s137, 4
      %s139 = scalar_lea.vmem %s0, %s138
      %s140 = smul.u32 32, %s13
      %s141 = smul.u32 32, %s13
      %p142 = scmp.lt.s32.totalorder %s141, 63
      %s143 = scalar_select %p142, %s141, 63
      %s144 = smul.addr %s143, 4
      %s145 = scalar_lea.vmem %s2, %s144
      %s146 = smul.u32 32, %s13
      %v148 = vld [vmem:[%s139] sm:$0xf]
      %v149 = vld [vmem:[%s139 + $0x4] sm:$0xf]
      %v150 = vld [vmem:[%s139 + $0x8] sm:$0xf]
      %v151 = vld [vmem:[%s139 + $0xc] sm:$0xf]
      %v152 = vld [vmem:[%s139 + $0x10] sm:$0xf]
      %v153 = vld [vmem:[%s139 + $0x14] sm:$0xf]
      %v154 = vld [vmem:[%s139 + $0x18] sm:$0xf]
      %v155 = vld [vmem:[%s139 + $0x1c] sm:$0xf]
      %v156 = vld [vmem:[%s139 + $0x20] sm:$0xf]
      %v157 = vld [vmem:[%s139 + $0x24] sm:$0xf]
      %v158 = vld [vmem:[%s139 + $0x28] sm:$0xf]
      %v159 = vld [vmem:[%s139 + $0x2c] sm:$0xf]
      %v160 = vld [vmem:[%s139 + $0x30] sm:$0xf]
      %v161 = vld [vmem:[%s139 + $0x34] sm:$0xf]
      %v162 = vld [vmem:[%s139 + $0x38] sm:$0xf]
      %v163 = vld [vmem:[%s139 + $0x3c] sm:$0xf]
      %v164 = vld [vmem:[%s139 + $0x40] sm:$0xf]
      %v165 = vld [vmem:[%s139 + $0x44] sm:$0xf]
      %v166 = vld [vmem:[%s139 + $0x48] sm:$0xf]
      %v167 = vld [vmem:[%s139 + $0x4c] sm:$0xf]
      %v168 = vld [vmem:[%s139 + $0x50] sm:$0xf]
      %v169 = vld [vmem:[%s139 + $0x54] sm:$0xf]
      %v170 = vld [vmem:[%s139 + $0x58] sm:$0xf]
      %v171 = vld [vmem:[%s139 + $0x5c] sm:$0xf]
      %v172 = vld [vmem:[%s139 + $0x60] sm:$0xf]
      %v173 = vld [vmem:[%s139 + $0x64] sm:$0xf]
      %v174 = vld [vmem:[%s139 + $0x68] sm:$0xf]
      %v175 = vld [vmem:[%s139 + $0x6c] sm:$0xf]
      %v176 = vld [vmem:[%s139 + $0x70] sm:$0xf]
      %v177 = vld [vmem:[%s139 + $0x74] sm:$0xf]
      %v178 = vld [vmem:[%s139 + $0x78] sm:$0xf]
      %v179 = vld [vmem:[%s139 + $0x7c] sm:$0xf]
      %v180 = vld [vmem:[%s1] sm:$0xf]
      %v181 = vld [vmem:[%s1 + $0x4] sm:$0xf]
      %v182 = vld [vmem:[%s1 + $0x8] sm:$0xf]
      %v183 = vld [vmem:[%s1 + $0xc] sm:$0xf]
      %v184 = vld [vmem:[%s1 + $0x10] sm:$0xf]
      %v185 = vld [vmem:[%s1 + $0x14] sm:$0xf]
      %v186 = vld [vmem:[%s1 + $0x18] sm:$0xf]
      %v187 = vld [vmem:[%s1 + $0x1c] sm:$0xf]
      %v188 = vld [vmem:[%s1 + $0x20] sm:$0xf]
      %v189 = vld [vmem:[%s1 + $0x24] sm:$0xf]
      %v190 = vld [vmem:[%s1 + $0x28] sm:$0xf]
      %v191 = vld [vmem:[%s1 + $0x2c] sm:$0xf]
      %v192 = vld [vmem:[%s1 + $0x30] sm:$0xf]
      %v193 = vld [vmem:[%s1 + $0x34] sm:$0xf]
      %v194 = vld [vmem:[%s1 + $0x38] sm:$0xf]
      %v195 = vld [vmem:[%s1 + $0x3c] sm:$0xf]
      %v228 = vunpack.c.l.b16 %v148
      %v229 = vunpack.c.l.b16 %v149
      %v230 = vunpack.c.l.b16 %v150
      %v231 = vunpack.c.l.b16 %v151
      %v232 = vunpack.c.l.b16 %v152
      %v233 = vunpack.c.l.b16 %v153
      %v234 = vunpack.c.l.b16 %v154
      %v235 = vunpack.c.l.b16 %v155
      %v236 = vunpack.c.l.b16 %v156
      %v237 = vunpack.c.l.b16 %v157
      %v238 = vunpack.c.l.b16 %v158
      %v239 = vunpack.c.l.b16 %v159
      %v240 = vunpack.c.l.b16 %v160
      %v241 = vunpack.c.l.b16 %v161
      %v242 = vunpack.c.l.b16 %v162
      %v243 = vunpack.c.l.b16 %v163
      %v244 = vunpack.c.l.b16 %v164
      %v245 = vunpack.c.l.b16 %v165
      %v246 = vunpack.c.l.b16 %v166
      %v247 = vunpack.c.l.b16 %v167
      %v248 = vunpack.c.l.b16 %v168
      %v249 = vunpack.c.l.b16 %v169
      %v250 = vunpack.c.l.b16 %v170
      %v251 = vunpack.c.l.b16 %v171
      %v252 = vunpack.c.l.b16 %v172
      %v253 = vunpack.c.l.b16 %v173
      %v254 = vunpack.c.l.b16 %v174
      %v255 = vunpack.c.l.b16 %v175
      %v256 = vunpack.c.l.b16 %v176
      %v257 = vunpack.c.l.b16 %v177
      %v258 = vunpack.c.l.b16 %v178
      %v259 = vunpack.c.l.b16 %v179
      %v260 = vpack.c.b16 %v229, %v228
      %v261 = vpack.c.b16 %v231, %v230
      %v262 = vpack.c.b16 %v233, %v232
      %v263 = vpack.c.b16 %v235, %v234
      %v264 = vpack.c.b16 %v237, %v236
      %v265 = vpack.c.b16 %v239, %v238
      %v266 = vpack.c.b16 %v241, %v240
      %v267 = vpack.c.b16 %v243, %v242
      %v268 = vpack.c.b16 %v245, %v244
      %v269 = vpack.c.b16 %v247, %v246
      %v270 = vpack.c.b16 %v249, %v248
      %v271 = vpack.c.b16 %v251, %v250
      %v272 = vpack.c.b16 %v253, %v252
      %v273 = vpack.c.b16 %v255, %v254
      %v274 = vpack.c.b16 %v257, %v256
      %v275 = vpack.c.b16 %v259, %v258
      %v308 = vunpack.c.l.b16 %v180
      %v309 = vunpack.c.l.b16 %v181
      %v310 = vunpack.c.l.b16 %v182
      %v311 = vunpack.c.l.b16 %v183
      %v312 = vunpack.c.l.b16 %v184
      %v313 = vunpack.c.l.b16 %v185
      %v314 = vunpack.c.l.b16 %v186
      %v315 = vunpack.c.l.b16 %v187
      %v316 = vunpack.c.l.b16 %v188
      %v317 = vunpack.c.l.b16 %v189
      %v318 = vunpack.c.l.b16 %v190
      %v319 = vunpack.c.l.b16 %v191
      %v320 = vunpack.c.l.b16 %v192
      %v321 = vunpack.c.l.b16 %v193
      %v322 = vunpack.c.l.b16 %v194
      %v323 = vunpack.c.l.b16 %v195
      %v324 = vpack.c.b16 %v309, %v308
      %v325 = vpack.c.b16 %v311, %v310
      %v326 = vpack.c.b16 %v313, %v312
      %v327 = vpack.c.b16 %v315, %v314
      %v328 = vpack.c.b16 %v317, %v316
      %v329 = vpack.c.b16 %v319, %v318
      %v330 = vpack.c.b16 %v321, %v320
      %v331 = vpack.c.b16 %v323, %v322
      %340 = vmatprep.subr.bf16.mxu0 0
      %341 = vmatpush1.bf16.msra.mxu0 %v324
      %342 = vmatprep.subr.bf16.mxu0 0
      %343 = vmatpush1.bf16.msra.mxu0 %v325
      %344 = vmatprep.subr.bf16.mxu0 0
      %345 = vmatpush1.bf16.msra.mxu0 %v326
      %346 = vmatprep.subr.bf16.mxu0 0
      %347 = vmatpush1.bf16.msra.mxu0 %v327
      %348 = vmatprep.subr.bf16.mxu0 0
      %349 = vmatpush1.bf16.msra.mxu0 %v328
      %350 = vmatprep.subr.bf16.mxu0 0
      %351 = vmatpush1.bf16.msra.mxu0 %v329
      %352 = vmatprep.subr.bf16.mxu0 0
      %353 = vmatpush1.bf16.msra.mxu0 %v330
      %354 = vmatprep.subr.bf16.mxu0 0
      %355 = vmatpush1.bf16.msra.mxu0 %v331
      %356 = vmatprep.subr.bf16.mxu0 0
      %357 = vmatpush1.bf16.msra.mxu0 0
      %358 = vmatprep.subr.bf16.mxu0 0
      %359 = vmatpush1.bf16.msra.mxu0 0
      %360 = vmatprep.subr.bf16.mxu0 0
      %361 = vmatpush1.bf16.msra.mxu0 0
      %362 = vmatprep.subr.bf16.mxu0 0
      %363 = vmatpush1.bf16.msra.mxu0 0
      %364 = vmatprep.subr.bf16.mxu0 0
      %365 = vmatpush1.bf16.msra.mxu0 0
      %366 = vmatprep.subr.bf16.mxu0 0
      %367 = vmatpush1.bf16.msra.mxu0 0
      %368 = vmatprep.subr.bf16.mxu0 0
      %369 = vmatpush1.bf16.msra.mxu0 0
      %370 = vmatprep.subr.bf16.mxu0 0
      %371 = vmatpush1.bf16.msra.mxu0 0
      %372 = vmatprep.mubr.bf16.mxu0 0
      %373 = vmatmul.mubr.bf16.gmra.mrb[0].mxu0 %v260
      %v374 = vpop.f32.mrb[0].mxu0
      %v375 = vadd.f32 0.0, %v374
      %v376 = vpop.f32.mrb[0].mxu0
      %v377 = vpop.f32.mrb[0].mxu0
      %v378 = vadd.f32 0.0, %v377
      %v379 = vpop.f32.mrb[0].mxu0
      %380 = vmatprep.mubr.bf16.mxu0 0
      %381 = vmatmul.mubr.bf16.gmra.mrb[0].mxu0 %v261
      %v382 = vpop.f32.mrb[0].mxu0
      %v383 = vadd.f32 0.0, %v382
      %v384 = vpop.f32.mrb[0].mxu0
      %v385 = vpop.f32.mrb[0].mxu0
      %v386 = vadd.f32 0.0, %v385
      %v387 = vpop.f32.mrb[0].mxu0
      %388 = vmatprep.mubr.bf16.mxu0 0
      %389 = vmatmul.mubr.bf16.gmra.mrb[0].mxu0 %v262
      %v390 = vpop.f32.mrb[0].mxu0
      %v391 = vadd.f32 0.0, %v390
      %v392 = vpop.f32.mrb[0].mxu0
      %v393 = vpop.f32.mrb[0].mxu0
      %v394 = vadd.f32 0.0, %v393
      %v395 = vpop.f32.mrb[0].mxu0
      %396 = vmatprep.mubr.bf16.mxu0 0
      %397 = vmatmul.mubr.bf16.gmra.mrb[0].mxu0 %v263
      %v398 = vpop.f32.mrb[0].mxu0
      %v399 = vadd.f32 0.0, %v398
      %v400 = vpop.f32.mrb[0].mxu0
      %v401 = vpop.f32.mrb[0].mxu0
      %v402 = vadd.f32 0.0, %v401
      %v403 = vpop.f32.mrb[0].mxu0
      %404 = vmatprep.mubr.bf16.mxu0 0
      %405 = vmatmul.mubr.bf16.gmra.mrb[0].mxu0 %v264
      %v406 = vpop.f32.mrb[0].mxu0
      %v407 = vadd.f32 0.0, %v406
      %v408 = vpop.f32.mrb[0].mxu0
      %v409 = vpop.f32.mrb[0].mxu0
      %v410 = vadd.f32 0.0, %v409
      %v411 = vpop.f32.mrb[0].mxu0
      %412 = vmatprep.mubr.bf16.mxu0 0
      %413 = vmatmul.mubr.bf16.gmra.mrb[0].mxu0 %v265
      %v414 = vpop.f32.mrb[0].mxu0
      %v415 = vadd.f32 0.0, %v414
      %v416 = vpop.f32.mrb[0].mxu0
      %v417 = vpop.f32.mrb[0].mxu0
      %v418 = vadd.f32 0.0, %v417
      %v419 = vpop.f32.mrb[0].mxu0
      %420 = vmatprep.mubr.bf16.mxu0 0
      %421 = vmatmul.mubr.bf16.gmra.mrb[0].mxu0 %v266
      %v422 = vpop.f32.mrb[0].mxu0
      %v423 = vadd.f32 0.0, %v422
      %v424 = vpop.f32.mrb[0].mxu0
      %v425 = vpop.f32.mrb[0].mxu0
      %v426 = vadd.f32 0.0, %v425
      %v427 = vpop.f32.mrb[0].mxu0
      %428 = vmatprep.mubr.bf16.mxu0 0
      %429 = vmatmul.mubr.bf16.gmra.mrb[0].mxu0 %v267
      %v430 = vpop.f32.mrb[0].mxu0
      %v431 = vadd.f32 0.0, %v430
      %v432 = vpop.f32.mrb[0].mxu0
      %v433 = vpop.f32.mrb[0].mxu0
      %v434 = vadd.f32 0.0, %v433
      %v435 = vpop.f32.mrb[0].mxu0
      %436 = vmatprep.mubr.bf16.mxu0 0
      %437 = vmatmul.mubr.bf16.gmra.mrb[0].mxu0 %v268
      %v438 = vpop.f32.mrb[0].mxu0
      %v439 = vadd.f32 0.0, %v438
      %v440 = vpop.f32.mrb[0].mxu0
      %v441 = vpop.f32.mrb[0].mxu0
      %v442 = vadd.f32 0.0, %v441
      %v443 = vpop.f32.mrb[0].mxu0
      %444 = vmatprep.mubr.bf16.mxu0 0
      %445 = vmatmul.mubr.bf16.gmra.mrb[0].mxu0 %v269
      %v446 = vpop.f32.mrb[0].mxu0
      %v447 = vadd.f32 0.0, %v446
      %v448 = vpop.f32.mrb[0].mxu0
      %v449 = vpop.f32.mrb[0].mxu0
      %v450 = vadd.f32 0.0, %v449
      %v451 = vpop.f32.mrb[0].mxu0
      %452 = vmatprep.mubr.bf16.mxu0 0
      %453 = vmatmul.mubr.bf16.gmra.mrb[0].mxu0 %v270
      %v454 = vpop.f32.mrb[0].mxu0
      %v455 = vadd.f32 0.0, %v454
      %v456 = vpop.f32.mrb[0].mxu0
      %v457 = vpop.f32.mrb[0].mxu0
      %v458 = vadd.f32 0.0, %v457
      %v459 = vpop.f32.mrb[0].mxu0
      %460 = vmatprep.mubr.bf16.mxu0 0
      %461 = vmatmul.mubr.bf16.gmra.mrb[0].mxu0 %v271
      %v462 = vpop.f32.mrb[0].mxu0
      %v463 = vadd.f32 0.0, %v462
      %v464 = vpop.f32.mrb[0].mxu0
      %v465 = vpop.f32.mrb[0].mxu0
      %v466 = vadd.f32 0.0, %v465
      %v467 = vpop.f32.mrb[0].mxu0
      %468 = vmatprep.mubr.bf16.mxu0 0
      %469 = vmatmul.mubr.bf16.gmra.mrb[0].mxu0 %v272
      %v470 = vpop.f32.mrb[0].mxu0
      %v471 = vadd.f32 0.0, %v470
      %v472 = vpop.f32.mrb[0].mxu0
      %v473 = vpop.f32.mrb[0].mxu0
      %v474 = vadd.f32 0.0, %v473
      %v475 = vpop.f32.mrb[0].mxu0
      %476 = vmatprep.mubr.bf16.mxu0 0
      %477 = vmatmul.mubr.bf16.gmra.mrb[0].mxu0 %v273
      %v478 = vpop.f32.mrb[0].mxu0
      %v479 = vadd.f32 0.0, %v478
      %v480 = vpop.f32.mrb[0].mxu0
      %v481 = vpop.f32.mrb[0].mxu0
      %v482 = vadd.f32 0.0, %v481
      %v483 = vpop.f32.mrb[0].mxu0
      %484 = vmatprep.mubr.bf16.mxu0 0
      %485 = vmatmul.mubr.bf16.gmra.mrb[0].mxu0 %v274
      %v486 = vpop.f32.mrb[0].mxu0
      %v487 = vadd.f32 0.0, %v486
      %v488 = vpop.f32.mrb[0].mxu0
      %v489 = vpop.f32.mrb[0].mxu0
      %v490 = vadd.f32 0.0, %v489
      %v491 = vpop.f32.mrb[0].mxu0
      %492 = vmatprep.mubr.bf16.mxu0 0
      %493 = vmatmul.mubr.bf16.gmra.mrb[0].mxu0 %v275
      %v494 = vpop.f32.mrb[0].mxu0
      %v495 = vadd.f32 0.0, %v494
      %v496 = vpop.f32.mrb[0].mxu0
      %v497 = vpop.f32.mrb[0].mxu0
      %v498 = vadd.f32 0.0, %v497
      %v499 = vpop.f32.mrb[0].mxu0
      %500 = vdwg.mxu0
      %v501 = vpack.c.bf16 %v378, %v375
      %v502 = vpack.c.bf16 %v386, %v383
      %v503 = vpack.c.bf16 %v394, %v391
      %v504 = vpack.c.bf16 %v402, %v399
      %v505 = vpack.c.bf16 %v410, %v407
      %v506 = vpack.c.bf16 %v418, %v415
      %v507 = vpack.c.bf16 %v426, %v423
      %v508 = vpack.c.bf16 %v434, %v431
      %v509 = vpack.c.bf16 %v442, %v439
      %v510 = vpack.c.bf16 %v450, %v447
      %v511 = vpack.c.bf16 %v458, %v455
      %v512 = vpack.c.bf16 %v466, %v463
      %v513 = vpack.c.bf16 %v474, %v471
      %v514 = vpack.c.bf16 %v482, %v479
      %v515 = vpack.c.bf16 %v490, %v487
      %v516 = vpack.c.bf16 %v498, %v495
      %v533 = vunpack.c.l.b16 %v501
      %v534 = vunpack.c.h.b16 %v501
      %v535 = vunpack.c.l.b16 %v502
      %v536 = vunpack.c.h.b16 %v502
      %v537 = vunpack.c.l.b16 %v503
      %v538 = vunpack.c.h.b16 %v503
      %v539 = vunpack.c.l.b16 %v504
      %v540 = vunpack.c.h.b16 %v504
      %v541 = vunpack.c.l.b16 %v505
      %v542 = vunpack.c.h.b16 %v505
      %v543 = vunpack.c.l.b16 %v506
      %v544 = vunpack.c.h.b16 %v506
      %v545 = vunpack.c.l.b16 %v507
      %v546 = vunpack.c.h.b16 %v507
      %v547 = vunpack.c.l.b16 %v508
      %v548 = vunpack.c.h.b16 %v508
      %v549 = vunpack.c.l.b16 %v509
      %v550 = vunpack.c.h.b16 %v509
      %v551 = vunpack.c.l.b16 %v510
      %v552 = vunpack.c.h.b16 %v510
      %v553 = vunpack.c.l.b16 %v511
      %v554 = vunpack.c.h.b16 %v511
      %v555 = vunpack.c.l.b16 %v512
      %v556 = vunpack.c.h.b16 %v512
      %v557 = vunpack.c.l.b16 %v513
      %v558 = vunpack.c.h.b16 %v513
      %v559 = vunpack.c.l.b16 %v514
      %v560 = vunpack.c.h.b16 %v514
      %v561 = vunpack.c.l.b16 %v515
      %v562 = vunpack.c.h.b16 %v515
      %v563 = vunpack.c.l.b16 %v516
      %v564 = vunpack.c.h.b16 %v516
      %v565 = vpack.c.b16 %v533, %v533
      %v566 = vpack.c.b16 %v534, %v534
      %v567 = vpack.c.b16 %v535, %v535
      %v568 = vpack.c.b16 %v536, %v536
      %v569 = vpack.c.b16 %v537, %v537
      %v570 = vpack.c.b16 %v538, %v538
      %v571 = vpack.c.b16 %v539, %v539
      %v572 = vpack.c.b16 %v540, %v540
      %v573 = vpack.c.b16 %v541, %v541
      %v574 = vpack.c.b16 %v542, %v542
      %v575 = vpack.c.b16 %v543, %v543
      %v576 = vpack.c.b16 %v544, %v544
      %v577 = vpack.c.b16 %v545, %v545
      %v578 = vpack.c.b16 %v546, %v546
      %v579 = vpack.c.b16 %v547, %v547
      %v580 = vpack.c.b16 %v548, %v548
      %v581 = vpack.c.b16 %v549, %v549
      %v582 = vpack.c.b16 %v550, %v550
      %v583 = vpack.c.b16 %v551, %v551
      %v584 = vpack.c.b16 %v552, %v552
      %v585 = vpack.c.b16 %v553, %v553
      %v586 = vpack.c.b16 %v554, %v554
      %v587 = vpack.c.b16 %v555, %v555
      %v588 = vpack.c.b16 %v556, %v556
      %v589 = vpack.c.b16 %v557, %v557
      %v590 = vpack.c.b16 %v558, %v558
      %v591 = vpack.c.b16 %v559, %v559
      %v592 = vpack.c.b16 %v560, %v560
      %v593 = vpack.c.b16 %v561, %v561
      %v594 = vpack.c.b16 %v562, %v562
      %v595 = vpack.c.b16 %v563, %v563
      %v596 = vpack.c.b16 %v564, %v564
      %629 = vst [vmem:[%s145] sm:$0xf] %v565
      %630 = vst [vmem:[%s145 + $0x4] sm:$0xf] %v566
      %631 = vst [vmem:[%s145 + $0x8] sm:$0xf] %v567
      %632 = vst [vmem:[%s145 + $0xc] sm:$0xf] %v568
      %633 = vst [vmem:[%s145 + $0x10] sm:$0xf] %v569
      %634 = vst [vmem:[%s145 + $0x14] sm:$0xf] %v570
      %635 = vst [vmem:[%s145 + $0x18] sm:$0xf] %v571
      %636 = vst [vmem:[%s145 + $0x1c] sm:$0xf] %v572
      %637 = vst [vmem:[%s145 + $0x20] sm:$0xf] %v573
      %638 = vst [vmem:[%s145 + $0x24] sm:$0xf] %v574
      %639 = vst [vmem:[%s145 + $0x28] sm:$0xf] %v575
      %640 = vst [vmem:[%s145 + $0x2c] sm:$0xf] %v576
      %641 = vst [vmem:[%s145 + $0x30] sm:$0xf] %v577
      %642 = vst [vmem:[%s145 + $0x34] sm:$0xf] %v578
      %643 = vst [vmem:[%s145 + $0x38] sm:$0xf] %v579
      %644 = vst [vmem:[%s145 + $0x3c] sm:$0xf] %v580
      %645 = vst [vmem:[%s145 + $0x40] sm:$0xf] %v581
      %646 = vst [vmem:[%s145 + $0x44] sm:$0xf] %v582
      %647 = vst [vmem:[%s145 + $0x48] sm:$0xf] %v583
      %648 = vst [vmem:[%s145 + $0x4c] sm:$0xf] %v584
      %649 = vst [vmem:[%s145 + $0x50] sm:$0xf] %v585
      %650 = vst [vmem:[%s145 + $0x54] sm:$0xf] %v586
      %651 = vst [vmem:[%s145 + $0x58] sm:$0xf] %v587
      %652 = vst [vmem:[%s145 + $0x5c] sm:$0xf] %v588
      %653 = vst [vmem:[%s145 + $0x60] sm:$0xf] %v589
      %654 = vst [vmem:[%s145 + $0x64] sm:$0xf] %v590
      %655 = vst [vmem:[%s145 + $0x68] sm:$0xf] %v591
      %656 = vst [vmem:[%s145 + $0x6c] sm:$0xf] %v592
      %657 = vst [vmem:[%s145 + $0x70] sm:$0xf] %v593
      %658 = vst [vmem:[%s145 + $0x74] sm:$0xf] %v594
      %659 = vst [vmem:[%s145 + $0x78] sm:$0xf] %v595
      %660 = vst [vmem:[%s145 + $0x7c] sm:$0xf] %v596
      %s661 = smul.u32 32, %s13
      %p662 = scmp.lt.s32.totalorder %s661, 63
      %s663 = scalar_select %p662, %s661, 63
      %s664 = smul.addr %s663, 4
      %s665 = scalar_lea.vmem %s2, %s664
      // Predicated region
      $region29: #{icews_evolvegcn_forward.7} parent=27 // pred_check
        %p666 = pneg %p78
      $region30: #{icews_evolvegcn_forward.7} parent=27 // pred_check_branch
        %668 = sbr.rel (%p666) target = $region32
      $region31: #{icews_evolvegcn_forward.7} parent=27 // pred_region
        %s669 = smul.u32 32, %s13
      $region32: #{icews_evolvegcn_forward.7} parent=27 // pred_fallthru
        _
    $region28: #{icews_evolvegcn_forward.7} parent=5 // pred_fallthru
      _
    %p670 = scmp.le.s32.totalorder 2, %s8
    // Predicated region
    $region33: #{icews_evolvegcn_forward.7} parent=5 // pred_check
      %p671 = pneg %p670
    $region34: #{icews_evolvegcn_forward.7} parent=5 // pred_check_branch
      %673 = sbr.rel (%p671) target = $region36
    $region35: #{icews_evolvegcn_forward.7} parent=5 // pred_region
      %s674 = ssub.s32 %s8, 2
      // Predicated region
      $region37: #{icews_evolvegcn_forward.7} parent=35 // pred_check
        %p675 = pneg %p84
      $region38: #{icews_evolvegcn_forward.7} parent=35 // pred_check_branch
        %677 = sbr.rel (%p675) target = $region40
      $region39: #{icews_evolvegcn_forward.7} parent=35 // pred_region
        %s678 = smul.u32 32, %s14
        %p679 = scmp.lt.s32.totalorder %s678, 63
        %s680 = scalar_select %p679, %s678, 63
        %s681 = smul.addr %s680, 4
        %s682 = scalar_lea.vmem %s2, %s681
      $region40: #{icews_evolvegcn_forward.7} parent=35 // pred_fallthru
        _
    $region36: #{icews_evolvegcn_forward.7} parent=5 // pred_fallthru
      _
  $region6: #{icews_evolvegcn_forward.7} parent=0 // loop_footer
    %s12 = sadd.s32 1, %s8
  $region7: #{icews_evolvegcn_forward.7} parent=0 // loop_footer_branch
    %7 = sbr.rel target = $region3
  $region8: #{icews_evolvegcn_forward.7} parent=0 // loop_exit
    _

// kernel: icews_evolvegcn_forward.9
$region0: #{icews_evolvegcn_forward.9}
  #allocation0 [shape = 'u32[]', space=smem, size = 0x4, offset = 0x4, fixed_abs, tag = 'smem constant byte address 0x4 - core index']
  #allocation1 [shape = 'u32[144,128]{1,0:T(1,128)}', space=vmem, size = 0x12000, scoped, tag = 'internal scratch']
  #allocation2 [shape = 'f32[128,128]{1,0:T(8,128)}', space=vmem, size = 0x10000, scoped, tag = 'scratch operand']
  #allocation3 [shape = 'f32[128,128]{1,0:T(8,128)}', space=vmem, size = 0x10000, scoped, tag = 'scratch operand']
  #allocation4 [shape = 's32[2]{0}', space=sflag, size = 0x8, scoped, tag = 'scratch operand']
  #allocation5 [shape = 's32[1]{0}', space=sflag, size = 0x4, scoped, tag = 'scoped memory for icews_evolvegcn_forward.9']
  #allocation6 [shape = 'u8[1024]{0}', space=smem, size = 0x400, scoped, tag = 'prefetched SMEM operand 0']
  #allocation7 [shape = 'u8[1024]{0}', space=smem, size = 0x400, scoped, tag = 'prefetched SMEM operand 1']
  #allocation8 [shape = 'f32[1,1]{1,0:T(1,128)S(1)}', space=vmem, size = 0x200, scoped, tag = 'scoped memory for icews_evolvegcn_forward.9']
  #allocation9 [shape = 's32[]', space=sflag, size = 0x4, offset = 0, fixed_abs, tag = 'sflag constant byte address 0x0 - dummy sync flag']
  #allocation10 [shape = 's32[]', space=sflag, size = 0x4, offset = 0, fixed_abs, tag = 'sflag constant byte address 0x0 - dummy sync flag']
  %s0 = inlined_call_operand.vmem [shape: s32[256], index: 0, kind: input, shape index: {}]
  %s1 = inlined_call_operand.vmem [shape: s32[256], index: 1, kind: input, shape index: {}]
  %s2 = inlined_call_operand.vmem [shape: f32[512,128], index: 2, kind: input, shape index: {}]
  %s3 = inlined_call_operand.vmem [shape: f32[128,1], index: 3, kind: input, shape index: {}]
  %s4 = inlined_call_operand.<no memory space> [shape: f32[1,1], index: 4, kind: input, shape index: {}]
  %s5 = inlined_call_operand.vmem [shape: f32[256,1], index: 5, kind: output, shape index: {}]
  %s6 = sld [smem:[#allocation0]]
  $region115: #{icews_evolvegcn_forward.9} parent=0
    _
  %s8 = ssub.s32 1, %s6
  %s9 = scalar_select 0, %s8, %s6
  %s10 = sshll.u32 %s0, 4
  %s11 = int_to_ptr.vmem [resolvable:$true] %s10
  %13 = dma.vmem_to_smem %s11, 32, [#allocation6], [#allocation5]
  %s14 = sshll.u32 %s1, 4
  %s15 = int_to_ptr.vmem [resolvable:$true] %s14
  %17 = dma.vmem_to_smem %s15, 32, [#allocation7], [#allocation5]
  %v18 = vstv %s4
  %19 = vst [vmem:[#allocation8] sm:$0x1] %v18
  %20 = dma.done [#allocation5], 64
  %21 = sfence
  loop: start=0, step=1, limit=4
  $region2: #{icews_evolvegcn_forward.9} parent=0 // loop_pre_header
    _
  $region3: #{icews_evolvegcn_forward.9} parent=0 // loop_header
    %s23 = sphi 0, %s27
    %p24 = scmp.ge.s32.totalorder %s23, 4
    %s31 = sphi 0, %s31
    %s33 = sphi 0, %s31
    %s34 = sphi 0, %s33
    %s48 = sphi 0, %s34
    %s52 = sphi 0, %s52
    %s54 = sphi 0, %s52
    %s55 = sphi 0, %s54
    %s69 = sphi 0, %s55
    %s75 = sphi 0, %s77
    %s78 = sphi 0, %s75
    %s79 = sphi 0, %s78
    %s95 = sphi 0, %s79
  $region4: #{icews_evolvegcn_forward.9} parent=0 // loop_header_branch
    %26 = sbr.rel (%p24) target = $region8
  $region5: #{icews_evolvegcn_forward.9} parent=0 // loop_body
    %s28 = ssub.s32 %s23, 1
    %s29 = ssub.s32 %s23, 2
    %s30 = sadd.s32 %s23, 1
    %s32 = sadd.s32 %s31, 1
    %p35 = scmp.eq.s32.totalorder %s23, 1
    %p36 = scmp.ne.s32.totalorder %s31, %s33
    %p37 = scmp.eq.s32.totalorder %s23, 0
    %p38 = por %p36, %p37
    %p39 = scmp.ne.s32.totalorder %s31, %s33
    %p40 = scmp.eq.s32.totalorder %s28, 1
    %p41 = por %p39, %p40
    %p42 = scmp.ne.s32.totalorder %s33, %s34
    %p43 = scmp.eq.s32.totalorder %s28, 0
    %p44 = por %p42, %p43
    %p45 = scmp.ne.s32.totalorder %s33, %s34
    %p46 = scmp.eq.s32.totalorder %s29, 1
    %p47 = por %p45, %p46
    %p49 = scmp.ne.s32.totalorder %s34, %s48
    %p50 = scmp.eq.s32.totalorder %s29, 0
    %p51 = por %p49, %p50
    %s53 = sadd.s32 %s52, 1
    %p56 = scmp.eq.s32.totalorder %s23, 1
    %p57 = scmp.ne.s32.totalorder %s52, %s54
    %p58 = scmp.eq.s32.totalorder %s23, 0
    %p59 = por %p57, %p58
    %p60 = scmp.ne.s32.totalorder %s52, %s54
    %p61 = scmp.eq.s32.totalorder %s28, 1
    %p62 = por %p60, %p61
    %p63 = scmp.ne.s32.totalorder %s54, %s55
    %p64 = scmp.eq.s32.totalorder %s28, 0
    %p65 = por %p63, %p64
    %p66 = scmp.ne.s32.totalorder %s54, %s55
    %p67 = scmp.eq.s32.totalorder %s29, 1
    %p68 = por %p66, %p67
    %p70 = scmp.ne.s32.totalorder %s55, %s69
    %p71 = scmp.eq.s32.totalorder %s29, 0
    %p72 = por %p70, %p71
    %s73 = ssub.s32 %s23, %s30
    %p74 = scmp.eq.s32.totalorder %s73, 0
    %s76 = sadd.s32 %s75, 1
    %s77 = scalar_select %p74, %s75, %s76
    %p80 = pneg %p74
    %p81 = scmp.eq.s32.totalorder %s23, 1
    %p82 = por %p80, %p81
    %p83 = scmp.ne.s32.totalorder %s75, %s78
    %p84 = scmp.eq.s32.totalorder %s23, 0
    %p85 = por %p83, %p84
    %p86 = scmp.ne.s32.totalorder %s75, %s78
    %p87 = scmp.eq.s32.totalorder %s28, 1
    %p88 = por %p86, %p87
    %p89 = scmp.ne.s32.totalorder %s78, %s79
    %p90 = scmp.eq.s32.totalorder %s28, 0
    %p91 = por %p89, %p90
    %p92 = scmp.ne.s32.totalorder %s78, %s79
    %p93 = scmp.eq.s32.totalorder %s29, 1
    %p94 = por %p92, %p93
    %p96 = scmp.ne.s32.totalorder %s79, %s95
    %p97 = scmp.eq.s32.totalorder %s29, 0
    %p98 = por %p96, %p97
    %p99 = scmp.le.s32.totalorder 1, %s23
    %p100 = scmp.lt.s32.totalorder %s23, 3
    %p101 = pnand %p99, %p100
    %p102 = pneg %p101
    // Predicated region
    $region9: #{icews_evolvegcn_forward.9} parent=5 // pred_check
      _
    $region10: #{icews_evolvegcn_forward.9} parent=5 // pred_check_branch
      %104 = sbr.rel (%p101) target = $region12
    $region11: #{icews_evolvegcn_forward.9} parent=5 // pred_region
      %s105 = ssub.s32 %s23, 1
      // Predicated region
      $region13: #{icews_evolvegcn_forward.9} parent=11 // pred_check
        %p106 = pneg %p44
      $region14: #{icews_evolvegcn_forward.9} parent=11 // pred_check_branch
        %108 = sbr.rel (%p106) target = $region16
      $region15: #{icews_evolvegcn_forward.9} parent=11 // pred_region
        _
      $region16: #{icews_evolvegcn_forward.9} parent=11 // pred_fallthru
        _
      // Predicated region
      $region17: #{icews_evolvegcn_forward.9} parent=11 // pred_check
        %p109 = pneg %p65
      $region18: #{icews_evolvegcn_forward.9} parent=11 // pred_check_branch
        %111 = sbr.rel (%p109) target = $region20
      $region19: #{icews_evolvegcn_forward.9} parent=11 // pred_region
        _
      $region20: #{icews_evolvegcn_forward.9} parent=11 // pred_fallthru
        _
    $region12: #{icews_evolvegcn_forward.9} parent=5 // pred_fallthru
      _
    %p112 = scmp.lt.s32.totalorder %s23, 2
    // Predicated region
    $region21: #{icews_evolvegcn_forward.9} parent=5 // pred_check
      %p113 = pneg %p112
    $region22: #{icews_evolvegcn_forward.9} parent=5 // pred_check_branch
      %115 = sbr.rel (%p113) target = $region24
    $region23: #{icews_evolvegcn_forward.9} parent=5 // pred_region
      _
    $region24: #{icews_evolvegcn_forward.9} parent=5 // pred_fallthru
      _
    %p116 = scmp.le.s32.totalorder 1, %s23
    %p117 = scmp.lt.s32.totalorder %s23, 3
    %p118 = pnand %p116, %p117
    %p119 = pneg %p118
    // Predicated region
    $region25: #{icews_evolvegcn_forward.9} parent=5 // pred_check
      _
    $region26: #{icews_evolvegcn_forward.9} parent=5 // pred_check_branch
      %121 = sbr.rel (%p118) target = $region28
    $region27: #{icews_evolvegcn_forward.9} parent=5 // pred_region
      %s122 = ssub.s32 %s23, 1
      %p123 = pneg %p44
      %p124 = pneg %p41
      %p125 = pneg %p65
      %p126 = pneg %p62
      %p127 = pneg %p91
      %p128 = pneg %p88
      %s129 = smul.u32 16, %s28
      %p130 = scmp.lt.s32.totalorder %s129, 31
      %s131 = scalar_select %p130, %s129, 31
      %s132 = smul.addr %s131, 8
      %s133 = scalar_lea.vmem %s5, %s132
      %s134 = smul.u32 16, %s28
      %p135 = scmp.lt.s32.totalorder %s134, 31
      %s136 = scalar_select %p135, %s134, 31
      %s137 = smul.addr %s136, 8
      %s138 = scalar_lea.vmem %s5, %s137
      %s139 = smul.u32 16, %s28
      %s140 = smul.u32 %s28, 128
      loop: start=0, step=1, limit=128
      $region29: #{icews_evolvegcn_forward.9} parent=27 // loop_pre_header
        _
      $region30: #{icews_evolvegcn_forward.9} parent=27 // loop_header
        %s142 = sphi 0, %s146
        %p143 = scmp.ge.s32.totalorder %s142, 128
      $region31: #{icews_evolvegcn_forward.9} parent=27 // loop_header_branch
        %145 = sbr.rel (%p143) target = $region35
      $region32: #{icews_evolvegcn_forward.9} parent=27 // loop_body
        %s147 = sadd.s32 %s140, %s142
        %s148 = sld [smem:[#allocation6 + %s147]]
        %s149 = sld [smem:[#allocation7 + %s147]]
        %s150 = scalar_lea.vmem %s2, %s148
        %s151 = scalar_lea.vmem [#allocation2], %s142
        %p153 = scmp.lt.u32.totalorder 1, 8
        %p154 = pneg %p153
        // Predicated region
        $region36: #{icews_evolvegcn_forward.9} parent=32 // pred_check
          _
        $region37: #{icews_evolvegcn_forward.9} parent=32 // pred_check_branch
          %156 = sbr.rel (%p153) target = $region39
        $region38: #{icews_evolvegcn_forward.9} parent=32 // pred_region
          %s171 = sand.u32 1, 7
          %p172 = scmp.eq.s32.totalorder %s171, 0
          %p173 = pneg %p172
          // Predicated region
          $region51: #{icews_evolvegcn_forward.9} parent=38 // pred_check
            _
          $region52: #{icews_evolvegcn_forward.9} parent=38 // pred_check_branch
            %175 = sbr.rel (%p172) target = $region54
          $region53: #{icews_evolvegcn_forward.9} parent=38 // pred_region
            %s176 = sand.u32 1, 7
            %s177 = ssub.s32 1, %s176
            %s178 = scalar_lea.vmem %s150, %s177
            %s179 = ssub.s32 1, %s176
            %s180 = scalar_lea.vmem %s151, %s179 [#allocation2]
            %s181 = sshllo.u32 0, %s176
            loop: start=0, step=1, limit=1
            $region55: #{icews_evolvegcn_forward.9} parent=53 // loop_pre_header
              _
            $region56: #{icews_evolvegcn_forward.9} parent=53 // loop_header
              %s183 = sphi 0, %s187
              %p184 = scmp.ge.s32.totalorder %s183, 1
              %s188 = sphi %s178, %s178
              %s189 = sphi %s180, %s180
            $region57: #{icews_evolvegcn_forward.9} parent=53 // loop_header_branch
              %186 = sbr.rel (%p184) target = $region61
            $region58: #{icews_evolvegcn_forward.9} parent=53 // loop_body
              %v190 = vld [vmem:[%s188] sm:%s181]
              %191 = vst [vmem:[%s189] sm:%s181] %v190
            $region59: #{icews_evolvegcn_forward.9} parent=53 // loop_footer
              %s187 = sadd.s32 1, %s183
            $region60: #{icews_evolvegcn_forward.9} parent=53 // loop_footer_branch
              %182 = sbr.rel target = $region56
            $region61: #{icews_evolvegcn_forward.9} parent=53 // loop_exit
              _
          $region54: #{icews_evolvegcn_forward.9} parent=38 // pred_fallthru
            _
        $region39: #{icews_evolvegcn_forward.9} parent=32 // pred_fallthru
          _
        // Predicated region
        $region40: #{icews_evolvegcn_forward.9} parent=32 // pred_check
          %p157 = pneg %p153
        $region41: #{icews_evolvegcn_forward.9} parent=32 // pred_check_branch
          %159 = sbr.rel (%p157) target = $region43
        $region42: #{icews_evolvegcn_forward.9} parent=32 // pred_region
          %s160 = sshllo.u32 0, 1
          loop: start=0, step=1, limit=1
          $region44: #{icews_evolvegcn_forward.9} parent=42 // loop_pre_header
            _
          $region45: #{icews_evolvegcn_forward.9} parent=42 // loop_header
            %s162 = sphi 0, %s166
            %p163 = scmp.ge.s32.totalorder %s162, 1
            %s167 = sphi %s150, %s150
            %s168 = sphi %s151, %s151
          $region46: #{icews_evolvegcn_forward.9} parent=42 // loop_header_branch
            %165 = sbr.rel (%p163) target = $region50
          $region47: #{icews_evolvegcn_forward.9} parent=42 // loop_body
            %v169 = vld [vmem:[%s167] sm:%s160]
            %170 = vst [vmem:[%s168] sm:%s160] %v169
          $region48: #{icews_evolvegcn_forward.9} parent=42 // loop_footer
            %s166 = sadd.s32 1, %s162
          $region49: #{icews_evolvegcn_forward.9} parent=42 // loop_footer_branch
            %161 = sbr.rel target = $region45
          $region50: #{icews_evolvegcn_forward.9} parent=42 // loop_exit
            _
        $region43: #{icews_evolvegcn_forward.9} parent=32 // pred_fallthru
          _
        // Predicated region
        $region62: #{icews_evolvegcn_forward.9} parent=32 // pred_check
          _
        $region63: #{icews_evolvegcn_forward.9} parent=32 // pred_check_branch
          %194 = sbr.rel (0) target = $region65
        $region64: #{icews_evolvegcn_forward.9} parent=32 // pred_region
          %195 = vsyncadd [#allocation4], 16
        $region65: #{icews_evolvegcn_forward.9} parent=32 // pred_fallthru
          _
        %s196 = scalar_lea.vmem %s2, %s149
        %s197 = scalar_lea.vmem [#allocation3], %s142
        %s198 = scalar_lea.sflag [#allocation4], 1
        %p200 = scmp.lt.u32.totalorder 1, 8
        %p201 = pneg %p200
        // Predicated region
        $region66: #{icews_evolvegcn_forward.9} parent=32 // pred_check
          _
        $region67: #{icews_evolvegcn_forward.9} parent=32 // pred_check_branch
          %203 = sbr.rel (%p200) target = $region69
        $region68: #{icews_evolvegcn_forward.9} parent=32 // pred_region
          %s218 = sand.u32 1, 7
          %p219 = scmp.eq.s32.totalorder %s218, 0
          %p220 = pneg %p219
          // Predicated region
          $region81: #{icews_evolvegcn_forward.9} parent=68 // pred_check
            _
          $region82: #{icews_evolvegcn_forward.9} parent=68 // pred_check_branch
            %222 = sbr.rel (%p219) target = $region84
          $region83: #{icews_evolvegcn_forward.9} parent=68 // pred_region
            %s223 = sand.u32 1, 7
            %s224 = ssub.s32 1, %s223
            %s225 = scalar_lea.vmem %s196, %s224
            %s226 = ssub.s32 1, %s223
            %s227 = scalar_lea.vmem %s197, %s226 [#allocation3]
            %s228 = sshllo.u32 0, %s223
            loop: start=0, step=1, limit=1
            $region85: #{icews_evolvegcn_forward.9} parent=83 // loop_pre_header
              _
            $region86: #{icews_evolvegcn_forward.9} parent=83 // loop_header
              %s230 = sphi 0, %s234
              %p231 = scmp.ge.s32.totalorder %s230, 1
              %s235 = sphi %s225, %s225
              %s236 = sphi %s227, %s227
            $region87: #{icews_evolvegcn_forward.9} parent=83 // loop_header_branch
              %233 = sbr.rel (%p231) target = $region91
            $region88: #{icews_evolvegcn_forward.9} parent=83 // loop_body
              %v237 = vld [vmem:[%s235] sm:%s228]
              %238 = vst [vmem:[%s236] sm:%s228] %v237
            $region89: #{icews_evolvegcn_forward.9} parent=83 // loop_footer
              %s234 = sadd.s32 1, %s230
            $region90: #{icews_evolvegcn_forward.9} parent=83 // loop_footer_branch
              %229 = sbr.rel target = $region86
            $region91: #{icews_evolvegcn_forward.9} parent=83 // loop_exit
              _
          $region84: #{icews_evolvegcn_forward.9} parent=68 // pred_fallthru
            _
        $region69: #{icews_evolvegcn_forward.9} parent=32 // pred_fallthru
          _
        // Predicated region
        $region70: #{icews_evolvegcn_forward.9} parent=32 // pred_check
          %p204 = pneg %p200
        $region71: #{icews_evolvegcn_forward.9} parent=32 // pred_check_branch
          %206 = sbr.rel (%p204) target = $region73
        $region72: #{icews_evolvegcn_forward.9} parent=32 // pred_region
          %s207 = sshllo.u32 0, 1
          loop: start=0, step=1, limit=1
          $region74: #{icews_evolvegcn_forward.9} parent=72 // loop_pre_header
            _
          $region75: #{icews_evolvegcn_forward.9} parent=72 // loop_header
            %s209 = sphi 0, %s213
            %p210 = scmp.ge.s32.totalorder %s209, 1
            %s214 = sphi %s196, %s196
            %s215 = sphi %s197, %s197
          $region76: #{icews_evolvegcn_forward.9} parent=72 // loop_header_branch
            %212 = sbr.rel (%p210) target = $region80
          $region77: #{icews_evolvegcn_forward.9} parent=72 // loop_body
            %v216 = vld [vmem:[%s214] sm:%s207]
            %217 = vst [vmem:[%s215] sm:%s207] %v216
          $region78: #{icews_evolvegcn_forward.9} parent=72 // loop_footer
            %s213 = sadd.s32 1, %s209
          $region79: #{icews_evolvegcn_forward.9} parent=72 // loop_footer_branch
            %208 = sbr.rel target = $region75
          $region80: #{icews_evolvegcn_forward.9} parent=72 // loop_exit
            _
        $region73: #{icews_evolvegcn_forward.9} parent=32 // pred_fallthru
          _
        // Predicated region
        $region92: #{icews_evolvegcn_forward.9} parent=32 // pred_check
          _
        $region93: #{icews_evolvegcn_forward.9} parent=32 // pred_check_branch
          %241 = sbr.rel (0) target = $region95
        $region94: #{icews_evolvegcn_forward.9} parent=32 // pred_region
          %242 = vsyncadd %s198, 16
        $region95: #{icews_evolvegcn_forward.9} parent=32 // pred_fallthru
          _
      $region33: #{icews_evolvegcn_forward.9} parent=27 // loop_footer
        %s146 = sadd.s32 1, %s142
      $region34: #{icews_evolvegcn_forward.9} parent=27 // loop_footer_branch
        %141 = sbr.rel target = $region30
      $region35: #{icews_evolvegcn_forward.9} parent=27 // loop_exit
        _
      loop: start=0, step=1, limit=128
      $region96: #{icews_evolvegcn_forward.9} parent=27 // loop_pre_header
        _
      $region97: #{icews_evolvegcn_forward.9} parent=27 // loop_header
        %s244 = sphi 0, %s248
        %p245 = scmp.ge.s32.totalorder %s244, 128
      $region98: #{icews_evolvegcn_forward.9} parent=27 // loop_header_branch
        %247 = sbr.rel (%p245) target = $region102
      $region99: #{icews_evolvegcn_forward.9} parent=27 // loop_body
        %s249 = smul.u32 1, 1
        %s250 = sshll.u32 %s249, 4
        %251 = dma.done [#allocation4], %s250
        %s252 = scalar_lea.sflag [#allocation4], 1
        %s253 = sshll.u32 %s249, 4
        %254 = dma.done %s252, %s253
      $region100: #{icews_evolvegcn_forward.9} parent=27 // loop_footer
        %s248 = sadd.s32 1, %s244
      $region101: #{icews_evolvegcn_forward.9} parent=27 // loop_footer_branch
        %243 = sbr.rel target = $region97
      $region102: #{icews_evolvegcn_forward.9} parent=27 // loop_exit
        _
      %v255 = vld [vmem:[#allocation2] sm:$0xff]
      %v256 = vld [vmem:[#allocation2 + $0x8] sm:$0xff]
      %v257 = vld [vmem:[#allocation2 + $0x10] sm:$0xff]
      %v258 = vld [vmem:[#allocation2 + $0x18] sm:$0xff]
      %v259 = vld [vmem:[#allocation2 + $0x20] sm:$0xff]
      %v260 = vld [vmem:[#allocation2 + $0x28] sm:$0xff]
      %v261 = vld [vmem:[#allocation2 + $0x30] sm:$0xff]
      %v262 = vld [vmem:[#allocation2 + $0x38] sm:$0xff]
      %v263 = vld [vmem:[#allocation2 + $0x40] sm:$0xff]
      %v264 = vld [vmem:[#allocation2 + $0x48] sm:$0xff]
      %v265 = vld [vmem:[#allocation2 + $0x50] sm:$0xff]
      %v266 = vld [vmem:[#allocation2 + $0x58] sm:$0xff]
      %v267 = vld [vmem:[#allocation2 + $0x60] sm:$0xff]
      %v268 = vld [vmem:[#allocation2 + $0x68] sm:$0xff]
      %v269 = vld [vmem:[#allocation2 + $0x70] sm:$0xff]
      %v270 = vld [vmem:[#allocation2 + $0x78] sm:$0xff]
      %v271 = vld [vmem:[#allocation3] sm:$0xff]
      %v272 = vld [vmem:[#allocation3 + $0x8] sm:$0xff]
      %v273 = vld [vmem:[#allocation3 + $0x10] sm:$0xff]
      %v274 = vld [vmem:[#allocation3 + $0x18] sm:$0xff]
      %v275 = vld [vmem:[#allocation3 + $0x20] sm:$0xff]
      %v276 = vld [vmem:[#allocation3 + $0x28] sm:$0xff]
      %v277 = vld [vmem:[#allocation3 + $0x30] sm:$0xff]
      %v278 = vld [vmem:[#allocation3 + $0x38] sm:$0xff]
      %v279 = vld [vmem:[#allocation3 + $0x40] sm:$0xff]
      %v280 = vld [vmem:[#allocation3 + $0x48] sm:$0xff]
      %v281 = vld [vmem:[#allocation3 + $0x50] sm:$0xff]
      %v282 = vld [vmem:[#allocation3 + $0x58] sm:$0xff]
      %v283 = vld [vmem:[#allocation3 + $0x60] sm:$0xff]
      %v284 = vld [vmem:[#allocation3 + $0x68] sm:$0xff]
      %v285 = vld [vmem:[#allocation3 + $0x70] sm:$0xff]
      %v286 = vld [vmem:[#allocation3 + $0x78] sm:$0xff]
      %v287 = vmul.f32 %v255, %v271
      %v288 = vmul.f32 %v256, %v272
      %v289 = vmul.f32 %v257, %v273
      %v290 = vmul.f32 %v258, %v274
      %v291 = vmul.f32 %v259, %v275
      %v292 = vmul.f32 %v260, %v276
      %v293 = vmul.f32 %v261, %v277
      %v294 = vmul.f32 %v262, %v278
      %v295 = vmul.f32 %v263, %v279
      %v296 = vmul.f32 %v264, %v280
      %v297 = vmul.f32 %v265, %v281
      %v298 = vmul.f32 %v266, %v282
      %v299 = vmul.f32 %v267, %v283
      %v300 = vmul.f32 %v268, %v284
      %v301 = vmul.f32 %v269, %v285
      %v302 = vmul.f32 %v270, %v286
      %v303 = vld [vmem:[%s3] sm:$0xff]
      %v304 = vld [vmem:[%s3 + $0x8] sm:$0xff]
      %v305 = vld [vmem:[%s3 + $0x10] sm:$0xff]
      %v306 = vld [vmem:[%s3 + $0x18] sm:$0xff]
      %v307 = vld [vmem:[%s3 + $0x20] sm:$0xff]
      %v308 = vld [vmem:[%s3 + $0x28] sm:$0xff]
      %v309 = vld [vmem:[%s3 + $0x30] sm:$0xff]
      %v310 = vld [vmem:[%s3 + $0x38] sm:$0xff]
      %v311 = vld [vmem:[%s3 + $0x40] sm:$0xff]
      %v312 = vld [vmem:[%s3 + $0x48] sm:$0xff]
      %v313 = vld [vmem:[%s3 + $0x50] sm:$0xff]
      %v314 = vld [vmem:[%s3 + $0x58] sm:$0xff]
      %v315 = vld [vmem:[%s3 + $0x60] sm:$0xff]
      %v316 = vld [vmem:[%s3 + $0x68] sm:$0xff]
      %v317 = vld [vmem:[%s3 + $0x70] sm:$0xff]
      %v318 = vld [vmem:[%s3 + $0x78] sm:$0xff]
      %v319 = vld [vmem:[#allocation8] sm:$0x1]
      %s320 = vtos %v319
      %v321 = vstv %s320
      %322 = vmatprep.subr.mxu0 0.0
      %323 = vmatpush1.msra.mxu0 %v303
      %324 = vmatprep.subr.mxu0 0.0
      %325 = vmatpush1.msra.mxu0 %v304
      %326 = vmatprep.subr.mxu0 0.0
      %327 = vmatpush1.msra.mxu0 %v305
      %328 = vmatprep.subr.mxu0 0.0
      %329 = vmatpush1.msra.mxu0 %v306
      %330 = vmatprep.subr.mxu0 0.0
      %331 = vmatpush1.msra.mxu0 %v307
      %332 = vmatprep.subr.mxu0 0.0
      %333 = vmatpush1.msra.mxu0 %v308
      %334 = vmatprep.subr.mxu0 0.0
      %335 = vmatpush1.msra.mxu0 %v309
      %336 = vmatprep.subr.mxu0 0.0
      %337 = vmatpush1.msra.mxu0 %v310
      %338 = vmatprep.subr.mxu0 0.0
      %339 = vmatpush1.msra.mxu0 %v311
      %340 = vmatprep.subr.mxu0 0.0
      %341 = vmatpush1.msra.mxu0 %v312
      %342 = vmatprep.subr.mxu0 0.0
      %343 = vmatpush1.msra.mxu0 %v313
      %344 = vmatprep.subr.mxu0 0.0
      %345 = vmatpush1.msra.mxu0 %v314
      %346 = vmatprep.subr.mxu0 0.0
      %347 = vmatpush1.msra.mxu0 %v315
      %348 = vmatprep.subr.mxu0 0.0
      %349 = vmatpush1.msra.mxu0 %v316
      %350 = vmatprep.subr.mxu0 0.0
      %351 = vmatpush1.msra.mxu0 %v317
      %352 = vmatprep.subr.mxu0 0.0
      %353 = vmatpush1.msra.mxu0 %v318
      %354 = vmatprep.subr.mxu0 0.0
      %355 = vmatpush1.msra.mxu0 0.0
      %356 = vmatprep.subr.mxu0 0.0
      %357 = vmatpush1.msra.mxu0 0.0
      %358 = vmatprep.subr.mxu0 0.0
      %359 = vmatpush1.msra.mxu0 0.0
      %360 = vmatprep.subr.mxu0 0.0
      %361 = vmatpush1.msra.mxu0 0.0
      %362 = vmatprep.subr.mxu0 0.0
      %363 = vmatpush1.msra.mxu0 0.0
      %364 = vmatprep.subr.mxu0 0.0
      %365 = vmatpush1.msra.mxu0 0.0
      %366 = vmatprep.subr.mxu0 0.0
      %367 = vmatpush1.msra.mxu0 0.0
      %368 = vmatprep.subr.mxu0 0.0
      %369 = vmatpush1.msra.mxu0 0.0
      %370 = vmatprep.subr.mxu0 0.0
      %371 = vmatpush1.msra.mxu0 0.0
      %372 = vmatprep.subr.mxu0 0.0
      %373 = vmatpush1.msra.mxu0 0.0
      %374 = vmatprep.subr.mxu0 0.0
      %375 = vmatpush1.msra.mxu0 0.0
      %376 = vmatprep.subr.mxu0 0.0
      %377 = vmatpush1.msra.mxu0 0.0
      %378 = vmatprep.subr.mxu0 0.0
      %379 = vmatpush1.msra.mxu0 0.0
      %380 = vmatprep.subr.mxu0 0.0
      %381 = vmatpush1.msra.mxu0 0.0
      %382 = vmatprep.subr.mxu0 0.0
      %383 = vmatpush1.msra.mxu0 0.0
      %384 = vmatprep.subr.mxu0 0.0
      %385 = vmatpush1.msra.mxu0 0.0
      %386 = vmatprep.mubr.f32.mxu0 0.0
      %387 = vmatmul.mubr.f32.gmra.mrb[0].mxu0 %v287
      %v388 = vpop.f32.mrb[0].mxu0
      %v389 = vadd.f32 %v321, %v388
      %v390 = vpop.f32.mrb[0].mxu0
      %391 = vmatprep.mubr.f32.mxu0 0.0
      %392 = vmatmul.mubr.f32.gmra.mrb[0].mxu0 %v288
      %v393 = vpop.f32.mrb[0].mxu0
      %v394 = vadd.f32 %v321, %v393
      %v395 = vpop.f32.mrb[0].mxu0
      %396 = vmatprep.mubr.f32.mxu0 0.0
      %397 = vmatmul.mubr.f32.gmra.mrb[0].mxu0 %v289
      %v398 = vpop.f32.mrb[0].mxu0
      %v399 = vadd.f32 %v321, %v398
      %v400 = vpop.f32.mrb[0].mxu0
      %401 = vmatprep.mubr.f32.mxu0 0.0
      %402 = vmatmul.mubr.f32.gmra.mrb[0].mxu0 %v290
      %v403 = vpop.f32.mrb[0].mxu0
      %v404 = vadd.f32 %v321, %v403
      %v405 = vpop.f32.mrb[0].mxu0
      %406 = vmatprep.mubr.f32.mxu0 0.0
      %407 = vmatmul.mubr.f32.gmra.mrb[0].mxu0 %v291
      %v408 = vpop.f32.mrb[0].mxu0
      %v409 = vadd.f32 %v321, %v408
      %v410 = vpop.f32.mrb[0].mxu0
      %411 = vmatprep.mubr.f32.mxu0 0.0
      %412 = vmatmul.mubr.f32.gmra.mrb[0].mxu0 %v292
      %v413 = vpop.f32.mrb[0].mxu0
      %v414 = vadd.f32 %v321, %v413
      %v415 = vpop.f32.mrb[0].mxu0
      %416 = vmatprep.mubr.f32.mxu0 0.0
      %417 = vmatmul.mubr.f32.gmra.mrb[0].mxu0 %v293
      %v418 = vpop.f32.mrb[0].mxu0
      %v419 = vadd.f32 %v321, %v418
      %v420 = vpop.f32.mrb[0].mxu0
      %421 = vmatprep.mubr.f32.mxu0 0.0
      %422 = vmatmul.mubr.f32.gmra.mrb[0].mxu0 %v294
      %v423 = vpop.f32.mrb[0].mxu0
      %v424 = vadd.f32 %v321, %v423
      %v425 = vpop.f32.mrb[0].mxu0
      %426 = vmatprep.mubr.f32.mxu0 0.0
      %427 = vmatmul.mubr.f32.gmra.mrb[0].mxu0 %v295
      %v428 = vpop.f32.mrb[0].mxu0
      %v429 = vadd.f32 %v321, %v428
      %v430 = vpop.f32.mrb[0].mxu0
      %431 = vmatprep.mubr.f32.mxu0 0.0
      %432 = vmatmul.mubr.f32.gmra.mrb[0].mxu0 %v296
      %v433 = vpop.f32.mrb[0].mxu0
      %v434 = vadd.f32 %v321, %v433
      %v435 = vpop.f32.mrb[0].mxu0
      %436 = vmatprep.mubr.f32.mxu0 0.0
      %437 = vmatmul.mubr.f32.gmra.mrb[0].mxu0 %v297
      %v438 = vpop.f32.mrb[0].mxu0
      %v439 = vadd.f32 %v321, %v438
      %v440 = vpop.f32.mrb[0].mxu0
      %441 = vmatprep.mubr.f32.mxu0 0.0
      %442 = vmatmul.mubr.f32.gmra.mrb[0].mxu0 %v298
      %v443 = vpop.f32.mrb[0].mxu0
      %v444 = vadd.f32 %v321, %v443
      %v445 = vpop.f32.mrb[0].mxu0
      %446 = vmatprep.mubr.f32.mxu0 0.0
      %447 = vmatmul.mubr.f32.gmra.mrb[0].mxu0 %v299
      %v448 = vpop.f32.mrb[0].mxu0
      %v449 = vadd.f32 %v321, %v448
      %v450 = vpop.f32.mrb[0].mxu0
      %451 = vmatprep.mubr.f32.mxu0 0.0
      %452 = vmatmul.mubr.f32.gmra.mrb[0].mxu0 %v300
      %v453 = vpop.f32.mrb[0].mxu0
      %v454 = vadd.f32 %v321, %v453
      %v455 = vpop.f32.mrb[0].mxu0
      %456 = vmatprep.mubr.f32.mxu0 0.0
      %457 = vmatmul.mubr.f32.gmra.mrb[0].mxu0 %v301
      %v458 = vpop.f32.mrb[0].mxu0
      %v459 = vadd.f32 %v321, %v458
      %v460 = vpop.f32.mrb[0].mxu0
      %461 = vmatprep.mubr.f32.mxu0 0.0
      %462 = vmatmul.mubr.f32.gmra.mrb[0].mxu0 %v302
      %v463 = vpop.f32.mrb[0].mxu0
      %v464 = vadd.f32 %v321, %v463
      %v465 = vpop.f32.mrb[0].mxu0
      %466 = vdwg.mxu0
      %vm467 = vcmask 7168
      %468 = vst.msk [vmem:[%s138] sm:$0xff] %vm467, %v389
      %469 = vst.msk [vmem:[%s138 + $0x8] sm:$0xff] %vm467, %v394
      %470 = vst.msk [vmem:[%s138 + $0x10] sm:$0xff] %vm467, %v399
      %471 = vst.msk [vmem:[%s138 + $0x18] sm:$0xff] %vm467, %v404
      %472 = vst.msk [vmem:[%s138 + $0x20] sm:$0xff] %vm467, %v409
      %473 = vst.msk [vmem:[%s138 + $0x28] sm:$0xff] %vm467, %v414
      %474 = vst.msk [vmem:[%s138 + $0x30] sm:$0xff] %vm467, %v419
      %475 = vst.msk [vmem:[%s138 + $0x38] sm:$0xff] %vm467, %v424
      %476 = vst.msk [vmem:[%s138 + $0x40] sm:$0xff] %vm467, %v429
      %477 = vst.msk [vmem:[%s138 + $0x48] sm:$0xff] %vm467, %v434
      %478 = vst.msk [vmem:[%s138 + $0x50] sm:$0xff] %vm467, %v439
      %479 = vst.msk [vmem:[%s138 + $0x58] sm:$0xff] %vm467, %v444
      %480 = vst.msk [vmem:[%s138 + $0x60] sm:$0xff] %vm467, %v449
      %481 = vst.msk [vmem:[%s138 + $0x68] sm:$0xff] %vm467, %v454
      %482 = vst.msk [vmem:[%s138 + $0x70] sm:$0xff] %vm467, %v459
      %483 = vst.msk [vmem:[%s138 + $0x78] sm:$0xff] %vm467, %v464
      %s484 = smul.u32 16, %s28
      %p485 = scmp.lt.s32.totalorder %s484, 31
      %s486 = scalar_select %p485, %s484, 31
      %s487 = smul.addr %s486, 8
      %s488 = scalar_lea.vmem %s5, %s487
      // Predicated region
      $region103: #{icews_evolvegcn_forward.9} parent=27 // pred_check
        %p489 = pneg %p88
      $region104: #{icews_evolvegcn_forward.9} parent=27 // pred_check_branch
        %491 = sbr.rel (%p489) target = $region106
      $region105: #{icews_evolvegcn_forward.9} parent=27 // pred_region
        %s492 = smul.u32 16, %s28
      $region106: #{icews_evolvegcn_forward.9} parent=27 // pred_fallthru
        _
    $region28: #{icews_evolvegcn_forward.9} parent=5 // pred_fallthru
      _
    %p493 = scmp.le.s32.totalorder 2, %s23
    // Predicated region
    $region107: #{icews_evolvegcn_forward.9} parent=5 // pred_check
      %p494 = pneg %p493
    $region108: #{icews_evolvegcn_forward.9} parent=5 // pred_check_branch
      %496 = sbr.rel (%p494) target = $region110
    $region109: #{icews_evolvegcn_forward.9} parent=5 // pred_region
      %s497 = ssub.s32 %s23, 2
      // Predicated region
      $region111: #{icews_evolvegcn_forward.9} parent=109 // pred_check
        %p498 = pneg %p94
      $region112: #{icews_evolvegcn_forward.9} parent=109 // pred_check_branch
        %500 = sbr.rel (%p498) target = $region114
      $region113: #{icews_evolvegcn_forward.9} parent=109 // pred_region
        %s501 = smul.u32 16, %s29
        %p502 = scmp.lt.s32.totalorder %s501, 31
        %s503 = scalar_select %p502, %s501, 31
        %s504 = smul.addr %s503, 8
        %s505 = scalar_lea.vmem %s5, %s504
      $region114: #{icews_evolvegcn_forward.9} parent=109 // pred_fallthru
        _
    $region110: #{icews_evolvegcn_forward.9} parent=5 // pred_fallthru
      _
  $region6: #{icews_evolvegcn_forward.9} parent=0 // loop_footer
    %s27 = sadd.s32 1, %s23
  $region7: #{icews_evolvegcn_forward.9} parent=0 // loop_footer_branch
    %22 = sbr.rel target = $region3
  $region8: #{icews_evolvegcn_forward.9} parent=0 // loop_exit
    _
  %506 = vsyncmov [#allocation4]
  %s507 = vpop.sfrf %506
  %p508 = scmp.eq.s32.totalorder %s507, 0
  %p509 = pneg %p508
  %511 = shalt.err (%p509)
  %s512 = scalar_lea.sflag [#allocation4], 1
  %513 = vsyncmov %s512
  %s514 = vpop.sfrf %513
  %p515 = scmp.eq.s32.totalorder %s514, 0
  %p516 = pneg %p515
  %518 = shalt.err (%p516)

// kernel: icews_evolvegcn_forward.8
$region0: #{icews_evolvegcn_forward.8}
  #allocation0 [shape = 'u32[]', space=smem, size = 0x4, offset = 0x4, fixed_abs, tag = 'smem constant byte address 0x4 - core index']
  #allocation1 [shape = 'u32[144,128]{1,0:T(1,128)}', space=vmem, size = 0x12000, scoped, tag = 'internal scratch']
  #allocation2 [shape = 'f32[256,128]{1,0:T(8,128)}', space=vmem, size = 0x20000, scoped, tag = 'scratch operand']
  %s0 = inlined_call_operand.vmem [shape: bf16[512,512], index: 0, kind: input, shape index: {}]
  %s1 = inlined_call_operand.vmem [shape: bf16[512,128], index: 1, kind: input, shape index: {}]
  %s2 = inlined_call_operand.vmem [shape: f32[512,128], index: 2, kind: output, shape index: {}]
  %s3 = sld [smem:[#allocation0]]
  $region87: #{icews_evolvegcn_forward.8} parent=0
    _
  %s5 = ssub.s32 1, %s3
  %s6 = scalar_select 0, %s5, %s3
  $region1: #{icews_evolvegcn_forward.8} parent=0
    #allocation3 [shape = 'u8[262144]{0}', space=vmem, size = 0x40000, scoped, tag = 'input window, operand 0']
    loop: start=0, step=1, limit=6
    $region2: #{icews_evolvegcn_forward.8} parent=1 // loop_pre_header
      _
    $region3: #{icews_evolvegcn_forward.8} parent=1 // loop_header
      %s8 = sphi 0, %s12
      %p9 = scmp.ge.s32.totalorder %s8, 6
      %s15 = sphi 0, %s27
      %s16 = sphi 0, %s23
      %s17 = sphi 0, %s15
      %s18 = sphi 0, %s16
      %s19 = sphi 0, %s17
      %s20 = sphi 0, %s18
      %s32 = sphi 0, %s34
      %s35 = sphi 0, %s32
      %s36 = sphi 0, %s35
      %s52 = sphi 0, %s36
      %s58 = sphi 0, %s60
      %s61 = sphi 0, %s58
      %s62 = sphi 0, %s61
      %s78 = sphi 0, %s62
      %s84 = sphi 0, %s86
      %s87 = sphi 0, %s84
      %s88 = sphi 0, %s87
      %s104 = sphi 0, %s88
    $region4: #{icews_evolvegcn_forward.8} parent=1 // loop_header_branch
      %11 = sbr.rel (%p9) target = $region8
    $region5: #{icews_evolvegcn_forward.8} parent=1 // loop_body
      %s13 = ssub.s32 %s8, 1
      %s14 = ssub.s32 %s8, 2
      %s21 = sadd.s32 1, %s16
      %p22 = scmp.ge.s32.totalorder %s21, 2
      %s23 = scalar_select %p22, 0, %s21
      %s24 = sadd.s32 1, %s15
      %s25 = scalar_select %p22, %s24, %s15
      %p26 = scmp.ge.s32.totalorder %s25, 2
      %s27 = scalar_select %p26, 0, %s25
      %s28 = ssub.s32 %s15, %s27
      %s29 = ssub.s32 %s16, %s23
      %s30 = sor.u32 %s28, %s29
      %p31 = scmp.eq.s32.totalorder %s30, 0
      %s33 = sadd.s32 %s32, 1
      %s34 = scalar_select %p31, %s32, %s33
      %p37 = pneg %p31
      %p38 = scmp.eq.s32.totalorder %s8, 3
      %p39 = por %p37, %p38
      %p40 = scmp.ne.s32.totalorder %s32, %s35
      %p41 = scmp.eq.s32.totalorder %s8, 0
      %p42 = por %p40, %p41
      %p43 = scmp.ne.s32.totalorder %s32, %s35
      %p44 = scmp.eq.s32.totalorder %s13, 3
      %p45 = por %p43, %p44
      %p46 = scmp.ne.s32.totalorder %s35, %s36
      %p47 = scmp.eq.s32.totalorder %s13, 0
      %p48 = por %p46, %p47
      %p49 = scmp.ne.s32.totalorder %s35, %s36
      %p50 = scmp.eq.s32.totalorder %s14, 3
      %p51 = por %p49, %p50
      %p53 = scmp.ne.s32.totalorder %s36, %s52
      %p54 = scmp.eq.s32.totalorder %s14, 0
      %p55 = por %p53, %p54
      %s56 = ssub.s32 %s16, %s23
      %p57 = scmp.eq.s32.totalorder %s56, 0
      %s59 = sadd.s32 %s58, 1
      %s60 = scalar_select %p57, %s58, %s59
      %p63 = pneg %p57
      %p64 = scmp.eq.s32.totalorder %s8, 3
      %p65 = por %p63, %p64
      %p66 = scmp.ne.s32.totalorder %s58, %s61
      %p67 = scmp.eq.s32.totalorder %s8, 0
      %p68 = por %p66, %p67
      %p69 = scmp.ne.s32.totalorder %s58, %s61
      %p70 = scmp.eq.s32.totalorder %s13, 3
      %p71 = por %p69, %p70
      %p72 = scmp.ne.s32.totalorder %s61, %s62
      %p73 = scmp.eq.s32.totalorder %s13, 0
      %p74 = por %p72, %p73
      %p75 = scmp.ne.s32.totalorder %s61, %s62
      %p76 = scmp.eq.s32.totalorder %s14, 3
      %p77 = por %p75, %p76
      %p79 = scmp.ne.s32.totalorder %s62, %s78
      %p80 = scmp.eq.s32.totalorder %s14, 0
      %p81 = por %p79, %p80
      %s82 = ssub.s32 %s15, %s27
      %p83 = scmp.eq.s32.totalorder %s82, 0
      %s85 = sadd.s32 %s84, 1
      %s86 = scalar_select %p83, %s84, %s85
      %p89 = pneg %p83
      %p90 = scmp.eq.s32.totalorder %s8, 3
      %p91 = por %p89, %p90
      %p92 = scmp.ne.s32.totalorder %s84, %s87
      %p93 = scmp.eq.s32.totalorder %s8, 0
      %p94 = por %p92, %p93
      %p95 = scmp.ne.s32.totalorder %s84, %s87
      %p96 = scmp.eq.s32.totalorder %s13, 3
      %p97 = por %p95, %p96
      %p98 = scmp.ne.s32.totalorder %s87, %s88
      %p99 = scmp.eq.s32.totalorder %s13, 0
      %p100 = por %p98, %p99
      %p101 = scmp.ne.s32.totalorder %s87, %s88
      %p102 = scmp.eq.s32.totalorder %s14, 3
      %p103 = por %p101, %p102
      %p105 = scmp.ne.s32.totalorder %s88, %s104
      %p106 = scmp.eq.s32.totalorder %s14, 0
      %p107 = por %p105, %p106
      %p108 = scmp.le.s32.totalorder 1, %s8
      %p109 = scmp.lt.s32.totalorder %s8, 5
      %p110 = pnand %p108, %p109
      %p111 = pneg %p110
      // Predicated region
      $region9: #{icews_evolvegcn_forward.8} parent=5 // pred_check
        _
      $region10: #{icews_evolvegcn_forward.8} parent=5 // pred_check_branch
        %113 = sbr.rel (%p110) target = $region12
      $region11: #{icews_evolvegcn_forward.8} parent=5 // pred_region
        %s114 = ssub.s32 %s8, 1
      $region12: #{icews_evolvegcn_forward.8} parent=5 // pred_fallthru
        _
      %p115 = scmp.lt.s32.totalorder %s8, 4
      // Predicated region
      $region13: #{icews_evolvegcn_forward.8} parent=5 // pred_check
        %p116 = pneg %p115
      $region14: #{icews_evolvegcn_forward.8} parent=5 // pred_check_branch
        %118 = sbr.rel (%p116) target = $region16
      $region15: #{icews_evolvegcn_forward.8} parent=5 // pred_region
        // Predicated region
        $region17: #{icews_evolvegcn_forward.8} parent=15 // pred_check
          %p119 = pneg %p42
        $region18: #{icews_evolvegcn_forward.8} parent=15 // pred_check_branch
          %121 = sbr.rel (%p119) target = $region20
        $region19: #{icews_evolvegcn_forward.8} parent=15 // pred_region
          %s122 = sand.u32 %s32, 1
          %s123 = sand.u32 %s32, 1
          %s124 = smul.addr %s123, 256
          %s125 = scalar_lea.vmem [#allocation3], %s124
          %s126 = smul.u32 32, %s15
          %s127 = smul.u32 2, %s16
          %s128 = smul.addr %s126, 4
          %s129 = sadd.s32 %s127, %s128
          %s130 = smul.addr %s129, 4
          %s131 = scalar_lea.vmem %s0, %s130
          // Predicated region
          $region21: #{icews_evolvegcn_forward.8} parent=19 // pred_check
            _
          $region22: #{icews_evolvegcn_forward.8} parent=19 // pred_check_branch
            %133 = sbr.rel (0) target = $region24
          $region23: #{icews_evolvegcn_forward.8} parent=19 // pred_region
            // Predicated region
            $region25: #{icews_evolvegcn_forward.8} parent=23 // pred_check
              _
            $region26: #{icews_evolvegcn_forward.8} parent=23 // pred_check_branch
              %135 = sbr.rel (0) target = $region28
            $region27: #{icews_evolvegcn_forward.8} parent=23 // pred_region
              // Predicated region
              $region40: #{icews_evolvegcn_forward.8} parent=27 // pred_check
                _
              $region41: #{icews_evolvegcn_forward.8} parent=27 // pred_check_branch
                %212 = sbr.rel (0) target = $region43
              $region42: #{icews_evolvegcn_forward.8} parent=27 // pred_region
                loop: start=0, step=1, limit=1
                $region44: #{icews_evolvegcn_forward.8} parent=42 // loop_pre_header
                  _
                $region45: #{icews_evolvegcn_forward.8} parent=42 // loop_header
                  %s214 = sphi 0, %s218
                  %p215 = scmp.ge.s32.totalorder %s214, 1
                  %s219 = sphi %s131, %s131
                  %s220 = sphi %s125, %s125
                $region46: #{icews_evolvegcn_forward.8} parent=42 // loop_header_branch
                  %217 = sbr.rel (%p215) target = $region50
                $region47: #{icews_evolvegcn_forward.8} parent=42 // loop_body
                  %v221 = vld [vmem:[%s219] sm:$0xff]
                  %222 = vst [vmem:[%s220] sm:$0xff] %v221
                  %v223 = vld [vmem:[%s219 + $0x10] sm:$0xff]
                  %224 = vst [vmem:[%s220 + $0x8] sm:$0xff] %v223
                  %v225 = vld [vmem:[%s219 + $0x20] sm:$0xff]
                  %226 = vst [vmem:[%s220 + $0x10] sm:$0xff] %v225
                  %v227 = vld [vmem:[%s219 + $0x30] sm:$0xff]
                  %228 = vst [vmem:[%s220 + $0x18] sm:$0xff] %v227
                  %v229 = vld [vmem:[%s219 + $0x40] sm:$0xff]
                  %230 = vst [vmem:[%s220 + $0x20] sm:$0xff] %v229
                  %v231 = vld [vmem:[%s219 + $0x50] sm:$0xff]
                  %232 = vst [vmem:[%s220 + $0x28] sm:$0xff] %v231
                  %v233 = vld [vmem:[%s219 + $0x60] sm:$0xff]
                  %234 = vst [vmem:[%s220 + $0x30] sm:$0xff] %v233
                  %v235 = vld [vmem:[%s219 + $0x70] sm:$0xff]
                  %236 = vst [vmem:[%s220 + $0x38] sm:$0xff] %v235
                  %v237 = vld [vmem:[%s219 + $0x80] sm:$0xff]
                  %238 = vst [vmem:[%s220 + $0x40] sm:$0xff] %v237
                  %v239 = vld [vmem:[%s219 + $0x90] sm:$0xff]
                  %240 = vst [vmem:[%s220 + $0x48] sm:$0xff] %v239
                  %v241 = vld [vmem:[%s219 + $0xa0] sm:$0xff]
                  %242 = vst [vmem:[%s220 + $0x50] sm:$0xff] %v241
                  %v243 = vld [vmem:[%s219 + $0xb0] sm:$0xff]
                  %244 = vst [vmem:[%s220 + $0x58] sm:$0xff] %v243
                  %v245 = vld [vmem:[%s219 + $0xc0] sm:$0xff]
                  %246 = vst [vmem:[%s220 + $0x60] sm:$0xff] %v245
                  %v247 = vld [vmem:[%s219 + $0xd0] sm:$0xff]
                  %248 = vst [vmem:[%s220 + $0x68] sm:$0xff] %v247
                  %v249 = vld [vmem:[%s219 + $0xe0] sm:$0xff]
                  %250 = vst [vmem:[%s220 + $0x70] sm:$0xff] %v249
                  %v251 = vld [vmem:[%s219 + $0xf0] sm:$0xff]
                  %252 = vst [vmem:[%s220 + $0x78] sm:$0xff] %v251
                  %v253 = vld [vmem:[%s219 + $0x100] sm:$0xff]
                  %254 = vst [vmem:[%s220 + $0x80] sm:$0xff] %v253
                  %v255 = vld [vmem:[%s219 + $0x110] sm:$0xff]
                  %256 = vst [vmem:[%s220 + $0x88] sm:$0xff] %v255
                  %v257 = vld [vmem:[%s219 + $0x120] sm:$0xff]
                  %258 = vst [vmem:[%s220 + $0x90] sm:$0xff] %v257
                  %v259 = vld [vmem:[%s219 + $0x130] sm:$0xff]
                  %260 = vst [vmem:[%s220 + $0x98] sm:$0xff] %v259
                  %v261 = vld [vmem:[%s219 + $0x140] sm:$0xff]
                  %262 = vst [vmem:[%s220 + $0xa0] sm:$0xff] %v261
                  %v263 = vld [vmem:[%s219 + $0x150] sm:$0xff]
                  %264 = vst [vmem:[%s220 + $0xa8] sm:$0xff] %v263
                  %v265 = vld [vmem:[%s219 + $0x160] sm:$0xff]
                  %266 = vst [vmem:[%s220 + $0xb0] sm:$0xff] %v265
                  %v267 = vld [vmem:[%s219 + $0x170] sm:$0xff]
                  %268 = vst [vmem:[%s220 + $0xb8] sm:$0xff] %v267
                  %v269 = vld [vmem:[%s219 + $0x180] sm:$0xff]
                  %270 = vst [vmem:[%s220 + $0xc0] sm:$0xff] %v269
                  %v271 = vld [vmem:[%s219 + $0x190] sm:$0xff]
                  %272 = vst [vmem:[%s220 + $0xc8] sm:$0xff] %v271
                  %v273 = vld [vmem:[%s219 + $0x1a0] sm:$0xff]
                  %274 = vst [vmem:[%s220 + $0xd0] sm:$0xff] %v273
                  %v275 = vld [vmem:[%s219 + $0x1b0] sm:$0xff]
                  %276 = vst [vmem:[%s220 + $0xd8] sm:$0xff] %v275
                  %v277 = vld [vmem:[%s219 + $0x1c0] sm:$0xff]
                  %278 = vst [vmem:[%s220 + $0xe0] sm:$0xff] %v277
                  %v279 = vld [vmem:[%s219 + $0x1d0] sm:$0xff]
                  %280 = vst [vmem:[%s220 + $0xe8] sm:$0xff] %v279
                  %v281 = vld [vmem:[%s219 + $0x1e0] sm:$0xff]
                  %282 = vst [vmem:[%s220 + $0xf0] sm:$0xff] %v281
                  %v283 = vld [vmem:[%s219 + $0x1f0] sm:$0xff]
                  %284 = vst [vmem:[%s220 + $0xf8] sm:$0xff] %v283
                $region48: #{icews_evolvegcn_forward.8} parent=42 // loop_footer
                  %s218 = sadd.s32 1, %s214
                $region49: #{icews_evolvegcn_forward.8} parent=42 // loop_footer_branch
                  %213 = sbr.rel target = $region45
                $region50: #{icews_evolvegcn_forward.8} parent=42 // loop_exit
                  _
              $region43: #{icews_evolvegcn_forward.8} parent=27 // pred_fallthru
                _
              // Predicated region
              $region51: #{icews_evolvegcn_forward.8} parent=27 // pred_check
                _
              $region52: #{icews_evolvegcn_forward.8} parent=27 // pred_check_branch
                %286 = sbr.rel target = $region54
              $region53: #{icews_evolvegcn_forward.8} parent=27 // pred_region
                _
              $region54: #{icews_evolvegcn_forward.8} parent=27 // pred_fallthru
                _
            $region28: #{icews_evolvegcn_forward.8} parent=23 // pred_fallthru
              _
            // Predicated region
            $region29: #{icews_evolvegcn_forward.8} parent=23 // pred_check
              _
            $region30: #{icews_evolvegcn_forward.8} parent=23 // pred_check_branch
              %137 = sbr.rel target = $region32
            $region31: #{icews_evolvegcn_forward.8} parent=23 // pred_region
              loop: start=0, step=1, limit=1
              $region33: #{icews_evolvegcn_forward.8} parent=31 // loop_pre_header
                _
              $region34: #{icews_evolvegcn_forward.8} parent=31 // loop_header
                %s140 = sphi 0, %s144
                %p141 = scmp.ge.s32.totalorder %s140, 1
                %s145 = sphi %s131, %s131
                %s146 = sphi %s125, %s125
              $region35: #{icews_evolvegcn_forward.8} parent=31 // loop_header_branch
                %143 = sbr.rel (%p141) target = $region39
              $region36: #{icews_evolvegcn_forward.8} parent=31 // loop_body
                %v147 = vld [vmem:[%s145] sm:$0xff]
                %148 = vst [vmem:[%s146] sm:$0xff] %v147
                %v149 = vld [vmem:[%s145 + $0x10] sm:$0xff]
                %150 = vst [vmem:[%s146 + $0x8] sm:$0xff] %v149
                %v151 = vld [vmem:[%s145 + $0x20] sm:$0xff]
                %152 = vst [vmem:[%s146 + $0x10] sm:$0xff] %v151
                %v153 = vld [vmem:[%s145 + $0x30] sm:$0xff]
                %154 = vst [vmem:[%s146 + $0x18] sm:$0xff] %v153
                %v155 = vld [vmem:[%s145 + $0x40] sm:$0xff]
                %156 = vst [vmem:[%s146 + $0x20] sm:$0xff] %v155
                %v157 = vld [vmem:[%s145 + $0x50] sm:$0xff]
                %158 = vst [vmem:[%s146 + $0x28] sm:$0xff] %v157
                %v159 = vld [vmem:[%s145 + $0x60] sm:$0xff]
                %160 = vst [vmem:[%s146 + $0x30] sm:$0xff] %v159
                %v161 = vld [vmem:[%s145 + $0x70] sm:$0xff]
                %162 = vst [vmem:[%s146 + $0x38] sm:$0xff] %v161
                %v163 = vld [vmem:[%s145 + $0x80] sm:$0xff]
                %164 = vst [vmem:[%s146 + $0x40] sm:$0xff] %v163
                %v165 = vld [vmem:[%s145 + $0x90] sm:$0xff]
                %166 = vst [vmem:[%s146 + $0x48] sm:$0xff] %v165
                %v167 = vld [vmem:[%s145 + $0xa0] sm:$0xff]
                %168 = vst [vmem:[%s146 + $0x50] sm:$0xff] %v167
                %v169 = vld [vmem:[%s145 + $0xb0] sm:$0xff]
                %170 = vst [vmem:[%s146 + $0x58] sm:$0xff] %v169
                %v171 = vld [vmem:[%s145 + $0xc0] sm:$0xff]
                %172 = vst [vmem:[%s146 + $0x60] sm:$0xff] %v171
                %v173 = vld [vmem:[%s145 + $0xd0] sm:$0xff]
                %174 = vst [vmem:[%s146 + $0x68] sm:$0xff] %v173
                %v175 = vld [vmem:[%s145 + $0xe0] sm:$0xff]
                %176 = vst [vmem:[%s146 + $0x70] sm:$0xff] %v175
                %v177 = vld [vmem:[%s145 + $0xf0] sm:$0xff]
                %178 = vst [vmem:[%s146 + $0x78] sm:$0xff] %v177
                %v179 = vld [vmem:[%s145 + $0x100] sm:$0xff]
                %180 = vst [vmem:[%s146 + $0x80] sm:$0xff] %v179
                %v181 = vld [vmem:[%s145 + $0x110] sm:$0xff]
                %182 = vst [vmem:[%s146 + $0x88] sm:$0xff] %v181
                %v183 = vld [vmem:[%s145 + $0x120] sm:$0xff]
                %184 = vst [vmem:[%s146 + $0x90] sm:$0xff] %v183
                %v185 = vld [vmem:[%s145 + $0x130] sm:$0xff]
                %186 = vst [vmem:[%s146 + $0x98] sm:$0xff] %v185
                %v187 = vld [vmem:[%s145 + $0x140] sm:$0xff]
                %188 = vst [vmem:[%s146 + $0xa0] sm:$0xff] %v187
                %v189 = vld [vmem:[%s145 + $0x150] sm:$0xff]
                %190 = vst [vmem:[%s146 + $0xa8] sm:$0xff] %v189
                %v191 = vld [vmem:[%s145 + $0x160] sm:$0xff]
                %192 = vst [vmem:[%s146 + $0xb0] sm:$0xff] %v191
                %v193 = vld [vmem:[%s145 + $0x170] sm:$0xff]
                %194 = vst [vmem:[%s146 + $0xb8] sm:$0xff] %v193
                %v195 = vld [vmem:[%s145 + $0x180] sm:$0xff]
                %196 = vst [vmem:[%s146 + $0xc0] sm:$0xff] %v195
                %v197 = vld [vmem:[%s145 + $0x190] sm:$0xff]
                %198 = vst [vmem:[%s146 + $0xc8] sm:$0xff] %v197
                %v199 = vld [vmem:[%s145 + $0x1a0] sm:$0xff]
                %200 = vst [vmem:[%s146 + $0xd0] sm:$0xff] %v199
                %v201 = vld [vmem:[%s145 + $0x1b0] sm:$0xff]
                %202 = vst [vmem:[%s146 + $0xd8] sm:$0xff] %v201
                %v203 = vld [vmem:[%s145 + $0x1c0] sm:$0xff]
                %204 = vst [vmem:[%s146 + $0xe0] sm:$0xff] %v203
                %v205 = vld [vmem:[%s145 + $0x1d0] sm:$0xff]
                %206 = vst [vmem:[%s146 + $0xe8] sm:$0xff] %v205
                %v207 = vld [vmem:[%s145 + $0x1e0] sm:$0xff]
                %208 = vst [vmem:[%s146 + $0xf0] sm:$0xff] %v207
                %v209 = vld [vmem:[%s145 + $0x1f0] sm:$0xff]
                %210 = vst [vmem:[%s146 + $0xf8] sm:$0xff] %v209
              $region37: #{icews_evolvegcn_forward.8} parent=31 // loop_footer
                %s144 = sadd.s32 1, %s140
              $region38: #{icews_evolvegcn_forward.8} parent=31 // loop_footer_branch
                %139 = sbr.rel target = $region34
              $region39: #{icews_evolvegcn_forward.8} parent=31 // loop_exit
                _
            $region32: #{icews_evolvegcn_forward.8} parent=23 // pred_fallthru
              _
          $region24: #{icews_evolvegcn_forward.8} parent=19 // pred_fallthru
            _
          %287 = vnop
        $region20: #{icews_evolvegcn_forward.8} parent=15 // pred_fallthru
          _
        // Predicated region
        $region55: #{icews_evolvegcn_forward.8} parent=15 // pred_check
          %p288 = pneg %p68
        $region56: #{icews_evolvegcn_forward.8} parent=15 // pred_check_branch
          %290 = sbr.rel (%p288) target = $region58
        $region57: #{icews_evolvegcn_forward.8} parent=15 // pred_region
          %s291 = smul.u32 32, %s16
          %p292 = scmp.lt.s32.totalorder %s291, 63
          %s293 = scalar_select %p292, %s291, 63
          %s294 = smul.addr %s293, 4
          %s295 = scalar_lea.vmem %s1, %s294
          %s296 = smul.u32 32, %s16
        $region58: #{icews_evolvegcn_forward.8} parent=15 // pred_fallthru
          _
      $region16: #{icews_evolvegcn_forward.8} parent=5 // pred_fallthru
        _
      %p297 = scmp.le.s32.totalorder 1, %s8
      %p298 = scmp.lt.s32.totalorder %s8, 5
      %p299 = pnand %p297, %p298
      %p300 = pneg %p299
      // Predicated region
      $region59: #{icews_evolvegcn_forward.8} parent=5 // pred_check
        _
      $region60: #{icews_evolvegcn_forward.8} parent=5 // pred_check_branch
        %302 = sbr.rel (%p299) target = $region62
      $region61: #{icews_evolvegcn_forward.8} parent=5 // pred_region
        %s303 = ssub.s32 %s8, 1
        %s304 = sand.u32 %s35, 1
        %s305 = sand.u32 %s35, 1
        %s306 = smul.addr %s305, 256
        %s307 = scalar_lea.vmem [#allocation3], %s306
        // Predicated region
        $region63: #{icews_evolvegcn_forward.8} parent=61 // pred_check
          %p308 = pneg %p48
        $region64: #{icews_evolvegcn_forward.8} parent=61 // pred_check_branch
          %310 = sbr.rel (%p308) target = $region66
        $region65: #{icews_evolvegcn_forward.8} parent=61 // pred_region
          _
        $region66: #{icews_evolvegcn_forward.8} parent=61 // pred_fallthru
          _
        %s311 = sand.u32 %s35, 1
        %s312 = sand.u32 %s35, 1
        %s313 = smul.addr %s312, 256
        %s314 = scalar_lea.vmem [#allocation3], %s313
        %p315 = pneg %p48
        %p316 = pneg %p45
        %s317 = smul.u32 32, %s18
        %p318 = scmp.lt.s32.totalorder %s317, 63
        %s319 = scalar_select %p318, %s317, 63
        %s320 = smul.addr %s319, 4
        %s321 = scalar_lea.vmem %s1, %s320
        %p322 = pneg %p74
        %p323 = pneg %p71
        %p324 = pneg %p100
        %p325 = pneg %p97
        %s326 = smul.u32 32, %s17
        %p327 = scmp.lt.s32.totalorder %s326, 63
        %s328 = scalar_select %p327, %s326, 63
        %s329 = smul.addr %s328, 8
        %s330 = scalar_lea.vmem %s2, %s329
        %s331 = smul.u32 32, %s17
        %s332 = smul.u32 2, %s18
        %s333 = smul.u32 32, %s18
        %p334 = scmp.lt.s32.totalorder %s333, 63
        %s335 = scalar_select %p334, %s333, 63
        %s336 = smul.addr %s335, 4
        %s337 = scalar_lea.vmem %s1, %s336
        %s338 = smul.u32 32, %s18
        %s339 = smul.u32 32, %s17
        %p340 = scmp.lt.s32.totalorder %s339, 63
        %s341 = scalar_select %p340, %s339, 63
        %s342 = smul.addr %s341, 8
        %s343 = scalar_lea.vmem %s2, %s342
        %s344 = smul.u32 32, %s17
        %p346 = scmp.eq.s32.totalorder %s18, 0
        // Predicated region
        $region67: #{icews_evolvegcn_forward.8} parent=61 // pred_check
          %p347 = pneg %p346
        $region68: #{icews_evolvegcn_forward.8} parent=61 // pred_check_branch
          %349 = sbr.rel (%p347) target = $region70
        $region69: #{icews_evolvegcn_forward.8} parent=61 // pred_region
          %350 = vst [vmem:[#allocation2] sm:$0xff] 0.0
          %351 = vst [vmem:[#allocation2 + $0x8] sm:$0xff] 0.0
          %352 = vst [vmem:[#allocation2 + $0x10] sm:$0xff] 0.0
          %353 = vst [vmem:[#allocation2 + $0x18] sm:$0xff] 0.0
          %354 = vst [vmem:[#allocation2 + $0x20] sm:$0xff] 0.0
          %355 = vst [vmem:[#allocation2 + $0x28] sm:$0xff] 0.0
          %356 = vst [vmem:[#allocation2 + $0x30] sm:$0xff] 0.0
          %357 = vst [vmem:[#allocation2 + $0x38] sm:$0xff] 0.0
          %358 = vst [vmem:[#allocation2 + $0x40] sm:$0xff] 0.0
          %359 = vst [vmem:[#allocation2 + $0x48] sm:$0xff] 0.0
          %360 = vst [vmem:[#allocation2 + $0x50] sm:$0xff] 0.0
          %361 = vst [vmem:[#allocation2 + $0x58] sm:$0xff] 0.0
          %362 = vst [vmem:[#allocation2 + $0x60] sm:$0xff] 0.0
          %363 = vst [vmem:[#allocation2 + $0x68] sm:$0xff] 0.0
          %364 = vst [vmem:[#allocation2 + $0x70] sm:$0xff] 0.0
          %365 = vst [vmem:[#allocation2 + $0x78] sm:$0xff] 0.0
          %366 = vst [vmem:[#allocation2 + $0x80] sm:$0xff] 0.0
          %367 = vst [vmem:[#allocation2 + $0x88] sm:$0xff] 0.0
          %368 = vst [vmem:[#allocation2 + $0x90] sm:$0xff] 0.0
          %369 = vst [vmem:[#allocation2 + $0x98] sm:$0xff] 0.0
          %370 = vst [vmem:[#allocation2 + $0xa0] sm:$0xff] 0.0
          %371 = vst [vmem:[#allocation2 + $0xa8] sm:$0xff] 0.0
          %372 = vst [vmem:[#allocation2 + $0xb0] sm:$0xff] 0.0
          %373 = vst [vmem:[#allocation2 + $0xb8] sm:$0xff] 0.0
          %374 = vst [vmem:[#allocation2 + $0xc0] sm:$0xff] 0.0
          %375 = vst [vmem:[#allocation2 + $0xc8] sm:$0xff] 0.0
          %376 = vst [vmem:[#allocation2 + $0xd0] sm:$0xff] 0.0
          %377 = vst [vmem:[#allocation2 + $0xd8] sm:$0xff] 0.0
          %378 = vst [vmem:[#allocation2 + $0xe0] sm:$0xff] 0.0
          %379 = vst [vmem:[#allocation2 + $0xe8] sm:$0xff] 0.0
          %380 = vst [vmem:[#allocation2 + $0xf0] sm:$0xff] 0.0
          %381 = vst [vmem:[#allocation2 + $0xf8] sm:$0xff] 0.0
        $region70: #{icews_evolvegcn_forward.8} parent=61 // pred_fallthru
          _
        %v382 = vld [vmem:[#allocation2] sm:$0xff]
        %v383 = vld [vmem:[#allocation2 + $0x8] sm:$0xff]
        %v384 = vld [vmem:[#allocation2 + $0x10] sm:$0xff]
        %v385 = vld [vmem:[#allocation2 + $0x18] sm:$0xff]
        %v386 = vld [vmem:[#allocation2 + $0x20] sm:$0xff]
        %v387 = vld [vmem:[#allocation2 + $0x28] sm:$0xff]
        %v388 = vld [vmem:[#allocation2 + $0x30] sm:$0xff]
        %v389 = vld [vmem:[#allocation2 + $0x38] sm:$0xff]
        %v390 = vld [vmem:[#allocation2 + $0x40] sm:$0xff]
        %v391 = vld [vmem:[#allocation2 + $0x48] sm:$0xff]
        %v392 = vld [vmem:[#allocation2 + $0x50] sm:$0xff]
        %v393 = vld [vmem:[#allocation2 + $0x58] sm:$0xff]
        %v394 = vld [vmem:[#allocation2 + $0x60] sm:$0xff]
        %v395 = vld [vmem:[#allocation2 + $0x68] sm:$0xff]
        %v396 = vld [vmem:[#allocation2 + $0x70] sm:$0xff]
        %v397 = vld [vmem:[#allocation2 + $0x78] sm:$0xff]
        %v398 = vld [vmem:[#allocation2 + $0x80] sm:$0xff]
        %v399 = vld [vmem:[#allocation2 + $0x88] sm:$0xff]
        %v400 = vld [vmem:[#allocation2 + $0x90] sm:$0xff]
        %v401 = vld [vmem:[#allocation2 + $0x98] sm:$0xff]
        %v402 = vld [vmem:[#allocation2 + $0xa0] sm:$0xff]
        %v403 = vld [vmem:[#allocation2 + $0xa8] sm:$0xff]
        %v404 = vld [vmem:[#allocation2 + $0xb0] sm:$0xff]
        %v405 = vld [vmem:[#allocation2 + $0xb8] sm:$0xff]
        %v406 = vld [vmem:[#allocation2 + $0xc0] sm:$0xff]
        %v407 = vld [vmem:[#allocation2 + $0xc8] sm:$0xff]
        %v408 = vld [vmem:[#allocation2 + $0xd0] sm:$0xff]
        %v409 = vld [vmem:[#allocation2 + $0xd8] sm:$0xff]
        %v410 = vld [vmem:[#allocation2 + $0xe0] sm:$0xff]
        %v411 = vld [vmem:[#allocation2 + $0xe8] sm:$0xff]
        %v412 = vld [vmem:[#allocation2 + $0xf0] sm:$0xff]
        %v413 = vld [vmem:[#allocation2 + $0xf8] sm:$0xff]
        %v414 = vld [vmem:[%s307] sm:$0xff]
        %v415 = vld [vmem:[%s307 + $0x8] sm:$0xff]
        %v416 = vld [vmem:[%s307 + $0x10] sm:$0xff]
        %v417 = vld [vmem:[%s307 + $0x18] sm:$0xff]
        %v418 = vld [vmem:[%s307 + $0x20] sm:$0xff]
        %v419 = vld [vmem:[%s307 + $0x28] sm:$0xff]
        %v420 = vld [vmem:[%s307 + $0x30] sm:$0xff]
        %v421 = vld [vmem:[%s307 + $0x38] sm:$0xff]
        %v422 = vld [vmem:[%s307 + $0x40] sm:$0xff]
        %v423 = vld [vmem:[%s307 + $0x48] sm:$0xff]
        %v424 = vld [vmem:[%s307 + $0x50] sm:$0xff]
        %v425 = vld [vmem:[%s307 + $0x58] sm:$0xff]
        %v426 = vld [vmem:[%s307 + $0x60] sm:$0xff]
        %v427 = vld [vmem:[%s307 + $0x68] sm:$0xff]
        %v428 = vld [vmem:[%s307 + $0x70] sm:$0xff]
        %v429 = vld [vmem:[%s307 + $0x78] sm:$0xff]
        %v430 = vld [vmem:[%s307 + $0x80] sm:$0xff]
        %v431 = vld [vmem:[%s307 + $0x88] sm:$0xff]
        %v432 = vld [vmem:[%s307 + $0x90] sm:$0xff]
        %v433 = vld [vmem:[%s307 + $0x98] sm:$0xff]
        %v434 = vld [vmem:[%s307 + $0xa0] sm:$0xff]
        %v435 = vld [vmem:[%s307 + $0xa8] sm:$0xff]
        %v436 = vld [vmem:[%s307 + $0xb0] sm:$0xff]
        %v437 = vld [vmem:[%s307 + $0xb8] sm:$0xff]
        %v438 = vld [vmem:[%s307 + $0xc0] sm:$0xff]
        %v439 = vld [vmem:[%s307 + $0xc8] sm:$0xff]
        %v440 = vld [vmem:[%s307 + $0xd0] sm:$0xff]
        %v441 = vld [vmem:[%s307 + $0xd8] sm:$0xff]
        %v442 = vld [vmem:[%s307 + $0xe0] sm:$0xff]
        %v443 = vld [vmem:[%s307 + $0xe8] sm:$0xff]
        %v444 = vld [vmem:[%s307 + $0xf0] sm:$0xff]
        %v445 = vld [vmem:[%s307 + $0xf8] sm:$0xff]
        %v446 = vld [vmem:[%s337] sm:$0xf]
        %v447 = vld [vmem:[%s337 + $0x4] sm:$0xf]
        %v448 = vld [vmem:[%s337 + $0x8] sm:$0xf]
        %v449 = vld [vmem:[%s337 + $0xc] sm:$0xf]
        %v450 = vld [vmem:[%s337 + $0x10] sm:$0xf]
        %v451 = vld [vmem:[%s337 + $0x14] sm:$0xf]
        %v452 = vld [vmem:[%s337 + $0x18] sm:$0xf]
        %v453 = vld [vmem:[%s337 + $0x1c] sm:$0xf]
        %v454 = vld [vmem:[%s337 + $0x20] sm:$0xf]
        %v455 = vld [vmem:[%s337 + $0x24] sm:$0xf]
        %v456 = vld [vmem:[%s337 + $0x28] sm:$0xf]
        %v457 = vld [vmem:[%s337 + $0x2c] sm:$0xf]
        %v458 = vld [vmem:[%s337 + $0x30] sm:$0xf]
        %v459 = vld [vmem:[%s337 + $0x34] sm:$0xf]
        %v460 = vld [vmem:[%s337 + $0x38] sm:$0xf]
        %v461 = vld [vmem:[%s337 + $0x3c] sm:$0xf]
        %v462 = vld [vmem:[%s337 + $0x40] sm:$0xf]
        %v463 = vld [vmem:[%s337 + $0x44] sm:$0xf]
        %v464 = vld [vmem:[%s337 + $0x48] sm:$0xf]
        %v465 = vld [vmem:[%s337 + $0x4c] sm:$0xf]
        %v466 = vld [vmem:[%s337 + $0x50] sm:$0xf]
        %v467 = vld [vmem:[%s337 + $0x54] sm:$0xf]
        %v468 = vld [vmem:[%s337 + $0x58] sm:$0xf]
        %v469 = vld [vmem:[%s337 + $0x5c] sm:$0xf]
        %v470 = vld [vmem:[%s337 + $0x60] sm:$0xf]
        %v471 = vld [vmem:[%s337 + $0x64] sm:$0xf]
        %v472 = vld [vmem:[%s337 + $0x68] sm:$0xf]
        %v473 = vld [vmem:[%s337 + $0x6c] sm:$0xf]
        %v474 = vld [vmem:[%s337 + $0x70] sm:$0xf]
        %v475 = vld [vmem:[%s337 + $0x74] sm:$0xf]
        %v476 = vld [vmem:[%s337 + $0x78] sm:$0xf]
        %v477 = vld [vmem:[%s337 + $0x7c] sm:$0xf]
        %v510 = vunpack.c.l.b16 %v414
        %v511 = vunpack.c.h.b16 %v414
        %v512 = vunpack.c.l.b16 %v415
        %v513 = vunpack.c.h.b16 %v415
        %v514 = vunpack.c.l.b16 %v416
        %v515 = vunpack.c.h.b16 %v416
        %v516 = vunpack.c.l.b16 %v417
        %v517 = vunpack.c.h.b16 %v417
        %v518 = vunpack.c.l.b16 %v418
        %v519 = vunpack.c.h.b16 %v418
        %v520 = vunpack.c.l.b16 %v419
        %v521 = vunpack.c.h.b16 %v419
        %v522 = vunpack.c.l.b16 %v420
        %v523 = vunpack.c.h.b16 %v420
        %v524 = vunpack.c.l.b16 %v421
        %v525 = vunpack.c.h.b16 %v421
        %v526 = vunpack.c.l.b16 %v422
        %v527 = vunpack.c.h.b16 %v422
        %v528 = vunpack.c.l.b16 %v423
        %v529 = vunpack.c.h.b16 %v423
        %v530 = vunpack.c.l.b16 %v424
        %v531 = vunpack.c.h.b16 %v424
        %v532 = vunpack.c.l.b16 %v425
        %v533 = vunpack.c.h.b16 %v425
        %v534 = vunpack.c.l.b16 %v426
        %v535 = vunpack.c.h.b16 %v426
        %v536 = vunpack.c.l.b16 %v427
        %v537 = vunpack.c.h.b16 %v427
        %v538 = vunpack.c.l.b16 %v428
        %v539 = vunpack.c.h.b16 %v428
        %v540 = vunpack.c.l.b16 %v429
        %v541 = vunpack.c.h.b16 %v429
        %v542 = vunpack.c.l.b16 %v430
        %v543 = vunpack.c.h.b16 %v430
        %v544 = vunpack.c.l.b16 %v431
        %v545 = vunpack.c.h.b16 %v431
        %v546 = vunpack.c.l.b16 %v432
        %v547 = vunpack.c.h.b16 %v432
        %v548 = vunpack.c.l.b16 %v433
        %v549 = vunpack.c.h.b16 %v433
        %v550 = vunpack.c.l.b16 %v434
        %v551 = vunpack.c.h.b16 %v434
        %v552 = vunpack.c.l.b16 %v435
        %v553 = vunpack.c.h.b16 %v435
        %v554 = vunpack.c.l.b16 %v436
        %v555 = vunpack.c.h.b16 %v436
        %v556 = vunpack.c.l.b16 %v437
        %v557 = vunpack.c.h.b16 %v437
        %v558 = vunpack.c.l.b16 %v438
        %v559 = vunpack.c.h.b16 %v438
        %v560 = vunpack.c.l.b16 %v439
        %v561 = vunpack.c.h.b16 %v439
        %v562 = vunpack.c.l.b16 %v440
        %v563 = vunpack.c.h.b16 %v440
        %v564 = vunpack.c.l.b16 %v441
        %v565 = vunpack.c.h.b16 %v441
        %v566 = vunpack.c.l.b16 %v442
        %v567 = vunpack.c.h.b16 %v442
        %v568 = vunpack.c.l.b16 %v443
        %v569 = vunpack.c.h.b16 %v443
        %v570 = vunpack.c.l.b16 %v444
        %v571 = vunpack.c.h.b16 %v444
        %v572 = vunpack.c.l.b16 %v445
        %v573 = vunpack.c.h.b16 %v445
        %v574 = vpack.c.b16 %v512, %v510
        %v575 = vpack.c.b16 %v513, %v511
        %v576 = vpack.c.b16 %v516, %v514
        %v577 = vpack.c.b16 %v517, %v515
        %v578 = vpack.c.b16 %v520, %v518
        %v579 = vpack.c.b16 %v521, %v519
        %v580 = vpack.c.b16 %v524, %v522
        %v581 = vpack.c.b16 %v525, %v523
        %v582 = vpack.c.b16 %v528, %v526
        %v583 = vpack.c.b16 %v529, %v527
        %v584 = vpack.c.b16 %v532, %v530
        %v585 = vpack.c.b16 %v533, %v531
        %v586 = vpack.c.b16 %v536, %v534
        %v587 = vpack.c.b16 %v537, %v535
        %v588 = vpack.c.b16 %v540, %v538
        %v589 = vpack.c.b16 %v541, %v539
        %v590 = vpack.c.b16 %v544, %v542
        %v591 = vpack.c.b16 %v545, %v543
        %v592 = vpack.c.b16 %v548, %v546
        %v593 = vpack.c.b16 %v549, %v547
        %v594 = vpack.c.b16 %v552, %v550
        %v595 = vpack.c.b16 %v553, %v551
        %v596 = vpack.c.b16 %v556, %v554
        %v597 = vpack.c.b16 %v557, %v555
        %v598 = vpack.c.b16 %v560, %v558
        %v599 = vpack.c.b16 %v561, %v559
        %v600 = vpack.c.b16 %v564, %v562
        %v601 = vpack.c.b16 %v565, %v563
        %v602 = vpack.c.b16 %v568, %v566
        %v603 = vpack.c.b16 %v569, %v567
        %v604 = vpack.c.b16 %v572, %v570
        %v605 = vpack.c.b16 %v573, %v571
        %v670 = vunpack.c.l.b16 %v446
        %v671 = vunpack.c.l.b16 %v447
        %v672 = vunpack.c.l.b16 %v448
        %v673 = vunpack.c.l.b16 %v449
        %v674 = vunpack.c.l.b16 %v450
        %v675 = vunpack.c.l.b16 %v451
        %v676 = vunpack.c.l.b16 %v452
        %v677 = vunpack.c.l.b16 %v453
        %v678 = vunpack.c.l.b16 %v454
        %v679 = vunpack.c.l.b16 %v455
        %v680 = vunpack.c.l.b16 %v456
        %v681 = vunpack.c.l.b16 %v457
        %v682 = vunpack.c.l.b16 %v458
        %v683 = vunpack.c.l.b16 %v459
        %v684 = vunpack.c.l.b16 %v460
        %v685 = vunpack.c.l.b16 %v461
        %v686 = vunpack.c.l.b16 %v462
        %v687 = vunpack.c.l.b16 %v463
        %v688 = vunpack.c.l.b16 %v464
        %v689 = vunpack.c.l.b16 %v465
        %v690 = vunpack.c.l.b16 %v466
        %v691 = vunpack.c.l.b16 %v467
        %v692 = vunpack.c.l.b16 %v468
        %v693 = vunpack.c.l.b16 %v469
        %v694 = vunpack.c.l.b16 %v470
        %v695 = vunpack.c.l.b16 %v471
        %v696 = vunpack.c.l.b16 %v472
        %v697 = vunpack.c.l.b16 %v473
        %v698 = vunpack.c.l.b16 %v474
        %v699 = vunpack.c.l.b16 %v475
        %v700 = vunpack.c.l.b16 %v476
        %v701 = vunpack.c.l.b16 %v477
        %v702 = vpack.c.b16 %v671, %v670
        %v703 = vpack.c.b16 %v673, %v672
        %v704 = vpack.c.b16 %v675, %v674
        %v705 = vpack.c.b16 %v677, %v676
        %v706 = vpack.c.b16 %v679, %v678
        %v707 = vpack.c.b16 %v681, %v680
        %v708 = vpack.c.b16 %v683, %v682
        %v709 = vpack.c.b16 %v685, %v684
        %v710 = vpack.c.b16 %v687, %v686
        %v711 = vpack.c.b16 %v689, %v688
        %v712 = vpack.c.b16 %v691, %v690
        %v713 = vpack.c.b16 %v693, %v692
        %v714 = vpack.c.b16 %v695, %v694
        %v715 = vpack.c.b16 %v697, %v696
        %v716 = vpack.c.b16 %v699, %v698
        %v717 = vpack.c.b16 %v701, %v700
        %734 = vmatprep.subr.bf16.mxu0 0
        %735 = vmatpush1.bf16.msra.mxu0 %v702
        %736 = vmatprep.subr.bf16.mxu0 0
        %737 = vmatpush1.bf16.msra.mxu0 %v703
        %738 = vmatprep.subr.bf16.mxu0 0
        %739 = vmatpush1.bf16.msra.mxu0 %v704
        %740 = vmatprep.subr.bf16.mxu0 0
        %741 = vmatpush1.bf16.msra.mxu0 %v705
        %742 = vmatprep.subr.bf16.mxu0 0
        %743 = vmatpush1.bf16.msra.mxu0 %v706
        %744 = vmatprep.subr.bf16.mxu0 0
        %745 = vmatpush1.bf16.msra.mxu0 %v707
        %746 = vmatprep.subr.bf16.mxu0 0
        %747 = vmatpush1.bf16.msra.mxu0 %v708
        %748 = vmatprep.subr.bf16.mxu0 0
        %749 = vmatpush1.bf16.msra.mxu0 %v709
        %750 = vmatprep.subr.bf16.mxu0 0
        %751 = vmatpush1.bf16.msra.mxu0 %v710
        %752 = vmatprep.subr.bf16.mxu0 0
        %753 = vmatpush1.bf16.msra.mxu0 %v711
        %754 = vmatprep.subr.bf16.mxu0 0
        %755 = vmatpush1.bf16.msra.mxu0 %v712
        %756 = vmatprep.subr.bf16.mxu0 0
        %757 = vmatpush1.bf16.msra.mxu0 %v713
        %758 = vmatprep.subr.bf16.mxu0 0
        %759 = vmatpush1.bf16.msra.mxu0 %v714
        %760 = vmatprep.subr.bf16.mxu0 0
        %761 = vmatpush1.bf16.msra.mxu0 %v715
        %762 = vmatprep.subr.bf16.mxu0 0
        %763 = vmatpush1.bf16.msra.mxu0 %v716
        %764 = vmatprep.subr.bf16.mxu0 0
        %765 = vmatpush1.bf16.msra.mxu0 %v717
        %766 = vmatprep.mubr.bf16.mxu0 %v575
        %767 = vmatmul.mubr.bf16.gmra.mrb[0].mxu0 %v574
        %v768 = vpop.f32.mrb[0].mxu0
        %v769 = vadd.f32 0.0, %v768
        %v770 = vpop.f32.mrb[0].mxu0
        %v771 = vpop.f32.mrb[0].mxu0
        %v772 = vadd.f32 0.0, %v771
        %v773 = vpop.f32.mrb[0].mxu0
        %774 = vmatprep.mubr.bf16.mxu0 %v577
        %775 = vmatmul.mubr.bf16.gmra.mrb[0].mxu0 %v576
        %v776 = vpop.f32.mrb[0].mxu0
        %v777 = vadd.f32 0.0, %v776
        %v778 = vpop.f32.mrb[0].mxu0
        %v779 = vpop.f32.mrb[0].mxu0
        %v780 = vadd.f32 0.0, %v779
        %v781 = vpop.f32.mrb[0].mxu0
        %782 = vmatprep.mubr.bf16.mxu0 %v579
        %783 = vmatmul.mubr.bf16.gmra.mrb[0].mxu0 %v578
        %v784 = vpop.f32.mrb[0].mxu0
        %v785 = vadd.f32 0.0, %v784
        %v786 = vpop.f32.mrb[0].mxu0
        %v787 = vpop.f32.mrb[0].mxu0
        %v788 = vadd.f32 0.0, %v787
        %v789 = vpop.f32.mrb[0].mxu0
        %790 = vmatprep.mubr.bf16.mxu0 %v581
        %791 = vmatmul.mubr.bf16.gmra.mrb[0].mxu0 %v580
        %v792 = vpop.f32.mrb[0].mxu0
        %v793 = vadd.f32 0.0, %v792
        %v794 = vpop.f32.mrb[0].mxu0
        %v795 = vpop.f32.mrb[0].mxu0
        %v796 = vadd.f32 0.0, %v795
        %v797 = vpop.f32.mrb[0].mxu0
        %798 = vmatprep.mubr.bf16.mxu0 %v583
        %799 = vmatmul.mubr.bf16.gmra.mrb[0].mxu0 %v582
        %v800 = vpop.f32.mrb[0].mxu0
        %v801 = vadd.f32 0.0, %v800
        %v802 = vpop.f32.mrb[0].mxu0
        %v803 = vpop.f32.mrb[0].mxu0
        %v804 = vadd.f32 0.0, %v803
        %v805 = vpop.f32.mrb[0].mxu0
        %806 = vmatprep.mubr.bf16.mxu0 %v585
        %807 = vmatmul.mubr.bf16.gmra.mrb[0].mxu0 %v584
        %v808 = vpop.f32.mrb[0].mxu0
        %v809 = vadd.f32 0.0, %v808
        %v810 = vpop.f32.mrb[0].mxu0
        %v811 = vpop.f32.mrb[0].mxu0
        %v812 = vadd.f32 0.0, %v811
        %v813 = vpop.f32.mrb[0].mxu0
        %814 = vmatprep.mubr.bf16.mxu0 %v587
        %815 = vmatmul.mubr.bf16.gmra.mrb[0].mxu0 %v586
        %v816 = vpop.f32.mrb[0].mxu0
        %v817 = vadd.f32 0.0, %v816
        %v818 = vpop.f32.mrb[0].mxu0
        %v819 = vpop.f32.mrb[0].mxu0
        %v820 = vadd.f32 0.0, %v819
        %v821 = vpop.f32.mrb[0].mxu0
        %822 = vmatprep.mubr.bf16.mxu0 %v589
        %823 = vmatmul.mubr.bf16.gmra.mrb[0].mxu0 %v588
        %v824 = vpop.f32.mrb[0].mxu0
        %v825 = vadd.f32 0.0, %v824
        %v826 = vpop.f32.mrb[0].mxu0
        %v827 = vpop.f32.mrb[0].mxu0
        %v828 = vadd.f32 0.0, %v827
        %v829 = vpop.f32.mrb[0].mxu0
        %830 = vmatprep.mubr.bf16.mxu0 %v591
        %831 = vmatmul.mubr.bf16.gmra.mrb[0].mxu0 %v590
        %v832 = vpop.f32.mrb[0].mxu0
        %v833 = vadd.f32 0.0, %v832
        %v834 = vpop.f32.mrb[0].mxu0
        %v835 = vpop.f32.mrb[0].mxu0
        %v836 = vadd.f32 0.0, %v835
        %v837 = vpop.f32.mrb[0].mxu0
        %838 = vmatprep.mubr.bf16.mxu0 %v593
        %839 = vmatmul.mubr.bf16.gmra.mrb[0].mxu0 %v592
        %v840 = vpop.f32.mrb[0].mxu0
        %v841 = vadd.f32 0.0, %v840
        %v842 = vpop.f32.mrb[0].mxu0
        %v843 = vpop.f32.mrb[0].mxu0
        %v844 = vadd.f32 0.0, %v843
        %v845 = vpop.f32.mrb[0].mxu0
        %846 = vmatprep.mubr.bf16.mxu0 %v595
        %847 = vmatmul.mubr.bf16.gmra.mrb[0].mxu0 %v594
        %v848 = vpop.f32.mrb[0].mxu0
        %v849 = vadd.f32 0.0, %v848
        %v850 = vpop.f32.mrb[0].mxu0
        %v851 = vpop.f32.mrb[0].mxu0
        %v852 = vadd.f32 0.0, %v851
        %v853 = vpop.f32.mrb[0].mxu0
        %854 = vmatprep.mubr.bf16.mxu0 %v597
        %855 = vmatmul.mubr.bf16.gmra.mrb[0].mxu0 %v596
        %v856 = vpop.f32.mrb[0].mxu0
        %v857 = vadd.f32 0.0, %v856
        %v858 = vpop.f32.mrb[0].mxu0
        %v859 = vpop.f32.mrb[0].mxu0
        %v860 = vadd.f32 0.0, %v859
        %v861 = vpop.f32.mrb[0].mxu0
        %862 = vmatprep.mubr.bf16.mxu0 %v599
        %863 = vmatmul.mubr.bf16.gmra.mrb[0].mxu0 %v598
        %v864 = vpop.f32.mrb[0].mxu0
        %v865 = vadd.f32 0.0, %v864
        %v866 = vpop.f32.mrb[0].mxu0
        %v867 = vpop.f32.mrb[0].mxu0
        %v868 = vadd.f32 0.0, %v867
        %v869 = vpop.f32.mrb[0].mxu0
        %870 = vmatprep.mubr.bf16.mxu0 %v601
        %871 = vmatmul.mubr.bf16.gmra.mrb[0].mxu0 %v600
        %v872 = vpop.f32.mrb[0].mxu0
        %v873 = vadd.f32 0.0, %v872
        %v874 = vpop.f32.mrb[0].mxu0
        %v875 = vpop.f32.mrb[0].mxu0
        %v876 = vadd.f32 0.0, %v875
        %v877 = vpop.f32.mrb[0].mxu0
        %878 = vmatprep.mubr.bf16.mxu0 %v603
        %879 = vmatmul.mubr.bf16.gmra.mrb[0].mxu0 %v602
        %v880 = vpop.f32.mrb[0].mxu0
        %v881 = vadd.f32 0.0, %v880
        %v882 = vpop.f32.mrb[0].mxu0
        %v883 = vpop.f32.mrb[0].mxu0
        %v884 = vadd.f32 0.0, %v883
        %v885 = vpop.f32.mrb[0].mxu0
        %886 = vmatprep.mubr.bf16.mxu0 %v605
        %887 = vmatmul.mubr.bf16.gmra.mrb[0].mxu0 %v604
        %v888 = vpop.f32.mrb[0].mxu0
        %v889 = vadd.f32 0.0, %v888
        %v890 = vpop.f32.mrb[0].mxu0
        %v891 = vpop.f32.mrb[0].mxu0
        %v892 = vadd.f32 0.0, %v891
        %v893 = vpop.f32.mrb[0].mxu0
        %894 = vdwg.mxu0
        %v895 = vadd.f32 %v382, %v769
        %v896 = vadd.f32 %v383, %v772
        %v897 = vadd.f32 %v384, %v777
        %v898 = vadd.f32 %v385, %v780
        %v899 = vadd.f32 %v386, %v785
        %v900 = vadd.f32 %v387, %v788
        %v901 = vadd.f32 %v388, %v793
        %v902 = vadd.f32 %v389, %v796
        %v903 = vadd.f32 %v390, %v801
        %v904 = vadd.f32 %v391, %v804
        %v905 = vadd.f32 %v392, %v809
        %v906 = vadd.f32 %v393, %v812
        %v907 = vadd.f32 %v394, %v817
        %v908 = vadd.f32 %v395, %v820
        %v909 = vadd.f32 %v396, %v825
        %v910 = vadd.f32 %v397, %v828
        %v911 = vadd.f32 %v398, %v833
        %v912 = vadd.f32 %v399, %v836
        %v913 = vadd.f32 %v400, %v841
        %v914 = vadd.f32 %v401, %v844
        %v915 = vadd.f32 %v402, %v849
        %v916 = vadd.f32 %v403, %v852
        %v917 = vadd.f32 %v404, %v857
        %v918 = vadd.f32 %v405, %v860
        %v919 = vadd.f32 %v406, %v865
        %v920 = vadd.f32 %v407, %v868
        %v921 = vadd.f32 %v408, %v873
        %v922 = vadd.f32 %v409, %v876
        %v923 = vadd.f32 %v410, %v881
        %v924 = vadd.f32 %v411, %v884
        %v925 = vadd.f32 %v412, %v889
        %v926 = vadd.f32 %v413, %v892
        %927 = vst [vmem:[#allocation2] sm:$0xff] %v895
        %928 = vst [vmem:[#allocation2 + $0x8] sm:$0xff] %v896
        %929 = vst [vmem:[#allocation2 + $0x10] sm:$0xff] %v897
        %930 = vst [vmem:[#allocation2 + $0x18] sm:$0xff] %v898
        %931 = vst [vmem:[#allocation2 + $0x20] sm:$0xff] %v899
        %932 = vst [vmem:[#allocation2 + $0x28] sm:$0xff] %v900
        %933 = vst [vmem:[#allocation2 + $0x30] sm:$0xff] %v901
        %934 = vst [vmem:[#allocation2 + $0x38] sm:$0xff] %v902
        %935 = vst [vmem:[#allocation2 + $0x40] sm:$0xff] %v903
        %936 = vst [vmem:[#allocation2 + $0x48] sm:$0xff] %v904
        %937 = vst [vmem:[#allocation2 + $0x50] sm:$0xff] %v905
        %938 = vst [vmem:[#allocation2 + $0x58] sm:$0xff] %v906
        %939 = vst [vmem:[#allocation2 + $0x60] sm:$0xff] %v907
        %940 = vst [vmem:[#allocation2 + $0x68] sm:$0xff] %v908
        %941 = vst [vmem:[#allocation2 + $0x70] sm:$0xff] %v909
        %942 = vst [vmem:[#allocation2 + $0x78] sm:$0xff] %v910
        %943 = vst [vmem:[#allocation2 + $0x80] sm:$0xff] %v911
        %944 = vst [vmem:[#allocation2 + $0x88] sm:$0xff] %v912
        %945 = vst [vmem:[#allocation2 + $0x90] sm:$0xff] %v913
        %946 = vst [vmem:[#allocation2 + $0x98] sm:$0xff] %v914
        %947 = vst [vmem:[#allocation2 + $0xa0] sm:$0xff] %v915
        %948 = vst [vmem:[#allocation2 + $0xa8] sm:$0xff] %v916
        %949 = vst [vmem:[#allocation2 + $0xb0] sm:$0xff] %v917
        %950 = vst [vmem:[#allocation2 + $0xb8] sm:$0xff] %v918
        %951 = vst [vmem:[#allocation2 + $0xc0] sm:$0xff] %v919
        %952 = vst [vmem:[#allocation2 + $0xc8] sm:$0xff] %v920
        %953 = vst [vmem:[#allocation2 + $0xd0] sm:$0xff] %v921
        %954 = vst [vmem:[#allocation2 + $0xd8] sm:$0xff] %v922
        %955 = vst [vmem:[#allocation2 + $0xe0] sm:$0xff] %v923
        %956 = vst [vmem:[#allocation2 + $0xe8] sm:$0xff] %v924
        %957 = vst [vmem:[#allocation2 + $0xf0] sm:$0xff] %v925
        %958 = vst [vmem:[#allocation2 + $0xf8] sm:$0xff] %v926
        %p959 = scmp.eq.s32.totalorder %s18, 1
        // Predicated region
        $region71: #{icews_evolvegcn_forward.8} parent=61 // pred_check
          %p960 = pneg %p959
        $region72: #{icews_evolvegcn_forward.8} parent=61 // pred_check_branch
          %962 = sbr.rel (%p960) target = $region74
        $region73: #{icews_evolvegcn_forward.8} parent=61 // pred_region
          %v963 = vld [vmem:[#allocation2] sm:$0xff]
          %v964 = vld [vmem:[#allocation2 + $0x8] sm:$0xff]
          %v965 = vld [vmem:[#allocation2 + $0x10] sm:$0xff]
          %v966 = vld [vmem:[#allocation2 + $0x18] sm:$0xff]
          %v967 = vld [vmem:[#allocation2 + $0x20] sm:$0xff]
          %v968 = vld [vmem:[#allocation2 + $0x28] sm:$0xff]
          %v969 = vld [vmem:[#allocation2 + $0x30] sm:$0xff]
          %v970 = vld [vmem:[#allocation2 + $0x38] sm:$0xff]
          %v971 = vld [vmem:[#allocation2 + $0x40] sm:$0xff]
          %v972 = vld [vmem:[#allocation2 + $0x48] sm:$0xff]
          %v973 = vld [vmem:[#allocation2 + $0x50] sm:$0xff]
          %v974 = vld [vmem:[#allocation2 + $0x58] sm:$0xff]
          %v975 = vld [vmem:[#allocation2 + $0x60] sm:$0xff]
          %v976 = vld [vmem:[#allocation2 + $0x68] sm:$0xff]
          %v977 = vld [vmem:[#allocation2 + $0x70] sm:$0xff]
          %v978 = vld [vmem:[#allocation2 + $0x78] sm:$0xff]
          %v979 = vld [vmem:[#allocation2 + $0x80] sm:$0xff]
          %v980 = vld [vmem:[#allocation2 + $0x88] sm:$0xff]
          %v981 = vld [vmem:[#allocation2 + $0x90] sm:$0xff]
          %v982 = vld [vmem:[#allocation2 + $0x98] sm:$0xff]
          %v983 = vld [vmem:[#allocation2 + $0xa0] sm:$0xff]
          %v984 = vld [vmem:[#allocation2 + $0xa8] sm:$0xff]
          %v985 = vld [vmem:[#allocation2 + $0xb0] sm:$0xff]
          %v986 = vld [vmem:[#allocation2 + $0xb8] sm:$0xff]
          %v987 = vld [vmem:[#allocation2 + $0xc0] sm:$0xff]
          %v988 = vld [vmem:[#allocation2 + $0xc8] sm:$0xff]
          %v989 = vld [vmem:[#allocation2 + $0xd0] sm:$0xff]
          %v990 = vld [vmem:[#allocation2 + $0xd8] sm:$0xff]
          %v991 = vld [vmem:[#allocation2 + $0xe0] sm:$0xff]
          %v992 = vld [vmem:[#allocation2 + $0xe8] sm:$0xff]
          %v993 = vld [vmem:[#allocation2 + $0xf0] sm:$0xff]
          %v994 = vld [vmem:[#allocation2 + $0xf8] sm:$0xff]
          %v995 = vmax.f32 %v963, 0.0
          %v996 = vmax.f32 %v964, 0.0
          %v997 = vmax.f32 %v965, 0.0
          %v998 = vmax.f32 %v966, 0.0
          %v999 = vmax.f32 %v967, 0.0
          %v1000 = vmax.f32 %v968, 0.0
          %v1001 = vmax.f32 %v969, 0.0
          %v1002 = vmax.f32 %v970, 0.0
          %v1003 = vmax.f32 %v971, 0.0
          %v1004 = vmax.f32 %v972, 0.0
          %v1005 = vmax.f32 %v973, 0.0
          %v1006 = vmax.f32 %v974, 0.0
          %v1007 = vmax.f32 %v975, 0.0
          %v1008 = vmax.f32 %v976, 0.0
          %v1009 = vmax.f32 %v977, 0.0
          %v1010 = vmax.f32 %v978, 0.0
          %v1011 = vmax.f32 %v979, 0.0
          %v1012 = vmax.f32 %v980, 0.0
          %v1013 = vmax.f32 %v981, 0.0
          %v1014 = vmax.f32 %v982, 0.0
          %v1015 = vmax.f32 %v983, 0.0
          %v1016 = vmax.f32 %v984, 0.0
          %v1017 = vmax.f32 %v985, 0.0
          %v1018 = vmax.f32 %v986, 0.0
          %v1019 = vmax.f32 %v987, 0.0
          %v1020 = vmax.f32 %v988, 0.0
          %v1021 = vmax.f32 %v989, 0.0
          %v1022 = vmax.f32 %v990, 0.0
          %v1023 = vmax.f32 %v991, 0.0
          %v1024 = vmax.f32 %v992, 0.0
          %v1025 = vmax.f32 %v993, 0.0
          %v1026 = vmax.f32 %v994, 0.0
          %1027 = vst [vmem:[%s343] sm:$0xff] %v995
          %1028 = vst [vmem:[%s343 + $0x8] sm:$0xff] %v996
          %1029 = vst [vmem:[%s343 + $0x10] sm:$0xff] %v997
          %1030 = vst [vmem:[%s343 + $0x18] sm:$0xff] %v998
          %1031 = vst [vmem:[%s343 + $0x20] sm:$0xff] %v999
          %1032 = vst [vmem:[%s343 + $0x28] sm:$0xff] %v1000
          %1033 = vst [vmem:[%s343 + $0x30] sm:$0xff] %v1001
          %1034 = vst [vmem:[%s343 + $0x38] sm:$0xff] %v1002
          %1035 = vst [vmem:[%s343 + $0x40] sm:$0xff] %v1003
          %1036 = vst [vmem:[%s343 + $0x48] sm:$0xff] %v1004
          %1037 = vst [vmem:[%s343 + $0x50] sm:$0xff] %v1005
          %1038 = vst [vmem:[%s343 + $0x58] sm:$0xff] %v1006
          %1039 = vst [vmem:[%s343 + $0x60] sm:$0xff] %v1007
          %1040 = vst [vmem:[%s343 + $0x68] sm:$0xff] %v1008
          %1041 = vst [vmem:[%s343 + $0x70] sm:$0xff] %v1009
          %1042 = vst [vmem:[%s343 + $0x78] sm:$0xff] %v1010
          %1043 = vst [vmem:[%s343 + $0x80] sm:$0xff] %v1011
          %1044 = vst [vmem:[%s343 + $0x88] sm:$0xff] %v1012
          %1045 = vst [vmem:[%s343 + $0x90] sm:$0xff] %v1013
          %1046 = vst [vmem:[%s343 + $0x98] sm:$0xff] %v1014
          %1047 = vst [vmem:[%s343 + $0xa0] sm:$0xff] %v1015
          %1048 = vst [vmem:[%s343 + $0xa8] sm:$0xff] %v1016
          %1049 = vst [vmem:[%s343 + $0xb0] sm:$0xff] %v1017
          %1050 = vst [vmem:[%s343 + $0xb8] sm:$0xff] %v1018
          %1051 = vst [vmem:[%s343 + $0xc0] sm:$0xff] %v1019
          %1052 = vst [vmem:[%s343 + $0xc8] sm:$0xff] %v1020
          %1053 = vst [vmem:[%s343 + $0xd0] sm:$0xff] %v1021
          %1054 = vst [vmem:[%s343 + $0xd8] sm:$0xff] %v1022
          %1055 = vst [vmem:[%s343 + $0xe0] sm:$0xff] %v1023
          %1056 = vst [vmem:[%s343 + $0xe8] sm:$0xff] %v1024
          %1057 = vst [vmem:[%s343 + $0xf0] sm:$0xff] %v1025
          %1058 = vst [vmem:[%s343 + $0xf8] sm:$0xff] %v1026
        $region74: #{icews_evolvegcn_forward.8} parent=61 // pred_fallthru
          _
        %s1059 = smul.u32 32, %s17
        %p1060 = scmp.lt.s32.totalorder %s1059, 63
        %s1061 = scalar_select %p1060, %s1059, 63
        %s1062 = smul.addr %s1061, 8
        %s1063 = scalar_lea.vmem %s2, %s1062
        // Predicated region
        $region75: #{icews_evolvegcn_forward.8} parent=61 // pred_check
          %p1064 = pneg %p97
        $region76: #{icews_evolvegcn_forward.8} parent=61 // pred_check_branch
          %1066 = sbr.rel (%p1064) target = $region78
        $region77: #{icews_evolvegcn_forward.8} parent=61 // pred_region
          %s1067 = smul.u32 32, %s17
        $region78: #{icews_evolvegcn_forward.8} parent=61 // pred_fallthru
          _
      $region62: #{icews_evolvegcn_forward.8} parent=5 // pred_fallthru
        _
      %p1068 = scmp.le.s32.totalorder 2, %s8
      // Predicated region
      $region79: #{icews_evolvegcn_forward.8} parent=5 // pred_check
        %p1069 = pneg %p1068
      $region80: #{icews_evolvegcn_forward.8} parent=5 // pred_check_branch
        %1071 = sbr.rel (%p1069) target = $region82
      $region81: #{icews_evolvegcn_forward.8} parent=5 // pred_region
        %s1072 = ssub.s32 %s8, 2
        // Predicated region
        $region83: #{icews_evolvegcn_forward.8} parent=81 // pred_check
          %p1073 = pneg %p103
        $region84: #{icews_evolvegcn_forward.8} parent=81 // pred_check_branch
          %1075 = sbr.rel (%p1073) target = $region86
        $region85: #{icews_evolvegcn_forward.8} parent=81 // pred_region
          %s1076 = smul.u32 32, %s19
          %p1077 = scmp.lt.s32.totalorder %s1076, 63
          %s1078 = scalar_select %p1077, %s1076, 63
          %s1079 = smul.addr %s1078, 8
          %s1080 = scalar_lea.vmem %s2, %s1079
        $region86: #{icews_evolvegcn_forward.8} parent=81 // pred_fallthru
          _
      $region82: #{icews_evolvegcn_forward.8} parent=5 // pred_fallthru
        _
    $region6: #{icews_evolvegcn_forward.8} parent=1 // loop_footer
      %s12 = sadd.s32 1, %s8
    $region7: #{icews_evolvegcn_forward.8} parent=1 // loop_footer_branch
      %7 = sbr.rel target = $region3
    $region8: #{icews_evolvegcn_forward.8} parent=1 // loop_exit
      _

</llo_original>
